<compile_context>
chip_gen: v7x
topology: tpu7x:2x2x1
jax: 0.10.0
libtpu: 0.0.40
codegen_flags: <defaults>
</compile_context>

<pallas_src>
import functools

import jax
import jax.numpy as jnp
from jax.experimental import pallas as pl
from jax.experimental.pallas import tpu as pltpu

_EPS = 1e-5  # nn.GroupNorm default eps


# ----------------------------------------------------------------------------
# In-kernel helpers
# ----------------------------------------------------------------------------
def _group_norm_silu(y, gamma2, beta2, groups, c_valid):
    """GroupNorm(groups) + SiLU on a (P, C_pad) f32 tile.

    Channels >= c_valid are lane padding (zero conv weight / bias / affine) and
    come out exactly 0; the wrapper slices them off.
    """
    P, C_pad = y.shape
    cg = c_valid // groups
    n = float(P * cg)                                   # elems per group
    # Single reduction sweep over the tile: per-channel sum and sum of squares.
    s1 = jnp.sum(y, axis=0, keepdims=True)              # (1, C_pad)
    s2 = jnp.sum(y * y, axis=0, keepdims=True)          # (1, C_pad)
    cid = jax.lax.broadcasted_iota(jnp.int32, (1, C_pad), 1)
    mean_v = jnp.zeros((1, C_pad), jnp.float32)
    inv_v = jnp.zeros((1, C_pad), jnp.float32)
    for g in range(groups):                             # static, tiny (groups=2)
        lo, hi = g * cg, (g + 1) * cg
        m = jnp.sum(s1[:, lo:hi]) / n
        var = jnp.sum(s2[:, lo:hi]) / n - m * m         # biased var (torch GN)
        sel = (cid >= lo) & (cid < hi)
        mean_v = jnp.where(sel, m, mean_v)
        inv_v = jnp.where(sel, jax.lax.rsqrt(var + _EPS), inv_v)
    yn = (y - mean_v) * inv_v * gamma2 + beta2
    return yn * jax.nn.sigmoid(yn)                      # SiLU


def _conv_kernel(x_ref, w_ref, b_ref, g_ref, be_ref, o_ref, xpad_ref, col_ref, *,
                 KH, KW, OH, OW, stride, dilation, padding,
                 fuse_act_norm, groups, c_valid):
    """Fused conv (im2col + single MXU matmul) + optional GroupNorm + SiLU."""
    _, H, W, CIN = x_ref.shape
    Hp, Wp, _ = xpad_ref.shape
    dt = xpad_ref.dtype                                 # MXU dtype (bf16/f32)

    # --- stage the input into a zero-haloed VMEM tile (single cast) ----------
    if padding > 0:
        zrow = jnp.zeros((padding, Wp, CIN), dt)
        xpad_ref[pl.ds(0, padding), :, :] = zrow
        xpad_ref[pl.ds(padding + H, padding), :, :] = zrow
        zcol = jnp.zeros((Hp, padding, CIN), dt)
        xpad_ref[:, pl.ds(0, padding), :] = zcol
        xpad_ref[:, pl.ds(padding + W, padding), :] = zcol
    xpad_ref[pl.ds(padding, H), pl.ds(padding, W), :] = x_ref[0].astype(dt)

    # --- im2col: one channel slot per tap, so the whole receptive field is ---
    # --- contracted by ONE matmul with K = KH*KW*CIN                       ---
    for kh in range(KH):
        for kw in range(KW):
            h0, w0 = kh * dilation, kw * dilation
            if stride == 1:
                tap = xpad_ref[pl.ds(h0, OH), pl.ds(w0, OW), :]
            else:  # ref-level strided window (addressing path, not XLU slices)
                tap = xpad_ref[pl.ds(h0, OH, stride), pl.ds(w0, OW, stride), :]
            col_ref[:, :, pl.ds((kh * KW + kw) * CIN, CIN)] = tap

    patch = col_ref[...].reshape(OH * OW, KH * KW * CIN)     # free relabel
    acc = jnp.dot(patch, w_ref[...], preferred_element_type=jnp.float32)
    y = acc + b_ref[...]                                      # (P, C_pad) f32

    if fuse_act_norm:
        y = _group_norm_silu(y, g_ref[...], be_ref[...], groups, c_valid)

    o_ref[0] = y.astype(o_ref.dtype)                          # dense 128-lane store


# ----------------------------------------------------------------------------
# pallas_call wrapper
# ----------------------------------------------------------------------------
def _conv_pallas(x_nhwc, w2, b2, g2, be2, *, KH, KW, OH, OW, stride, padding,
                 dilation, fuse_act_norm, groups, c_valid):
    N, H, W, CIN = x_nhwc.shape
    K2, C_pad = w2.shape
    Hp, Wp = H + 2 * padding, W + 2 * padding
    kernel = functools.partial(
        _conv_kernel, KH=KH, KW=KW, OH=OH, OW=OW, stride=stride,
        dilation=dilation, padding=padding, fuse_act_norm=fuse_act_norm,
        groups=groups, c_valid=c_valid)
    return pl.pallas_call(
        kernel,
        out_shape=jax.ShapeDtypeStruct((N, OH * OW, C_pad), x_nhwc.dtype),
        grid=(N,),
        in_specs=[
            pl.BlockSpec((1, H, W, CIN), lambda n: (n, 0, 0, 0)),
            pl.BlockSpec((K2, C_pad), lambda n: (0, 0)),
            pl.BlockSpec((1, C_pad), lambda n: (0, 0)),
            pl.BlockSpec((1, C_pad), lambda n: (0, 0)),
            pl.BlockSpec((1, C_pad), lambda n: (0, 0)),
        ],
        out_specs=pl.BlockSpec((1, OH * OW, C_pad), lambda n: (n, 0, 0)),
        scratch_shapes=[
            pltpu.VMEM((Hp, Wp, CIN), w2.dtype),    # zero-haloed input tile
            pltpu.VMEM((OH, OW, K2), w2.dtype),     # im2col patch matrix
        ],
        compiler_params=pltpu.CompilerParams(
            dimension_semantics=("parallel",),
            vmem_limit_bytes=48 * 1024 * 1024),
    )(x_nhwc, w2, b2, g2, be2)


# ----------------------------------------------------------------------------
# Module port
# ----------------------------------------------------------------------------
class BasicConv2d:
    """JAX/Pallas port of BasicConv2d (forward only, deterministic init)."""

    def __init__(self, in_channels, out_channels, kernel_size=3, stride=1,
                 padding=0, dilation=1, upsampling=False, act_norm=False,
                 mxu_dtype=jnp.bfloat16, key=jax.random.PRNGKey(0)):
        self.act_norm = act_norm
        self.upsampling = upsampling
        self.stride = 1 if upsampling else stride
        self.padding = padding
        self.dilation = dilation
        self.kernel_size = kernel_size
        self.out_channels = out_channels
        self.groups = 2
        conv_out = out_channels * 4 if upsampling else out_channels
        self.conv_out = conv_out
        self.c_pad = -(-conv_out // 128) * 128      # lane-dense output channels

        # f32 master parameters (also used by the pure-JAX reference).
        # trunc_normal_(std=0.02) analogue (deterministic); conv bias = 0.
        self.w = 0.02 * jax.random.truncated_normal(
            key, -2.0, 2.0,
            (kernel_size, kernel_size, in_channels, conv_out), jnp.float32)
        self.b = jnp.zeros((conv_out,), jnp.float32)
        # nn.GroupNorm(2, out_channels) defaults: weight=1, bias=0.
        self.gamma = jnp.ones((out_channels,), jnp.float32)
        self.beta = jnp.zeros((out_channels,), jnp.float32)

        # Kernel-side packed parameters (built once on the host):
        #  - weight in im2col layout (KH*KW*CIN, C), zero-padded on the output
        #    channel (lane) axis to a multiple of 128, cast to the MXU dtype.
        #  - GroupNorm affine: for the upsampling path GN is fused BEFORE the
        #    PixelShuffle (identical math) with the affine repeated 4x.
        k2 = kernel_size * kernel_size * in_channels
        pad_c = self.c_pad - conv_out
        self.w_k = jnp.pad(self.w.reshape(k2, conv_out),
                           ((0, 0), (0, pad_c))).astype(mxu_dtype)
        self.b_k = jnp.pad(self.b, (0, pad_c)).reshape(1, self.c_pad)
        if upsampling:
            g, be = jnp.repeat(self.gamma, 4), jnp.repeat(self.beta, 4)
        else:
            g, be = self.gamma, self.beta
        self.g_k = jnp.pad(g, (0, pad_c)).reshape(1, self.c_pad)
        self.be_k = jnp.pad(be, (0, pad_c)).reshape(1, self.c_pad)

    def __call__(self, x_nchw):
        x = jnp.transpose(x_nchw, (0, 2, 3, 1))            # NCHW -> NHWC
        N, H, W, _ = x.shape
        k, d, s, p = self.kernel_size, self.dilation, self.stride, self.padding
        OH = (H + 2 * p - d * (k - 1) - 1) // s + 1
        OW = (W + 2 * p - d * (k - 1) - 1) // s + 1
        y = _conv_pallas(
            x, self.w_k, self.b_k, self.g_k, self.be_k,
            KH=k, KW=k, OH=OH, OW=OW, stride=s, padding=p, dilation=d,
            fuse_act_norm=self.act_norm, groups=self.groups,
            c_valid=self.conv_out)
        # (N, OH*OW, C_pad) slab -> NHWC (slice off lane padding; reshape free).
        y = y[:, :, :self.conv_out].reshape(N, OH, OW, self.conv_out)
        if self.upsampling:
            # PixelShuffle(2): channel c*4 + i*2 + j -> pixel (h*2+i, w*2+j, c).
            # GN+SiLU already applied (pre-shuffle, equivalent) inside the kernel.
            C = self.out_channels
            y = y.reshape(N, OH, OW, C, 2, 2)
            y = jnp.transpose(y, (0, 1, 4, 2, 5, 3)).reshape(N, OH * 2, OW * 2, C)
        return jnp.transpose(y, (0, 3, 1, 2))              # NHWC -> NCHW


# ----------------------------------------------------------------------------
# Pure-JAX reference for validation (mirrors the PyTorch module semantics)
# ----------------------------------------------------------------------------
def _reference(x_nchw, mod):
    x = jnp.transpose(x_nchw, (0, 2, 3, 1))
    y = jax.lax.conv_general_dilated(
        x, mod.w, window_strides=(mod.stride, mod.stride),
        padding=[(mod.padding, mod.padding)] * 2,
        rhs_dilation=(mod.dilation, mod.dilation),
        dimension_numbers=('NHWC', 'HWIO', 'NHWC')) + mod.b
    if mod.upsampling:
        N, H, W, _ = y.shape
        y = y.reshape(N, H, W, mod.out_channels, 2, 2)
        y = jnp.transpose(y, (0, 1, 4, 2, 5, 3)).reshape(
            N, H * 2, W * 2, mod.out_channels)
    if mod.act_norm:
        N, H, W, C = y.shape
        yg = y.reshape(N, H, W, mod.groups, C // mod.groups)
        mean = jnp.mean(yg, axis=(1, 2, 4), keepdims=True)
        var = jnp.mean(jnp.square(yg - mean), axis=(1, 2, 4), keepdims=True)
        yn = ((yg - mean) * jax.lax.rsqrt(var + _EPS)).reshape(N, H, W, C)
        yn = yn * mod.gamma + mod.beta
        y = yn * jax.nn.sigmoid(yn)
    return jnp.transpose(y, (0, 3, 1, 2))


if __name__ == "__main__":
    key = jax.random.PRNGKey(0)
    kx, kw1, kw2, kw3 = jax.random.split(key, 4)
    x = jax.random.normal(kx, (2, 4, 16, 16), jnp.float32)   # NCHW, like PyTorch

    # Case 1: plain conv (pad=1) with fused GroupNorm + SiLU, bf16 MXU operands.
    m1 = BasicConv2d(4, 8, kernel_size=3, stride=1, padding=1,
                     act_norm=True, key=kw1)
    y1 = jax.block_until_ready(m1(x))
    assert y1.shape == (2, 8, 16, 16)
    assert jnp.allclose(y1, _reference(x, m1), rtol=2e-2, atol=2e-2)

    # Case 2: upsampling path (conv to 4*C, PixelShuffle(2)) + GroupNorm + SiLU,
    # GN+SiLU fused pre-shuffle inside the conv kernel.
    m2 = BasicConv2d(4, 8, kernel_size=3, stride=1, padding=1,
                     upsampling=True, act_norm=True, key=kw2)
    y2 = jax.block_until_ready(m2(x))
    assert y2.shape == (2, 8, 32, 32)
    assert jnp.allclose(y2, _reference(x, m2), rtol=2e-2, atol=2e-2)

    # Case 3: full-f32 MXU path, tight tolerance (numerics sanity check).
    m3 = BasicConv2d(4, 8, kernel_size=3, stride=1, padding=1,
                     act_norm=True, mxu_dtype=jnp.float32, key=kw1)
    y3 = jax.block_until_ready(m3(x))
    assert jnp.allclose(y3, _reference(x, m3), rtol=1e-3, atol=1e-3)

    # Case 4: padding=0, no act_norm (exercises the no-halo path).
    x4 = jax.random.normal(kw3, (2, 4, 10, 10), jnp.float32)
    m4 = BasicConv2d(4, 8, kernel_size=3, stride=1, padding=0,
                     act_norm=False, key=kw1)
    y4 = jax.block_until_ready(m4(x4))
    assert y4.shape == (2, 8, 8, 8)
    assert jnp.allclose(y4, _reference(x4, m4), rtol=2e-2, atol=2e-2)

    print("KERNEL_OK")
</pallas_src>

<mosaic_0001>
module attributes {stable_mosaic.version = 11 : i64} {
  func.func @_conv_kernel(%arg0: i32, %arg1: memref<1x16x16x4xf32, #tpu.memory_space<vmem>>, %arg2: memref<36x128xbf16, #tpu.memory_space<vmem>>, %arg3: memref<1x128xf32, #tpu.memory_space<vmem>>, %arg4: memref<1x128xf32, #tpu.memory_space<vmem>>, %arg5: memref<1x128xf32, #tpu.memory_space<vmem>>, %arg6: memref<1x256x128xf32, #tpu.memory_space<vmem>>, %arg7: memref<18x18x4xbf16, #tpu.memory_space<vmem>>, %arg8: memref<16x16x36xbf16, #tpu.memory_space<vmem>>) attributes {dimension_semantics = [#tpu.dimension_semantics<parallel>], iteration_bounds = array<i64: 2>, scalar_prefetch = 0 : i64, scratch_operands = 2 : i64, tpu.core_type = #tpu.core_type<tc>, window_params = [{transform_indices = @transform_0, window_bounds = array<i64: 1, 16, 16, 4>}, {pipeline_mode = #tpu.pipeline_mode<synchronous>, transform_indices = @transform_1, window_bounds = array<i64: 36, 128>}, {pipeline_mode = #tpu.pipeline_mode<synchronous>, transform_indices = @transform_2, window_bounds = array<i64: 1, 128>}, {pipeline_mode = #tpu.pipeline_mode<synchronous>, transform_indices = @transform_3, window_bounds = array<i64: 1, 128>}, {pipeline_mode = #tpu.pipeline_mode<synchronous>, transform_indices = @transform_4, window_bounds = array<i64: 1, 128>}, {transform_indices = @transform_5, window_bounds = array<i64: 1, 256, 128>}]} {
    %cst = arith.constant 0.000000e+00 : bf16
    %0 = vector.broadcast %cst : bf16 to vector<1x18x4xbf16>
    %c0 = arith.constant 0 : index
    %c0_0 = arith.constant 0 : index
    %c0_1 = arith.constant 0 : index
    %1 = vector.load %arg7[%c0, %c0_0, %c0_1] : memref<18x18x4xbf16, #tpu.memory_space<vmem>>, vector<1x18x4xbf16>
    tpu.vector_store %arg7[%c0, %c0_0, %c0_1], %0 {strides = array<i32>} : memref<18x18x4xbf16, #tpu.memory_space<vmem>>, vector<1x18x4xbf16>,
    %c17 = arith.constant 17 : index
    %c0_2 = arith.constant 0 : index
    %c0_3 = arith.constant 0 : index
    %2 = vector.load %arg7[%c17, %c0_2, %c0_3] : memref<18x18x4xbf16, #tpu.memory_space<vmem>>, vector<1x18x4xbf16>
    tpu.vector_store %arg7[%c17, %c0_2, %c0_3], %0 {strides = array<i32>} : memref<18x18x4xbf16, #tpu.memory_space<vmem>>, vector<1x18x4xbf16>,
    %cst_4 = arith.constant 0.000000e+00 : bf16
    %3 = vector.broadcast %cst_4 : bf16 to vector<18x1x4xbf16>
    %c0_5 = arith.constant 0 : index
    %c0_6 = arith.constant 0 : index
    %c0_7 = arith.constant 0 : index
    %4 = vector.load %arg7[%c0_5, %c0_6, %c0_7] : memref<18x18x4xbf16, #tpu.memory_space<vmem>>, vector<18x1x4xbf16>
    tpu.vector_store %arg7[%c0_5, %c0_6, %c0_7], %3 {strides = array<i32>} : memref<18x18x4xbf16, #tpu.memory_space<vmem>>, vector<18x1x4xbf16>,
    %c0_8 = arith.constant 0 : index
    %c17_9 = arith.constant 17 : index
    %c0_10 = arith.constant 0 : index
    %5 = vector.load %arg7[%c0_8, %c17_9, %c0_10] : memref<18x18x4xbf16, #tpu.memory_space<vmem>>, vector<18x1x4xbf16>
    tpu.vector_store %arg7[%c0_8, %c17_9, %c0_10], %3 {strides = array<i32>} : memref<18x18x4xbf16, #tpu.memory_space<vmem>>, vector<18x1x4xbf16>,
    %c0_11 = arith.constant 0 : index
    %c0_12 = arith.constant 0 : index
    %c0_13 = arith.constant 0 : index
    %c0_14 = arith.constant 0 : index
    %6 = vector.load %arg1[%c0_11, %c0_12, %c0_13, %c0_14] : memref<1x16x16x4xf32, #tpu.memory_space<vmem>>, vector<1x16x16x4xf32>
    %7 = vector.shape_cast %6 : vector<1x16x16x4xf32> to vector<16x16x4xf32>
    %8 = arith.truncf %7 : vector<16x16x4xf32> to vector<16x16x4xbf16>
    %c1 = arith.constant 1 : index
    %c1_15 = arith.constant 1 : index
    %c0_16 = arith.constant 0 : index
    %9 = vector.load %arg7[%c1, %c1_15, %c0_16] : memref<18x18x4xbf16, #tpu.memory_space<vmem>>, vector<16x16x4xbf16>
    tpu.vector_store %arg7[%c1, %c1_15, %c0_16], %8 {strides = array<i32>} : memref<18x18x4xbf16, #tpu.memory_space<vmem>>, vector<16x16x4xbf16>,
    %c0_17 = arith.constant 0 : index
    %c0_18 = arith.constant 0 : index
    %c0_19 = arith.constant 0 : index
    %10 = vector.load %arg7[%c0_17, %c0_18, %c0_19] : memref<18x18x4xbf16, #tpu.memory_space<vmem>>, vector<16x16x4xbf16>
    %c0_20 = arith.constant 0 : index
    %c0_21 = arith.constant 0 : index
    %c0_22 = arith.constant 0 : index
    %11 = vector.load %arg8[%c0_20, %c0_21, %c0_22] : memref<16x16x36xbf16, #tpu.memory_space<vmem>>, vector<16x16x4xbf16>
    tpu.vector_store %arg8[%c0_20, %c0_21, %c0_22], %10 {strides = array<i32>} : memref<16x16x36xbf16, #tpu.memory_space<vmem>>, vector<16x16x4xbf16>,
    %c0_23 = arith.constant 0 : index
    %c1_24 = arith.constant 1 : index
    %c0_25 = arith.constant 0 : index
    %12 = vector.load %arg7[%c0_23, %c1_24, %c0_25] : memref<18x18x4xbf16, #tpu.memory_space<vmem>>, vector<16x16x4xbf16>
    %c0_26 = arith.constant 0 : index
    %c0_27 = arith.constant 0 : index
    %c4 = arith.constant 4 : index
    %13 = vector.load %arg8[%c0_26, %c0_27, %c4] : memref<16x16x36xbf16, #tpu.memory_space<vmem>>, vector<16x16x4xbf16>
    tpu.vector_store %arg8[%c0_26, %c0_27, %c4], %12 {strides = array<i32>} : memref<16x16x36xbf16, #tpu.memory_space<vmem>>, vector<16x16x4xbf16>,
    %c0_28 = arith.constant 0 : index
    %c2 = arith.constant 2 : index
    %c0_29 = arith.constant 0 : index
    %14 = vector.load %arg7[%c0_28, %c2, %c0_29] : memref<18x18x4xbf16, #tpu.memory_space<vmem>>, vector<16x16x4xbf16>
    %c0_30 = arith.constant 0 : index
    %c0_31 = arith.constant 0 : index
    %c8 = arith.constant 8 : index
    %15 = vector.load %arg8[%c0_30, %c0_31, %c8] : memref<16x16x36xbf16, #tpu.memory_space<vmem>>, vector<16x16x4xbf16>
    tpu.vector_store %arg8[%c0_30, %c0_31, %c8], %14 {strides = array<i32>} : memref<16x16x36xbf16, #tpu.memory_space<vmem>>, vector<16x16x4xbf16>,
    %c1_32 = arith.constant 1 : index
    %c0_33 = arith.constant 0 : index
    %c0_34 = arith.constant 0 : index
    %16 = vector.load %arg7[%c1_32, %c0_33, %c0_34] : memref<18x18x4xbf16, #tpu.memory_space<vmem>>, vector<16x16x4xbf16>
    %c0_35 = arith.constant 0 : index
    %c0_36 = arith.constant 0 : index
    %c12 = arith.constant 12 : index
    %17 = vector.load %arg8[%c0_35, %c0_36, %c12] : memref<16x16x36xbf16, #tpu.memory_space<vmem>>, vector<16x16x4xbf16>
    tpu.vector_store %arg8[%c0_35, %c0_36, %c12], %16 {strides = array<i32>} : memref<16x16x36xbf16, #tpu.memory_space<vmem>>, vector<16x16x4xbf16>,
    %c1_37 = arith.constant 1 : index
    %c1_38 = arith.constant 1 : index
    %c0_39 = arith.constant 0 : index
    %18 = vector.load %arg7[%c1_37, %c1_38, %c0_39] : memref<18x18x4xbf16, #tpu.memory_space<vmem>>, vector<16x16x4xbf16>
    %c0_40 = arith.constant 0 : index
    %c0_41 = arith.constant 0 : index
    %c16 = arith.constant 16 : index
    %19 = vector.load %arg8[%c0_40, %c0_41, %c16] : memref<16x16x36xbf16, #tpu.memory_space<vmem>>, vector<16x16x4xbf16>
    tpu.vector_store %arg8[%c0_40, %c0_41, %c16], %18 {strides = array<i32>} : memref<16x16x36xbf16, #tpu.memory_space<vmem>>, vector<16x16x4xbf16>,
    %c1_42 = arith.constant 1 : index
    %c2_43 = arith.constant 2 : index
    %c0_44 = arith.constant 0 : index
    %20 = vector.load %arg7[%c1_42, %c2_43, %c0_44] : memref<18x18x4xbf16, #tpu.memory_space<vmem>>, vector<16x16x4xbf16>
    %c0_45 = arith.constant 0 : index
    %c0_46 = arith.constant 0 : index
    %c20 = arith.constant 20 : index
    %21 = vector.load %arg8[%c0_45, %c0_46, %c20] : memref<16x16x36xbf16, #tpu.memory_space<vmem>>, vector<16x16x4xbf16>
    tpu.vector_store %arg8[%c0_45, %c0_46, %c20], %20 {strides = array<i32>} : memref<16x16x36xbf16, #tpu.memory_space<vmem>>, vector<16x16x4xbf16>,
    %c2_47 = arith.constant 2 : index
    %c0_48 = arith.constant 0 : index
    %c0_49 = arith.constant 0 : index
    %22 = vector.load %arg7[%c2_47, %c0_48, %c0_49] : memref<18x18x4xbf16, #tpu.memory_space<vmem>>, vector<16x16x4xbf16>
    %c0_50 = arith.constant 0 : index
    %c0_51 = arith.constant 0 : index
    %c24 = arith.constant 24 : index
    %23 = vector.load %arg8[%c0_50, %c0_51, %c24] : memref<16x16x36xbf16, #tpu.memory_space<vmem>>, vector<16x16x4xbf16>
    tpu.vector_store %arg8[%c0_50, %c0_51, %c24], %22 {strides = array<i32>} : memref<16x16x36xbf16, #tpu.memory_space<vmem>>, vector<16x16x4xbf16>,
    %c2_52 = arith.constant 2 : index
    %c1_53 = arith.constant 1 : index
    %c0_54 = arith.constant 0 : index
    %24 = vector.load %arg7[%c2_52, %c1_53, %c0_54] : memref<18x18x4xbf16, #tpu.memory_space<vmem>>, vector<16x16x4xbf16>
    %c0_55 = arith.constant 0 : index
    %c0_56 = arith.constant 0 : index
    %c28 = arith.constant 28 : index
    %25 = vector.load %arg8[%c0_55, %c0_56, %c28] : memref<16x16x36xbf16, #tpu.memory_space<vmem>>, vector<16x16x4xbf16>
    tpu.vector_store %arg8[%c0_55, %c0_56, %c28], %24 {strides = array<i32>} : memref<16x16x36xbf16, #tpu.memory_space<vmem>>, vector<16x16x4xbf16>,
    %c2_57 = arith.constant 2 : index
    %c2_58 = arith.constant 2 : index
    %c0_59 = arith.constant 0 : index
    %26 = vector.load %arg7[%c2_57, %c2_58, %c0_59] : memref<18x18x4xbf16, #tpu.memory_space<vmem>>, vector<16x16x4xbf16>
    %c0_60 = arith.constant 0 : index
    %c0_61 = arith.constant 0 : index
    %c32 = arith.constant 32 : index
    %27 = vector.load %arg8[%c0_60, %c0_61, %c32] : memref<16x16x36xbf16, #tpu.memory_space<vmem>>, vector<16x16x4xbf16>
    tpu.vector_store %arg8[%c0_60, %c0_61, %c32], %26 {strides = array<i32>} : memref<16x16x36xbf16, #tpu.memory_space<vmem>>, vector<16x16x4xbf16>,
    %c0_62 = arith.constant 0 : index
    %c0_63 = arith.constant 0 : index
    %c0_64 = arith.constant 0 : index
    %28 = vector.load %arg8[%c0_62, %c0_63, %c0_64] : memref<16x16x36xbf16, #tpu.memory_space<vmem>>, vector<16x16x36xbf16>
    %29 = vector.shape_cast %28 : vector<16x16x36xbf16> to vector<256x36xbf16>
    %c0_65 = arith.constant 0 : index
    %c0_66 = arith.constant 0 : index
    %30 = vector.load %arg2[%c0_65, %c0_66] : memref<36x128xbf16, #tpu.memory_space<vmem>>, vector<36x128xbf16>
    %cst_67 = arith.constant dense<0.000000e+00> : vector<256x128xf32>
    %31 = tpu.matmul %29, %30, %cst_67 {dimension_numbers = #tpu.dot_dimension_numbers<[1], [0], [0], [1], [0, 0, 1, 1], [], []>} : vector<256x36xbf16>, vector<36x128xbf16>, vector<256x128xf32> -> vector<256x128xf32>
    %c0_68 = arith.constant 0 : index
    %c0_69 = arith.constant 0 : index
    %32 = vector.load %arg3[%c0_68, %c0_69] : memref<1x128xf32, #tpu.memory_space<vmem>>, vector<1x128xf32>
    %33 = vector.broadcast %32 : vector<1x128xf32> to vector<256x128xf32>
    %34 = arith.addf %31, %33 : vector<256x128xf32>
    %c0_70 = arith.constant 0 : index
    %c0_71 = arith.constant 0 : index
    %35 = vector.load %arg4[%c0_70, %c0_71] : memref<1x128xf32, #tpu.memory_space<vmem>>, vector<1x128xf32>
    %c0_72 = arith.constant 0 : index
    %c0_73 = arith.constant 0 : index
    %36 = vector.load %arg5[%c0_72, %c0_73] : memref<1x128xf32, #tpu.memory_space<vmem>>, vector<1x128xf32>
    %cst_74 = arith.constant dense<0.000000e+00> : vector<128xf32>
    %37 = vector.multi_reduction <add>, %34, %cst_74 [0] : vector<256x128xf32> to vector<128xf32>
    %38 = vector.shape_cast %37 : vector<128xf32> to vector<1x128xf32>
    %39 = arith.mulf %34, %34 : vector<256x128xf32>
    %cst_75 = arith.constant dense<0.000000e+00> : vector<128xf32>
    %40 = vector.multi_reduction <add>, %39, %cst_75 [0] : vector<256x128xf32> to vector<128xf32>
    %41 = vector.shape_cast %40 : vector<128xf32> to vector<1x128xf32>
    %42 = tpu.iota {dimensions = array<i32: 1>} : vector<1x128xi32>
    %cst_76 = arith.constant 0.000000e+00 : f32
    %43 = vector.broadcast %cst_76 : f32 to vector<1x128xf32>
    %cst_77 = arith.constant 0.000000e+00 : f32
    %44 = vector.broadcast %cst_77 : f32 to vector<1x128xf32>
    %45 = vector.extract_strided_slice %38 {offsets = [0, 0], sizes = [1, 4], strides = [1, 1]} : vector<1x128xf32> to vector<1x4xf32>
    %46 = vector.shape_cast %45 : vector<1x4xf32> to vector<1x1x4xf32>
    %cst_78 = arith.constant dense<0.000000e+00> : vector<1xf32>
    %47 = vector.multi_reduction <add>, %46, %cst_78 [1, 2] : vector<1x1x4xf32> to vector<1xf32>
    %48 = vector.shape_cast %47 : vector<1xf32> to vector<1x1x1xf32>
    %49 = vector.extract %48[0, 0, 0] : f32 from vector<1x1x1xf32>
    %cst_79 = arith.constant 1.024000e+03 : f32
    %50 = arith.divf %49, %cst_79 : f32
    %51 = vector.extract_strided_slice %41 {offsets = [0, 0], sizes = [1, 4], strides = [1, 1]} : vector<1x128xf32> to vector<1x4xf32>
    %52 = vector.shape_cast %51 : vector<1x4xf32> to vector<1x1x4xf32>
    %cst_80 = arith.constant dense<0.000000e+00> : vector<1xf32>
    %53 = vector.multi_reduction <add>, %52, %cst_80 [1, 2] : vector<1x1x4xf32> to vector<1xf32>
    %54 = vector.shape_cast %53 : vector<1xf32> to vector<1x1x1xf32>
    %55 = vector.extract %54[0, 0, 0] : f32 from vector<1x1x1xf32>
    %cst_81 = arith.constant 1.024000e+03 : f32
    %56 = arith.divf %55, %cst_81 : f32
    %57 = arith.mulf %50, %50 : f32
    %58 = arith.subf %56, %57 : f32
    %c0_i32 = arith.constant 0 : i32
    %59 = vector.broadcast %c0_i32 : i32 to vector<1x128xi32>
    %60 = arith.cmpi sge, %42, %59 : vector<1x128xi32>
    %c4_i32 = arith.constant 4 : i32
    %61 = vector.broadcast %c4_i32 : i32 to vector<1x128xi32>
    %62 = arith.cmpi slt, %42, %61 : vector<1x128xi32>
    %63 = arith.andi %60, %62 : vector<1x128xi1>
    %64 = vector.broadcast %50 : f32 to vector<1x128xf32>
    %65 = arith.select %63, %64, %43 : vector<1x128xi1>, vector<1x128xf32>
    %cst_82 = arith.constant 9.99999974E-6 : f32
    %66 = arith.addf %58, %cst_82 : f32
    %67 = math.rsqrt %66 : f32
    %68 = vector.broadcast %67 : f32 to vector<1x128xf32>
    %69 = arith.select %63, %68, %44 : vector<1x128xi1>, vector<1x128xf32>
    %70 = vector.extract_strided_slice %38 {offsets = [0, 4], sizes = [1, 4], strides = [1, 1]} : vector<1x128xf32> to vector<1x4xf32>
    %71 = vector.shape_cast %70 : vector<1x4xf32> to vector<1x1x4xf32>
    %cst_83 = arith.constant dense<0.000000e+00> : vector<1xf32>
    %72 = vector.multi_reduction <add>, %71, %cst_83 [1, 2] : vector<1x1x4xf32> to vector<1xf32>
    %73 = vector.shape_cast %72 : vector<1xf32> to vector<1x1x1xf32>
    %74 = vector.extract %73[0, 0, 0] : f32 from vector<1x1x1xf32>
    %cst_84 = arith.constant 1.024000e+03 : f32
    %75 = arith.divf %74, %cst_84 : f32
    %76 = vector.extract_strided_slice %41 {offsets = [0, 4], sizes = [1, 4], strides = [1, 1]} : vector<1x128xf32> to vector<1x4xf32>
    %77 = vector.shape_cast %76 : vector<1x4xf32> to vector<1x1x4xf32>
    %cst_85 = arith.constant dense<0.000000e+00> : vector<1xf32>
    %78 = vector.multi_reduction <add>, %77, %cst_85 [1, 2] : vector<1x1x4xf32> to vector<1xf32>
    %79 = vector.shape_cast %78 : vector<1xf32> to vector<1x1x1xf32>
    %80 = vector.extract %79[0, 0, 0] : f32 from vector<1x1x1xf32>
    %cst_86 = arith.constant 1.024000e+03 : f32
    %81 = arith.divf %80, %cst_86 : f32
    %82 = arith.mulf %75, %75 : f32
    %83 = arith.subf %81, %82 : f32
    %c4_i32_87 = arith.constant 4 : i32
    %84 = vector.broadcast %c4_i32_87 : i32 to vector<1x128xi32>
    %85 = arith.cmpi sge, %42, %84 : vector<1x128xi32>
    %c8_i32 = arith.constant 8 : i32
    %86 = vector.broadcast %c8_i32 : i32 to vector<1x128xi32>
    %87 = arith.cmpi slt, %42, %86 : vector<1x128xi32>
    %88 = arith.andi %85, %87 : vector<1x128xi1>
    %89 = vector.broadcast %75 : f32 to vector<1x128xf32>
    %90 = arith.select %88, %89, %65 : vector<1x128xi1>, vector<1x128xf32>
    %cst_88 = arith.constant 9.99999974E-6 : f32
    %91 = arith.addf %83, %cst_88 : f32
    %92 = math.rsqrt %91 : f32
    %93 = vector.broadcast %92 : f32 to vector<1x128xf32>
    %94 = arith.select %88, %93, %69 : vector<1x128xi1>, vector<1x128xf32>
    %95 = vector.broadcast %90 : vector<1x128xf32> to vector<256x128xf32>
    %96 = arith.subf %34, %95 : vector<256x128xf32>
    %97 = vector.broadcast %94 : vector<1x128xf32> to vector<256x128xf32>
    %98 = arith.mulf %96, %97 : vector<256x128xf32>
    %99 = vector.broadcast %35 : vector<1x128xf32> to vector<256x128xf32>
    %100 = arith.mulf %98, %99 : vector<256x128xf32>
    %101 = vector.broadcast %36 : vector<1x128xf32> to vector<256x128xf32>
    %102 = arith.addf %100, %101 : vector<256x128xf32>
    %103 = arith.negf %102 : vector<256x128xf32>
    %104 = math.exp %103 : vector<256x128xf32>
    %cst_89 = arith.constant 1.000000e+00 : f32
    %105 = vector.broadcast %cst_89 : f32 to vector<256x128xf32>
    %106 = arith.addf %105, %104 : vector<256x128xf32>
    %107 = arith.divf %105, %106 : vector<256x128xf32>
    %108 = arith.mulf %102, %107 : vector<256x128xf32>
    %c0_90 = arith.constant 0 : index
    %c0_91 = arith.constant 0 : index
    %c0_92 = arith.constant 0 : index
    %109 = vector.load %arg6[%c0_90, %c0_91, %c0_92] : memref<1x256x128xf32, #tpu.memory_space<vmem>>, vector<1x256x128xf32>
    %110 = vector.shape_cast %109 : vector<1x256x128xf32> to vector<256x128xf32>
    %111 = vector.shape_cast %108 : vector<256x128xf32> to vector<1x256x128xf32>
    tpu.vector_store %arg6[%c0_90, %c0_91, %c0_92], %111 {strides = array<i32>} : memref<1x256x128xf32, #tpu.memory_space<vmem>>, vector<1x256x128xf32>,
    return
  }
  func.func @transform_0(%arg0: i32) -> (i32, i32, i32, i32) {
    %c0_i32 = arith.constant 0 : i32
    %c0_i32_0 = arith.constant 0 : i32
    %c0_i32_1 = arith.constant 0 : i32
    %c0_i32_2 = arith.constant 0 : i32
    return %arg0, %c0_i32, %c0_i32_0, %c0_i32_1 : i32, i32, i32, i32
  }
  func.func @transform_1(%arg0: i32) -> (i32, i32) {
    %c0_i32 = arith.constant 0 : i32
    %c0_i32_0 = arith.constant 0 : i32
    %c0_i32_1 = arith.constant 0 : i32
    return %c0_i32, %c0_i32_0 : i32, i32
  }
  func.func @transform_2(%arg0: i32) -> (i32, i32) {
    %c0_i32 = arith.constant 0 : i32
    %c0_i32_0 = arith.constant 0 : i32
    %c0_i32_1 = arith.constant 0 : i32
    return %c0_i32, %c0_i32_0 : i32, i32
  }
  func.func @transform_3(%arg0: i32) -> (i32, i32) {
    %c0_i32 = arith.constant 0 : i32
    %c0_i32_0 = arith.constant 0 : i32
    %c0_i32_1 = arith.constant 0 : i32
    return %c0_i32, %c0_i32_0 : i32, i32
  }
  func.func @transform_4(%arg0: i32) -> (i32, i32) {
    %c0_i32 = arith.constant 0 : i32
    %c0_i32_0 = arith.constant 0 : i32
    %c0_i32_1 = arith.constant 0 : i32
    return %c0_i32, %c0_i32_0 : i32, i32
  }
  func.func @transform_5(%arg0: i32) -> (i32, i32, i32) {
    %c0_i32 = arith.constant 0 : i32
    %c0_i32_0 = arith.constant 0 : i32
    %c0_i32_1 = arith.constant 0 : i32
    return %arg0, %c0_i32, %c0_i32_0 : i32, i32, i32
  }
}

</mosaic_0001>

<llo_original>
// kernel: tpu_custom_call.1
$region0: #{tpu_custom_call.1}
  #allocation0 [shape = 'u32[]', space=smem, size = 0x4, offset = 0x4, fixed_abs, tag = 'smem constant byte address 0x4 - core index']
  #allocation1 [shape = 'u32[144,128]{1,0:T(1,128)}', space=vmem, size = 0x12000, scoped, tag = 'internal scratch']
  #allocation2 [shape = 'bf16[18,18,4]{2,1,0:T(8,128)(2,1)}', space=vmem, size = 0x1b000, scoped, tag = 'scratch operand']
  #allocation3 [shape = 'bf16[16,16,36]{2,1,0:T(16,128)(2,1)}', space=vmem, size = 0x10000, scoped, tag = 'scratch operand']
  %s0 = inlined_call_operand.vmem [shape: f32[2,16,16,4], index: 0, kind: input, shape index: {}]
  %s1 = inlined_call_operand.vmem [shape: bf16[36,128], index: 1, kind: input, shape index: {}]
  %s2 = inlined_call_operand.vmem [shape: f32[1,128], index: 2, kind: input, shape index: {}]
  %s3 = inlined_call_operand.vmem [shape: f32[1,128], index: 3, kind: input, shape index: {}]
  %s4 = inlined_call_operand.vmem [shape: f32[1,128], index: 4, kind: input, shape index: {}]
  %s5 = inlined_call_operand.hbm [shape: f32[2,256,128], index: 5, kind: output, shape index: {}]
  %s6 = sld [smem:[#allocation0]]
  $region53: #{tpu_custom_call.1} parent=0
    _
  %s8 = ssub.s32 1, %s6
  %s9 = scalar_select 0, %s8, %s6
  $region1: #{tpu_custom_call.1} parent=0
    #allocation4 [shape = 'u8[262144]{0}', space=vmem, size = 0x40000, scoped, tag = 'output window, operand 0']
    #allocation5 [shape = 's32[2]{0}', space=sflag, size = 0x8, scoped, tag = 'scoped memory for tpu_custom_call.1']
    %10 = vsyncpa [#allocation5], 0
    %s11 = scalar_lea.sflag [#allocation5], 1
    %12 = vsyncpa %s11, 0
    loop: start=0, step=1, limit=4
    $region2: #{tpu_custom_call.1} parent=1 // loop_pre_header
      _
    $region3: #{tpu_custom_call.1} parent=1 // loop_header
      %s14 = sphi 0, %s18
      %p15 = scmp.ge.s32.totalorder %s14, 4
      %s24 = sphi 0, %s26
      %s27 = sphi 0, %s24
      %s28 = sphi 0, %s27
      %s44 = sphi 0, %s28
      %s48 = sphi 0, %s48
      %s50 = sphi 0, %s48
      %s51 = sphi 0, %s50
      %s65 = sphi 0, %s51
      %s69 = sphi 0, %s69
      %s71 = sphi 0, %s69
      %s72 = sphi 0, %s71
      %s86 = sphi 0, %s72
      %s90 = sphi 0, %s90
      %s92 = sphi 0, %s90
      %s93 = sphi 0, %s92
      %s107 = sphi 0, %s93
      %s111 = sphi 0, %s111
      %s113 = sphi 0, %s111
      %s114 = sphi 0, %s113
      %s128 = sphi 0, %s114
      %s134 = sphi 0, %s136
      %s137 = sphi 0, %s134
      %s138 = sphi 0, %s137
      %s154 = sphi 0, %s138
    $region4: #{tpu_custom_call.1} parent=1 // loop_header_branch
      %17 = sbr.rel (%p15) target = $region8
    $region5: #{tpu_custom_call.1} parent=1 // loop_body
      %s19 = ssub.s32 %s14, 1
      %s20 = ssub.s32 %s14, 2
      %s21 = sadd.s32 %s14, 1
      %s22 = ssub.s32 %s14, %s21
      %p23 = scmp.eq.s32.totalorder %s22, 0
      %s25 = sadd.s32 %s24, 1
      %s26 = scalar_select %p23, %s24, %s25
      %p29 = pneg %p23
      %p30 = scmp.eq.s32.totalorder %s14, 1
      %p31 = por %p29, %p30
      %p32 = scmp.ne.s32.totalorder %s24, %s27
      %p33 = scmp.eq.s32.totalorder %s14, 0
      %p34 = por %p32, %p33
      %p35 = scmp.ne.s32.totalorder %s24, %s27
      %p36 = scmp.eq.s32.totalorder %s19, 1
      %p37 = por %p35, %p36
      %p38 = scmp.ne.s32.totalorder %s27, %s28
      %p39 = scmp.eq.s32.totalorder %s19, 0
      %p40 = por %p38, %p39
      %p41 = scmp.ne.s32.totalorder %s27, %s28
      %p42 = scmp.eq.s32.totalorder %s20, 1
      %p43 = por %p41, %p42
      %p45 = scmp.ne.s32.totalorder %s28, %s44
      %p46 = scmp.eq.s32.totalorder %s20, 0
      %p47 = por %p45, %p46
      %s49 = sadd.s32 %s48, 1
      %p52 = scmp.eq.s32.totalorder %s14, 1
      %p53 = scmp.ne.s32.totalorder %s48, %s50
      %p54 = scmp.eq.s32.totalorder %s14, 0
      %p55 = por %p53, %p54
      %p56 = scmp.ne.s32.totalorder %s48, %s50
      %p57 = scmp.eq.s32.totalorder %s19, 1
      %p58 = por %p56, %p57
      %p59 = scmp.ne.s32.totalorder %s50, %s51
      %p60 = scmp.eq.s32.totalorder %s19, 0
      %p61 = por %p59, %p60
      %p62 = scmp.ne.s32.totalorder %s50, %s51
      %p63 = scmp.eq.s32.totalorder %s20, 1
      %p64 = por %p62, %p63
      %p66 = scmp.ne.s32.totalorder %s51, %s65
      %p67 = scmp.eq.s32.totalorder %s20, 0
      %p68 = por %p66, %p67
      %s70 = sadd.s32 %s69, 1
      %p73 = scmp.eq.s32.totalorder %s14, 1
      %p74 = scmp.ne.s32.totalorder %s69, %s71
      %p75 = scmp.eq.s32.totalorder %s14, 0
      %p76 = por %p74, %p75
      %p77 = scmp.ne.s32.totalorder %s69, %s71
      %p78 = scmp.eq.s32.totalorder %s19, 1
      %p79 = por %p77, %p78
      %p80 = scmp.ne.s32.totalorder %s71, %s72
      %p81 = scmp.eq.s32.totalorder %s19, 0
      %p82 = por %p80, %p81
      %p83 = scmp.ne.s32.totalorder %s71, %s72
      %p84 = scmp.eq.s32.totalorder %s20, 1
      %p85 = por %p83, %p84
      %p87 = scmp.ne.s32.totalorder %s72, %s86
      %p88 = scmp.eq.s32.totalorder %s20, 0
      %p89 = por %p87, %p88
      %s91 = sadd.s32 %s90, 1
      %p94 = scmp.eq.s32.totalorder %s14, 1
      %p95 = scmp.ne.s32.totalorder %s90, %s92
      %p96 = scmp.eq.s32.totalorder %s14, 0
      %p97 = por %p95, %p96
      %p98 = scmp.ne.s32.totalorder %s90, %s92
      %p99 = scmp.eq.s32.totalorder %s19, 1
      %p100 = por %p98, %p99
      %p101 = scmp.ne.s32.totalorder %s92, %s93
      %p102 = scmp.eq.s32.totalorder %s19, 0
      %p103 = por %p101, %p102
      %p104 = scmp.ne.s32.totalorder %s92, %s93
      %p105 = scmp.eq.s32.totalorder %s20, 1
      %p106 = por %p104, %p105
      %p108 = scmp.ne.s32.totalorder %s93, %s107
      %p109 = scmp.eq.s32.totalorder %s20, 0
      %p110 = por %p108, %p109
      %s112 = sadd.s32 %s111, 1
      %p115 = scmp.eq.s32.totalorder %s14, 1
      %p116 = scmp.ne.s32.totalorder %s111, %s113
      %p117 = scmp.eq.s32.totalorder %s14, 0
      %p118 = por %p116, %p117
      %p119 = scmp.ne.s32.totalorder %s111, %s113
      %p120 = scmp.eq.s32.totalorder %s19, 1
      %p121 = por %p119, %p120
      %p122 = scmp.ne.s32.totalorder %s113, %s114
      %p123 = scmp.eq.s32.totalorder %s19, 0
      %p124 = por %p122, %p123
      %p125 = scmp.ne.s32.totalorder %s113, %s114
      %p126 = scmp.eq.s32.totalorder %s20, 1
      %p127 = por %p125, %p126
      %p129 = scmp.ne.s32.totalorder %s114, %s128
      %p130 = scmp.eq.s32.totalorder %s20, 0
      %p131 = por %p129, %p130
      %s132 = ssub.s32 %s14, %s21
      %p133 = scmp.eq.s32.totalorder %s132, 0
      %s135 = sadd.s32 %s134, 1
      %s136 = scalar_select %p133, %s134, %s135
      %p139 = pneg %p133
      %p140 = scmp.eq.s32.totalorder %s14, 1
      %p141 = por %p139, %p140
      %p142 = scmp.ne.s32.totalorder %s134, %s137
      %p143 = scmp.eq.s32.totalorder %s14, 0
      %p144 = por %p142, %p143
      %p145 = scmp.ne.s32.totalorder %s134, %s137
      %p146 = scmp.eq.s32.totalorder %s19, 1
      %p147 = por %p145, %p146
      %p148 = scmp.ne.s32.totalorder %s137, %s138
      %p149 = scmp.eq.s32.totalorder %s19, 0
      %p150 = por %p148, %p149
      %p151 = scmp.ne.s32.totalorder %s137, %s138
      %p152 = scmp.eq.s32.totalorder %s20, 1
      %p153 = por %p151, %p152
      %p155 = scmp.ne.s32.totalorder %s138, %s154
      %p156 = scmp.eq.s32.totalorder %s20, 0
      %p157 = por %p155, %p156
      %p158 = scmp.le.s32.totalorder 1, %s14
      %p159 = scmp.lt.s32.totalorder %s14, 3
      %p160 = pnand %p158, %p159
      %p161 = pneg %p160
      // Predicated region
      $region9: #{tpu_custom_call.1} parent=5 // pred_check
        _
      $region10: #{tpu_custom_call.1} parent=5 // pred_check_branch
        %163 = sbr.rel (%p160) target = $region12
      $region11: #{tpu_custom_call.1} parent=5 // pred_region
        %s164 = ssub.s32 %s14, 1
        // Predicated region
        $region13: #{tpu_custom_call.1} parent=11 // pred_check
          %p165 = pneg %p61
        $region14: #{tpu_custom_call.1} parent=11 // pred_check_branch
          %167 = sbr.rel (%p165) target = $region16
        $region15: #{tpu_custom_call.1} parent=11 // pred_region
          _
        $region16: #{tpu_custom_call.1} parent=11 // pred_fallthru
          _
        // Predicated region
        $region17: #{tpu_custom_call.1} parent=11 // pred_check
          %p168 = pneg %p82
        $region18: #{tpu_custom_call.1} parent=11 // pred_check_branch
          %170 = sbr.rel (%p168) target = $region20
        $region19: #{tpu_custom_call.1} parent=11 // pred_region
          _
        $region20: #{tpu_custom_call.1} parent=11 // pred_fallthru
          _
        // Predicated region
        $region21: #{tpu_custom_call.1} parent=11 // pred_check
          %p171 = pneg %p103
        $region22: #{tpu_custom_call.1} parent=11 // pred_check_branch
          %173 = sbr.rel (%p171) target = $region24
        $region23: #{tpu_custom_call.1} parent=11 // pred_region
          _
        $region24: #{tpu_custom_call.1} parent=11 // pred_fallthru
          _
        // Predicated region
        $region25: #{tpu_custom_call.1} parent=11 // pred_check
          %p174 = pneg %p124
        $region26: #{tpu_custom_call.1} parent=11 // pred_check_branch
          %176 = sbr.rel (%p174) target = $region28
        $region27: #{tpu_custom_call.1} parent=11 // pred_region
          _
        $region28: #{tpu_custom_call.1} parent=11 // pred_fallthru
          _
      $region12: #{tpu_custom_call.1} parent=5 // pred_fallthru
        _
      %p177 = scmp.lt.s32.totalorder %s14, 2
      // Predicated region
      $region29: #{tpu_custom_call.1} parent=5 // pred_check
        %p178 = pneg %p177
      $region30: #{tpu_custom_call.1} parent=5 // pred_check_branch
        %180 = sbr.rel (%p178) target = $region32
      $region31: #{tpu_custom_call.1} parent=5 // pred_region
        // Predicated region
        $region33: #{tpu_custom_call.1} parent=31 // pred_check
          %p181 = pneg %p34
        $region34: #{tpu_custom_call.1} parent=31 // pred_check_branch
          %183 = sbr.rel (%p181) target = $region36
        $region35: #{tpu_custom_call.1} parent=31 // pred_region
          %p184 = scmp.lt.s32.totalorder %s14, 1
          %s185 = scalar_select %p184, %s14, 1
          %s186 = smul.addr %s185, 32
          %s187 = smul.addr %s186, 8
          %s188 = scalar_lea.vmem %s0, %s187
        $region36: #{tpu_custom_call.1} parent=31 // pred_fallthru
          _
      $region32: #{tpu_custom_call.1} parent=5 // pred_fallthru
        _
      %p189 = scmp.le.s32.totalorder 1, %s14
      %p190 = scmp.lt.s32.totalorder %s14, 3
      %p191 = pnand %p189, %p190
      %p192 = pneg %p191
      // Predicated region
      $region37: #{tpu_custom_call.1} parent=5 // pred_check
        _
      $region38: #{tpu_custom_call.1} parent=5 // pred_check_branch
        %194 = sbr.rel (%p191) target = $region40
      $region39: #{tpu_custom_call.1} parent=5 // pred_region
        %s195 = ssub.s32 %s14, 1
        %p196 = scmp.lt.s32.totalorder %s19, 1
        %s197 = scalar_select %p196, %s19, 1
        %s198 = smul.addr %s197, 32
        %s199 = smul.addr %s198, 8
        %s200 = scalar_lea.vmem %s0, %s199
        %p201 = pneg %p40
        %p202 = pneg %p37
        %p203 = pneg %p61
        %p204 = pneg %p58
        %p205 = pneg %p82
        %p206 = pneg %p79
        %p207 = pneg %p103
        %p208 = pneg %p100
        %p209 = pneg %p124
        %p210 = pneg %p121
        %p211 = pneg %p150
        %p212 = pneg %p147
        %s213 = sand.u32 %s137, 1
        %s214 = scalar_lea.sflag [#allocation5], %s213
        %s215 = sand.u32 %s137, 1
        %s216 = smul.addr %s215, 256
        %s217 = scalar_lea.vmem [#allocation4], %s216
        %p218 = scmp.lt.s32.totalorder %s19, 1
        %s219 = scalar_select %p218, %s19, 1
        %s220 = smul.addr %s219, 32
        %s221 = smul.addr %s220, 8
        %s222 = scalar_lea.vmem %s0, %s221
        %vm224 = vcmask 27648
        %225 = vst.msk [vmem:[#allocation2] sm:$0xf] %vm224, 0
        %226 = vst.msk [vmem:[#allocation2 + $0x4] sm:$0xf] %vm224, 0
        %vm227 = vcmask 24576
        %228 = vst.msk [vmem:[#allocation2 + $0x8] sm:$0x1] %vm227, 0
        %s229 = scalar_lea.vmem [#allocation2], 204
        %230 = vst.msk [vmem:[%s229] sm:$0xf] %vm224, 0
        %231 = vst.msk [vmem:[%s229 + $0x4] sm:$0xf] %vm224, 0
        %232 = vst.msk [vmem:[%s229 + $0x8] sm:$0x1] %vm227, 0
        %vm233 = vcmask 24576
        %vm234 = vsmask.f32 256
        %vm235 = vmand %vm233, %vm234
        %v236 = vld [vmem:[#allocation2] sm:$0x1]
        %v237 = vsel %vm235, 0, %v236
        %238 = vst [vmem:[#allocation2] sm:$0x1] %v237
        %v239 = vld [vmem:[#allocation2 + $0xc] sm:$0x1]
        %v240 = vsel %vm235, 0, %v239
        %241 = vst [vmem:[#allocation2 + $0xc] sm:$0x1] %v240
        %v242 = vld [vmem:[#allocation2 + $0x18] sm:$0x1]
        %v243 = vsel %vm235, 0, %v242
        %244 = vst [vmem:[#allocation2 + $0x18] sm:$0x1] %v243
        %v245 = vld [vmem:[#allocation2 + $0x24] sm:$0x1]
        %v246 = vsel %vm235, 0, %v245
        %247 = vst [vmem:[#allocation2 + $0x24] sm:$0x1] %v246
        %v248 = vld [vmem:[#allocation2 + $0x30] sm:$0x1]
        %v249 = vsel %vm235, 0, %v248
        %250 = vst [vmem:[#allocation2 + $0x30] sm:$0x1] %v249
        %v251 = vld [vmem:[#allocation2 + $0x3c] sm:$0x1]
        %v252 = vsel %vm235, 0, %v251
        %253 = vst [vmem:[#allocation2 + $0x3c] sm:$0x1] %v252
        %v254 = vld [vmem:[#allocation2 + $0x48] sm:$0x1]
        %v255 = vsel %vm235, 0, %v254
        %256 = vst [vmem:[#allocation2 + $0x48] sm:$0x1] %v255
        %v257 = vld [vmem:[#allocation2 + $0x54] sm:$0x1]
        %v258 = vsel %vm235, 0, %v257
        %259 = vst [vmem:[#allocation2 + $0x54] sm:$0x1] %v258
        %v260 = vld [vmem:[#allocation2 + $0x60] sm:$0x1]
        %v261 = vsel %vm235, 0, %v260
        %262 = vst [vmem:[#allocation2 + $0x60] sm:$0x1] %v261
        %v263 = vld [vmem:[#allocation2 + $0x6c] sm:$0x1]
        %v264 = vsel %vm235, 0, %v263
        %265 = vst [vmem:[#allocation2 + $0x6c] sm:$0x1] %v264
        %v266 = vld [vmem:[#allocation2 + $0x78] sm:$0x1]
        %v267 = vsel %vm235, 0, %v266
        %268 = vst [vmem:[#allocation2 + $0x78] sm:$0x1] %v267
        %v269 = vld [vmem:[#allocation2 + $0x84] sm:$0x1]
        %v270 = vsel %vm235, 0, %v269
        %271 = vst [vmem:[#allocation2 + $0x84] sm:$0x1] %v270
        %v272 = vld [vmem:[#allocation2 + $0x90] sm:$0x1]
        %v273 = vsel %vm235, 0, %v272
        %274 = vst [vmem:[#allocation2 + $0x90] sm:$0x1] %v273
        %v275 = vld [vmem:[#allocation2 + $0x9c] sm:$0x1]
        %v276 = vsel %vm235, 0, %v275
        %277 = vst [vmem:[#allocation2 + $0x9c] sm:$0x1] %v276
        %v278 = vld [vmem:[#allocation2 + $0xa8] sm:$0x1]
        %v279 = vsel %vm235, 0, %v278
        %280 = vst [vmem:[#allocation2 + $0xa8] sm:$0x1] %v279
        %v281 = vld [vmem:[#allocation2 + $0xb4] sm:$0x1]
        %v282 = vsel %vm235, 0, %v281
        %283 = vst [vmem:[#allocation2 + $0xb4] sm:$0x1] %v282
        %v284 = vld [vmem:[#allocation2 + $0xc0] sm:$0x1]
        %v285 = vsel %vm235, 0, %v284
        %286 = vst [vmem:[#allocation2 + $0xc0] sm:$0x1] %v285
        %v287 = vld [vmem:[#allocation2 + $0xcc] sm:$0x1]
        %v288 = vsel %vm235, 0, %v287
        %289 = vst [vmem:[#allocation2 + $0xcc] sm:$0x1] %v288
        %vm290 = vsmask.f32 7938
        %vm291 = vmand %vm233, %vm290
        %v292 = vld [vmem:[#allocation2 + $0x8] sm:$0x1]
        %v293 = vsel %vm291, 0, %v292
        %294 = vst [vmem:[#allocation2 + $0x8] sm:$0x1] %v293
        %v295 = vld [vmem:[#allocation2 + $0x14] sm:$0x1]
        %v296 = vsel %vm291, 0, %v295
        %297 = vst [vmem:[#allocation2 + $0x14] sm:$0x1] %v296
        %v298 = vld [vmem:[#allocation2 + $0x20] sm:$0x1]
        %v299 = vsel %vm291, 0, %v298
        %300 = vst [vmem:[#allocation2 + $0x20] sm:$0x1] %v299
        %v301 = vld [vmem:[#allocation2 + $0x2c] sm:$0x1]
        %v302 = vsel %vm291, 0, %v301
        %303 = vst [vmem:[#allocation2 + $0x2c] sm:$0x1] %v302
        %v304 = vld [vmem:[#allocation2 + $0x38] sm:$0x1]
        %v305 = vsel %vm291, 0, %v304
        %306 = vst [vmem:[#allocation2 + $0x38] sm:$0x1] %v305
        %v307 = vld [vmem:[#allocation2 + $0x44] sm:$0x1]
        %v308 = vsel %vm291, 0, %v307
        %309 = vst [vmem:[#allocation2 + $0x44] sm:$0x1] %v308
        %v310 = vld [vmem:[#allocation2 + $0x50] sm:$0x1]
        %v311 = vsel %vm291, 0, %v310
        %312 = vst [vmem:[#allocation2 + $0x50] sm:$0x1] %v311
        %v313 = vld [vmem:[#allocation2 + $0x5c] sm:$0x1]
        %v314 = vsel %vm291, 0, %v313
        %315 = vst [vmem:[#allocation2 + $0x5c] sm:$0x1] %v314
        %v316 = vld [vmem:[#allocation2 + $0x68] sm:$0x1]
        %v317 = vsel %vm291, 0, %v316
        %318 = vst [vmem:[#allocation2 + $0x68] sm:$0x1] %v317
        %v319 = vld [vmem:[#allocation2 + $0x74] sm:$0x1]
        %v320 = vsel %vm291, 0, %v319
        %321 = vst [vmem:[#allocation2 + $0x74] sm:$0x1] %v320
        %v322 = vld [vmem:[#allocation2 + $0x80] sm:$0x1]
        %v323 = vsel %vm291, 0, %v322
        %324 = vst [vmem:[#allocation2 + $0x80] sm:$0x1] %v323
        %v325 = vld [vmem:[#allocation2 + $0x8c] sm:$0x1]
        %v326 = vsel %vm291, 0, %v325
        %327 = vst [vmem:[#allocation2 + $0x8c] sm:$0x1] %v326
        %v328 = vld [vmem:[#allocation2 + $0x98] sm:$0x1]
        %v329 = vsel %vm291, 0, %v328
        %330 = vst [vmem:[#allocation2 + $0x98] sm:$0x1] %v329
        %v331 = vld [vmem:[#allocation2 + $0xa4] sm:$0x1]
        %v332 = vsel %vm291, 0, %v331
        %333 = vst [vmem:[#allocation2 + $0xa4] sm:$0x1] %v332
        %v334 = vld [vmem:[#allocation2 + $0xb0] sm:$0x1]
        %v335 = vsel %vm291, 0, %v334
        %336 = vst [vmem:[#allocation2 + $0xb0] sm:$0x1] %v335
        %v337 = vld [vmem:[#allocation2 + $0xbc] sm:$0x1]
        %v338 = vsel %vm291, 0, %v337
        %339 = vst [vmem:[#allocation2 + $0xbc] sm:$0x1] %v338
        %v340 = vld [vmem:[#allocation2 + $0xc8] sm:$0x1]
        %v341 = vsel %vm291, 0, %v340
        %342 = vst [vmem:[#allocation2 + $0xc8] sm:$0x1] %v341
        %v343 = vld [vmem:[#allocation2 + $0xd4] sm:$0x1]
        %v344 = vsel %vm291, 0, %v343
        %345 = vst [vmem:[#allocation2 + $0xd4] sm:$0x1] %v344
        %v346 = vld [vmem:[%s222] sm:$0xff]
        %v347 = vld [vmem:[%s222 + $0x8] sm:$0xff]
        %v348 = vld [vmem:[%s222 + $0x10] sm:$0xff]
        %v349 = vld [vmem:[%s222 + $0x18] sm:$0xff]
        %v350 = vld [vmem:[%s222 + $0x20] sm:$0xff]
        %v351 = vld [vmem:[%s222 + $0x28] sm:$0xff]
        %v352 = vld [vmem:[%s222 + $0x30] sm:$0xff]
        %v353 = vld [vmem:[%s222 + $0x38] sm:$0xff]
        %v354 = vld [vmem:[%s222 + $0x40] sm:$0xff]
        %v355 = vld [vmem:[%s222 + $0x48] sm:$0xff]
        %v356 = vld [vmem:[%s222 + $0x50] sm:$0xff]
        %v357 = vld [vmem:[%s222 + $0x58] sm:$0xff]
        %v358 = vld [vmem:[%s222 + $0x60] sm:$0xff]
        %v359 = vld [vmem:[%s222 + $0x68] sm:$0xff]
        %v360 = vld [vmem:[%s222 + $0x70] sm:$0xff]
        %v361 = vld [vmem:[%s222 + $0x78] sm:$0xff]
        %v362 = vld [vmem:[%s222 + $0x80] sm:$0xff]
        %v363 = vld [vmem:[%s222 + $0x88] sm:$0xff]
        %v364 = vld [vmem:[%s222 + $0x90] sm:$0xff]
        %v365 = vld [vmem:[%s222 + $0x98] sm:$0xff]
        %v366 = vld [vmem:[%s222 + $0xa0] sm:$0xff]
        %v367 = vld [vmem:[%s222 + $0xa8] sm:$0xff]
        %v368 = vld [vmem:[%s222 + $0xb0] sm:$0xff]
        %v369 = vld [vmem:[%s222 + $0xb8] sm:$0xff]
        %v370 = vld [vmem:[%s222 + $0xc0] sm:$0xff]
        %v371 = vld [vmem:[%s222 + $0xc8] sm:$0xff]
        %v372 = vld [vmem:[%s222 + $0xd0] sm:$0xff]
        %v373 = vld [vmem:[%s222 + $0xd8] sm:$0xff]
        %v374 = vld [vmem:[%s222 + $0xe0] sm:$0xff]
        %v375 = vld [vmem:[%s222 + $0xe8] sm:$0xff]
        %v376 = vld [vmem:[%s222 + $0xf0] sm:$0xff]
        %v377 = vld [vmem:[%s222 + $0xf8] sm:$0xff]
        %v378 = vpack.c.bf16 %v347, %v346
        %v379 = vpack.c.bf16 %v349, %v348
        %v380 = vpack.c.bf16 %v351, %v350
        %v381 = vpack.c.bf16 %v353, %v352
        %v382 = vpack.c.bf16 %v355, %v354
        %v383 = vpack.c.bf16 %v357, %v356
        %v384 = vpack.c.bf16 %v359, %v358
        %v385 = vpack.c.bf16 %v361, %v360
        %v386 = vpack.c.bf16 %v363, %v362
        %v387 = vpack.c.bf16 %v365, %v364
        %v388 = vpack.c.bf16 %v367, %v366
        %v389 = vpack.c.bf16 %v369, %v368
        %v390 = vpack.c.bf16 %v371, %v370
        %v391 = vpack.c.bf16 %v373, %v372
        %v392 = vpack.c.bf16 %v375, %v374
        %v393 = vpack.c.bf16 %v377, %v376
        %v410 = vunpack.c.l.b16 %v378
        %v411 = vunpack.c.h.b16 %v378
        %v412 = vunpack.c.l.b16 %v379
        %v413 = vunpack.c.h.b16 %v379
        %v414 = vunpack.c.l.b16 %v380
        %v415 = vunpack.c.h.b16 %v380
        %v416 = vunpack.c.l.b16 %v381
        %v417 = vunpack.c.h.b16 %v381
        %v418 = vunpack.c.l.b16 %v382
        %v419 = vunpack.c.h.b16 %v382
        %v420 = vunpack.c.l.b16 %v383
        %v421 = vunpack.c.h.b16 %v383
        %v422 = vunpack.c.l.b16 %v384
        %v423 = vunpack.c.h.b16 %v384
        %v424 = vunpack.c.l.b16 %v385
        %v425 = vunpack.c.h.b16 %v385
        %v426 = vunpack.c.l.b16 %v386
        %v427 = vunpack.c.h.b16 %v386
        %v428 = vunpack.c.l.b16 %v387
        %v429 = vunpack.c.h.b16 %v387
        %v430 = vunpack.c.l.b16 %v388
        %v431 = vunpack.c.h.b16 %v388
        %v432 = vunpack.c.l.b16 %v389
        %v433 = vunpack.c.h.b16 %v389
        %v434 = vunpack.c.l.b16 %v390
        %v435 = vunpack.c.h.b16 %v390
        %v436 = vunpack.c.l.b16 %v391
        %v437 = vunpack.c.h.b16 %v391
        %v438 = vunpack.c.l.b16 %v392
        %v439 = vunpack.c.h.b16 %v392
        %v440 = vunpack.c.l.b16 %v393
        %v441 = vunpack.c.h.b16 %v393
        %v442 = vpack.c.b16 %v410, %v410
        %v443 = vpack.c.b16 %v411, %v411
        %v444 = vpack.c.b16 %v412, %v412
        %v445 = vpack.c.b16 %v413, %v413
        %v446 = vpack.c.b16 %v414, %v414
        %v447 = vpack.c.b16 %v415, %v415
        %v448 = vpack.c.b16 %v416, %v416
        %v449 = vpack.c.b16 %v417, %v417
        %v450 = vpack.c.b16 %v418, %v418
        %v451 = vpack.c.b16 %v419, %v419
        %v452 = vpack.c.b16 %v420, %v420
        %v453 = vpack.c.b16 %v421, %v421
        %v454 = vpack.c.b16 %v422, %v422
        %v455 = vpack.c.b16 %v423, %v423
        %v456 = vpack.c.b16 %v424, %v424
        %v457 = vpack.c.b16 %v425, %v425
        %v458 = vpack.c.b16 %v426, %v426
        %v459 = vpack.c.b16 %v427, %v427
        %v460 = vpack.c.b16 %v428, %v428
        %v461 = vpack.c.b16 %v429, %v429
        %v462 = vpack.c.b16 %v430, %v430
        %v463 = vpack.c.b16 %v431, %v431
        %v464 = vpack.c.b16 %v432, %v432
        %v465 = vpack.c.b16 %v433, %v433
        %v466 = vpack.c.b16 %v434, %v434
        %v467 = vpack.c.b16 %v435, %v435
        %v468 = vpack.c.b16 %v436, %v436
        %v469 = vpack.c.b16 %v437, %v437
        %v470 = vpack.c.b16 %v438, %v438
        %v471 = vpack.c.b16 %v439, %v439
        %v472 = vpack.c.b16 %v440, %v440
        %v473 = vpack.c.b16 %v441, %v441
        %vm474 = vsmask.f32 4368
        %vm475 = vmor %vm234, %vm474
        %v477 = vshrl.u32 %v442, 16
        %v479 = vrot.slane %v477, 7
        %v480 = vshll.u32 %v442, 16
        %v482 = vor.u32 %v479, %v480
        %v483 = vrot.slane %v479, 4
        %v485 = vshrl.u32 %v443, 16
        %v487 = vrot.slane %v485, 7
        %v488 = vshll.u32 %v443, 16
        %v490 = vor.u32 %v487, %v488
        %v491 = vsel %vm475, %v483, %v490
        %v492 = vrot.slane %v487, 4
        %v494 = vshrl.u32 %v444, 16
        %v496 = vrot.slane %v494, 7
        %v497 = vshll.u32 %v444, 16
        %v499 = vor.u32 %v496, %v497
        %v500 = vrot.slane %v496, 4
        %v502 = vshrl.u32 %v445, 16
        %v504 = vrot.slane %v502, 7
        %v505 = vshll.u32 %v445, 16
        %v507 = vor.u32 %v504, %v505
        %v508 = vsel %vm475, %v500, %v507
        %v509 = vrot.slane %v504, 4
        %v511 = vshrl.u32 %v446, 16
        %v513 = vrot.slane %v511, 7
        %v514 = vshll.u32 %v446, 16
        %v516 = vor.u32 %v513, %v514
        %v517 = vrot.slane %v513, 4
        %v519 = vshrl.u32 %v447, 16
        %v521 = vrot.slane %v519, 7
        %v522 = vshll.u32 %v447, 16
        %v524 = vor.u32 %v521, %v522
        %v525 = vsel %vm475, %v517, %v524
        %v526 = vrot.slane %v521, 4
        %v528 = vshrl.u32 %v448, 16
        %v530 = vrot.slane %v528, 7
        %v531 = vshll.u32 %v448, 16
        %v533 = vor.u32 %v530, %v531
        %v534 = vrot.slane %v530, 4
        %v536 = vshrl.u32 %v449, 16
        %v538 = vrot.slane %v536, 7
        %v539 = vshll.u32 %v449, 16
        %v541 = vor.u32 %v538, %v539
        %v542 = vsel %vm475, %v534, %v541
        %v543 = vrot.slane %v538, 4
        %v545 = vshrl.u32 %v450, 16
        %v547 = vrot.slane %v545, 7
        %v548 = vshll.u32 %v450, 16
        %v550 = vor.u32 %v547, %v548
        %v551 = vrot.slane %v547, 4
        %v553 = vshrl.u32 %v451, 16
        %v555 = vrot.slane %v553, 7
        %v556 = vshll.u32 %v451, 16
        %v558 = vor.u32 %v555, %v556
        %v559 = vsel %vm475, %v551, %v558
        %v560 = vrot.slane %v555, 4
        %v562 = vshrl.u32 %v452, 16
        %v564 = vrot.slane %v562, 7
        %v565 = vshll.u32 %v452, 16
        %v567 = vor.u32 %v564, %v565
        %v568 = vrot.slane %v564, 4
        %v570 = vshrl.u32 %v453, 16
        %v572 = vrot.slane %v570, 7
        %v573 = vshll.u32 %v453, 16
        %v575 = vor.u32 %v572, %v573
        %v576 = vsel %vm475, %v568, %v575
        %v577 = vrot.slane %v572, 4
        %v579 = vshrl.u32 %v454, 16
        %v581 = vrot.slane %v579, 7
        %v582 = vshll.u32 %v454, 16
        %v584 = vor.u32 %v581, %v582
        %v585 = vrot.slane %v581, 4
        %v587 = vshrl.u32 %v455, 16
        %v589 = vrot.slane %v587, 7
        %v590 = vshll.u32 %v455, 16
        %v592 = vor.u32 %v589, %v590
        %v593 = vsel %vm475, %v585, %v592
        %v594 = vrot.slane %v589, 4
        %v596 = vshrl.u32 %v456, 16
        %v598 = vrot.slane %v596, 7
        %v599 = vshll.u32 %v456, 16
        %v601 = vor.u32 %v598, %v599
        %v602 = vrot.slane %v598, 4
        %v604 = vshrl.u32 %v457, 16
        %v606 = vrot.slane %v604, 7
        %v607 = vshll.u32 %v457, 16
        %v609 = vor.u32 %v606, %v607
        %v610 = vsel %vm475, %v602, %v609
        %v611 = vrot.slane %v606, 4
        %v613 = vshrl.u32 %v458, 16
        %v615 = vrot.slane %v613, 7
        %v616 = vshll.u32 %v458, 16
        %v618 = vor.u32 %v615, %v616
        %v619 = vrot.slane %v615, 4
        %v621 = vshrl.u32 %v459, 16
        %v623 = vrot.slane %v621, 7
        %v624 = vshll.u32 %v459, 16
        %v626 = vor.u32 %v623, %v624
        %v627 = vsel %vm475, %v619, %v626
        %v628 = vrot.slane %v623, 4
        %v630 = vshrl.u32 %v460, 16
        %v632 = vrot.slane %v630, 7
        %v633 = vshll.u32 %v460, 16
        %v635 = vor.u32 %v632, %v633
        %v636 = vrot.slane %v632, 4
        %v638 = vshrl.u32 %v461, 16
        %v640 = vrot.slane %v638, 7
        %v641 = vshll.u32 %v461, 16
        %v643 = vor.u32 %v640, %v641
        %v644 = vsel %vm475, %v636, %v643
        %v645 = vrot.slane %v640, 4
        %v647 = vshrl.u32 %v462, 16
        %v649 = vrot.slane %v647, 7
        %v650 = vshll.u32 %v462, 16
        %v652 = vor.u32 %v649, %v650
        %v653 = vrot.slane %v649, 4
        %v655 = vshrl.u32 %v463, 16
        %v657 = vrot.slane %v655, 7
        %v658 = vshll.u32 %v463, 16
        %v660 = vor.u32 %v657, %v658
        %v661 = vsel %vm475, %v653, %v660
        %v662 = vrot.slane %v657, 4
        %v664 = vshrl.u32 %v464, 16
        %v666 = vrot.slane %v664, 7
        %v667 = vshll.u32 %v464, 16
        %v669 = vor.u32 %v666, %v667
        %v670 = vrot.slane %v666, 4
        %v672 = vshrl.u32 %v465, 16
        %v674 = vrot.slane %v672, 7
        %v675 = vshll.u32 %v465, 16
        %v677 = vor.u32 %v674, %v675
        %v678 = vsel %vm475, %v670, %v677
        %v679 = vrot.slane %v674, 4
        %v681 = vshrl.u32 %v466, 16
        %v683 = vrot.slane %v681, 7
        %v684 = vshll.u32 %v466, 16
        %v686 = vor.u32 %v683, %v684
        %v687 = vrot.slane %v683, 4
        %v689 = vshrl.u32 %v467, 16
        %v691 = vrot.slane %v689, 7
        %v692 = vshll.u32 %v467, 16
        %v694 = vor.u32 %v691, %v692
        %v695 = vsel %vm475, %v687, %v694
        %v696 = vrot.slane %v691, 4
        %v698 = vshrl.u32 %v468, 16
        %v700 = vrot.slane %v698, 7
        %v701 = vshll.u32 %v468, 16
        %v703 = vor.u32 %v700, %v701
        %v704 = vrot.slane %v700, 4
        %v706 = vshrl.u32 %v469, 16
        %v708 = vrot.slane %v706, 7
        %v709 = vshll.u32 %v469, 16
        %v711 = vor.u32 %v708, %v709
        %v712 = vsel %vm475, %v704, %v711
        %v713 = vrot.slane %v708, 4
        %v715 = vshrl.u32 %v470, 16
        %v717 = vrot.slane %v715, 7
        %v718 = vshll.u32 %v470, 16
        %v720 = vor.u32 %v717, %v718
        %v721 = vrot.slane %v717, 4
        %v723 = vshrl.u32 %v471, 16
        %v725 = vrot.slane %v723, 7
        %v726 = vshll.u32 %v471, 16
        %v728 = vor.u32 %v725, %v726
        %v729 = vsel %vm475, %v721, %v728
        %v730 = vrot.slane %v725, 4
        %v732 = vshrl.u32 %v472, 16
        %v734 = vrot.slane %v732, 7
        %v735 = vshll.u32 %v472, 16
        %v737 = vor.u32 %v734, %v735
        %v738 = vrot.slane %v734, 4
        %v740 = vshrl.u32 %v473, 16
        %v742 = vrot.slane %v740, 7
        %v743 = vshll.u32 %v473, 16
        %v745 = vor.u32 %v742, %v743
        %v746 = vsel %vm475, %v738, %v745
        %v747 = vrot.slane %v742, 4
        %s796 = scalar_lea.vmem [#allocation2], 12
        %vm797 = vcmask 27648
        %vm798 = vmand %vm797, %vm290
        %v799 = vld [vmem:[%s796] sm:$0xf]
        %v800 = vsel %vm798, %v482, %v799
        %801 = vst [vmem:[%s796] sm:$0xf] %v800
        %802 = vst.msk [vmem:[%s796 + $0x4] sm:$0xf] %vm224, %v491
        %v803 = vld [vmem:[%s796 + $0x8] sm:$0x1]
        %v804 = vsel %vm235, %v492, %v803
        %805 = vst [vmem:[%s796 + $0x8] sm:$0x1] %v804
        %v806 = vld [vmem:[%s796 + $0xc] sm:$0xf]
        %v807 = vsel %vm798, %v499, %v806
        %808 = vst [vmem:[%s796 + $0xc] sm:$0xf] %v807
        %809 = vst.msk [vmem:[%s796 + $0x10] sm:$0xf] %vm224, %v508
        %v810 = vld [vmem:[%s796 + $0x14] sm:$0x1]
        %v811 = vsel %vm235, %v509, %v810
        %812 = vst [vmem:[%s796 + $0x14] sm:$0x1] %v811
        %v813 = vld [vmem:[%s796 + $0x18] sm:$0xf]
        %v814 = vsel %vm798, %v516, %v813
        %815 = vst [vmem:[%s796 + $0x18] sm:$0xf] %v814
        %816 = vst.msk [vmem:[%s796 + $0x1c] sm:$0xf] %vm224, %v525
        %v817 = vld [vmem:[%s796 + $0x20] sm:$0x1]
        %v818 = vsel %vm235, %v526, %v817
        %819 = vst [vmem:[%s796 + $0x20] sm:$0x1] %v818
        %v820 = vld [vmem:[%s796 + $0x24] sm:$0xf]
        %v821 = vsel %vm798, %v533, %v820
        %822 = vst [vmem:[%s796 + $0x24] sm:$0xf] %v821
        %823 = vst.msk [vmem:[%s796 + $0x28] sm:$0xf] %vm224, %v542
        %v824 = vld [vmem:[%s796 + $0x2c] sm:$0x1]
        %v825 = vsel %vm235, %v543, %v824
        %826 = vst [vmem:[%s796 + $0x2c] sm:$0x1] %v825
        %v827 = vld [vmem:[%s796 + $0x30] sm:$0xf]
        %v828 = vsel %vm798, %v550, %v827
        %829 = vst [vmem:[%s796 + $0x30] sm:$0xf] %v828
        %830 = vst.msk [vmem:[%s796 + $0x34] sm:$0xf] %vm224, %v559
        %v831 = vld [vmem:[%s796 + $0x38] sm:$0x1]
        %v832 = vsel %vm235, %v560, %v831
        %833 = vst [vmem:[%s796 + $0x38] sm:$0x1] %v832
        %v834 = vld [vmem:[%s796 + $0x3c] sm:$0xf]
        %v835 = vsel %vm798, %v567, %v834
        %836 = vst [vmem:[%s796 + $0x3c] sm:$0xf] %v835
        %837 = vst.msk [vmem:[%s796 + $0x40] sm:$0xf] %vm224, %v576
        %v838 = vld [vmem:[%s796 + $0x44] sm:$0x1]
        %v839 = vsel %vm235, %v577, %v838
        %840 = vst [vmem:[%s796 + $0x44] sm:$0x1] %v839
        %v841 = vld [vmem:[%s796 + $0x48] sm:$0xf]
        %v842 = vsel %vm798, %v584, %v841
        %843 = vst [vmem:[%s796 + $0x48] sm:$0xf] %v842
        %844 = vst.msk [vmem:[%s796 + $0x4c] sm:$0xf] %vm224, %v593
        %v845 = vld [vmem:[%s796 + $0x50] sm:$0x1]
        %v846 = vsel %vm235, %v594, %v845
        %847 = vst [vmem:[%s796 + $0x50] sm:$0x1] %v846
        %v848 = vld [vmem:[%s796 + $0x54] sm:$0xf]
        %v849 = vsel %vm798, %v601, %v848
        %850 = vst [vmem:[%s796 + $0x54] sm:$0xf] %v849
        %851 = vst.msk [vmem:[%s796 + $0x58] sm:$0xf] %vm224, %v610
        %v852 = vld [vmem:[%s796 + $0x5c] sm:$0x1]
        %v853 = vsel %vm235, %v611, %v852
        %854 = vst [vmem:[%s796 + $0x5c] sm:$0x1] %v853
        %v855 = vld [vmem:[%s796 + $0x60] sm:$0xf]
        %v856 = vsel %vm798, %v618, %v855
        %857 = vst [vmem:[%s796 + $0x60] sm:$0xf] %v856
        %858 = vst.msk [vmem:[%s796 + $0x64] sm:$0xf] %vm224, %v627
        %v859 = vld [vmem:[%s796 + $0x68] sm:$0x1]
        %v860 = vsel %vm235, %v628, %v859
        %861 = vst [vmem:[%s796 + $0x68] sm:$0x1] %v860
        %v862 = vld [vmem:[%s796 + $0x6c] sm:$0xf]
        %v863 = vsel %vm798, %v635, %v862
        %864 = vst [vmem:[%s796 + $0x6c] sm:$0xf] %v863
        %865 = vst.msk [vmem:[%s796 + $0x70] sm:$0xf] %vm224, %v644
        %v866 = vld [vmem:[%s796 + $0x74] sm:$0x1]
        %v867 = vsel %vm235, %v645, %v866
        %868 = vst [vmem:[%s796 + $0x74] sm:$0x1] %v867
        %v869 = vld [vmem:[%s796 + $0x78] sm:$0xf]
        %v870 = vsel %vm798, %v652, %v869
        %871 = vst [vmem:[%s796 + $0x78] sm:$0xf] %v870
        %872 = vst.msk [vmem:[%s796 + $0x7c] sm:$0xf] %vm224, %v661
        %v873 = vld [vmem:[%s796 + $0x80] sm:$0x1]
        %v874 = vsel %vm235, %v662, %v873
        %875 = vst [vmem:[%s796 + $0x80] sm:$0x1] %v874
        %v876 = vld [vmem:[%s796 + $0x84] sm:$0xf]
        %v877 = vsel %vm798, %v669, %v876
        %878 = vst [vmem:[%s796 + $0x84] sm:$0xf] %v877
        %879 = vst.msk [vmem:[%s796 + $0x88] sm:$0xf] %vm224, %v678
        %v880 = vld [vmem:[%s796 + $0x8c] sm:$0x1]
        %v881 = vsel %vm235, %v679, %v880
        %882 = vst [vmem:[%s796 + $0x8c] sm:$0x1] %v881
        %v883 = vld [vmem:[%s796 + $0x90] sm:$0xf]
        %v884 = vsel %vm798, %v686, %v883
        %885 = vst [vmem:[%s796 + $0x90] sm:$0xf] %v884
        %886 = vst.msk [vmem:[%s796 + $0x94] sm:$0xf] %vm224, %v695
        %v887 = vld [vmem:[%s796 + $0x98] sm:$0x1]
        %v888 = vsel %vm235, %v696, %v887
        %889 = vst [vmem:[%s796 + $0x98] sm:$0x1] %v888
        %v890 = vld [vmem:[%s796 + $0x9c] sm:$0xf]
        %v891 = vsel %vm798, %v703, %v890
        %892 = vst [vmem:[%s796 + $0x9c] sm:$0xf] %v891
        %893 = vst.msk [vmem:[%s796 + $0xa0] sm:$0xf] %vm224, %v712
        %v894 = vld [vmem:[%s796 + $0xa4] sm:$0x1]
        %v895 = vsel %vm235, %v713, %v894
        %896 = vst [vmem:[%s796 + $0xa4] sm:$0x1] %v895
        %v897 = vld [vmem:[%s796 + $0xa8] sm:$0xf]
        %v898 = vsel %vm798, %v720, %v897
        %899 = vst [vmem:[%s796 + $0xa8] sm:$0xf] %v898
        %900 = vst.msk [vmem:[%s796 + $0xac] sm:$0xf] %vm224, %v729
        %v901 = vld [vmem:[%s796 + $0xb0] sm:$0x1]
        %v902 = vsel %vm235, %v730, %v901
        %903 = vst [vmem:[%s796 + $0xb0] sm:$0x1] %v902
        %v904 = vld [vmem:[%s796 + $0xb4] sm:$0xf]
        %v905 = vsel %vm798, %v737, %v904
        %906 = vst [vmem:[%s796 + $0xb4] sm:$0xf] %v905
        %907 = vst.msk [vmem:[%s796 + $0xb8] sm:$0xf] %vm224, %v746
        %v908 = vld [vmem:[%s796 + $0xbc] sm:$0x1]
        %v909 = vsel %vm235, %v747, %v908
        %910 = vst [vmem:[%s796 + $0xbc] sm:$0x1] %v909
        %v911 = vld [vmem:[#allocation2] sm:$0xf]
        %v912 = vld [vmem:[#allocation2 + $0x4] sm:$0xf]
        %v913 = vld [vmem:[#allocation2 + $0xc] sm:$0xf]
        %v914 = vld [vmem:[#allocation2 + $0x10] sm:$0xf]
        %v915 = vld [vmem:[#allocation2 + $0x18] sm:$0xf]
        %v916 = vld [vmem:[#allocation2 + $0x1c] sm:$0xf]
        %v917 = vld [vmem:[#allocation2 + $0x24] sm:$0xf]
        %v918 = vld [vmem:[#allocation2 + $0x28] sm:$0xf]
        %v919 = vld [vmem:[#allocation2 + $0x30] sm:$0xf]
        %v920 = vld [vmem:[#allocation2 + $0x34] sm:$0xf]
        %v921 = vld [vmem:[#allocation2 + $0x3c] sm:$0xf]
        %v922 = vld [vmem:[#allocation2 + $0x40] sm:$0xf]
        %v923 = vld [vmem:[#allocation2 + $0x48] sm:$0xf]
        %v924 = vld [vmem:[#allocation2 + $0x4c] sm:$0xf]
        %v925 = vld [vmem:[#allocation2 + $0x54] sm:$0xf]
        %v926 = vld [vmem:[#allocation2 + $0x58] sm:$0xf]
        %v927 = vld [vmem:[#allocation2 + $0x60] sm:$0xf]
        %v928 = vld [vmem:[#allocation2 + $0x64] sm:$0xf]
        %v929 = vld [vmem:[#allocation2 + $0x6c] sm:$0xf]
        %v930 = vld [vmem:[#allocation2 + $0x70] sm:$0xf]
        %v931 = vld [vmem:[#allocation2 + $0x78] sm:$0xf]
        %v932 = vld [vmem:[#allocation2 + $0x7c] sm:$0xf]
        %v933 = vld [vmem:[#allocation2 + $0x84] sm:$0xf]
        %v934 = vld [vmem:[#allocation2 + $0x88] sm:$0xf]
        %v935 = vld [vmem:[#allocation2 + $0x90] sm:$0xf]
        %v936 = vld [vmem:[#allocation2 + $0x94] sm:$0xf]
        %v937 = vld [vmem:[#allocation2 + $0x9c] sm:$0xf]
        %v938 = vld [vmem:[#allocation2 + $0xa0] sm:$0xf]
        %v939 = vld [vmem:[#allocation2 + $0xa8] sm:$0xf]
        %v940 = vld [vmem:[#allocation2 + $0xac] sm:$0xf]
        %v941 = vld [vmem:[#allocation2 + $0xb4] sm:$0xf]
        %v942 = vld [vmem:[#allocation2 + $0xb8] sm:$0xf]
        %v975 = vunpack.c.l.b16 %v911
        %v976 = vunpack.c.l.b16 %v912
        %v977 = vunpack.c.l.b16 %v913
        %v978 = vunpack.c.l.b16 %v914
        %v979 = vunpack.c.l.b16 %v915
        %v980 = vunpack.c.l.b16 %v916
        %v981 = vunpack.c.l.b16 %v917
        %v982 = vunpack.c.l.b16 %v918
        %v983 = vunpack.c.l.b16 %v919
        %v984 = vunpack.c.l.b16 %v920
        %v985 = vunpack.c.l.b16 %v921
        %v986 = vunpack.c.l.b16 %v922
        %v987 = vunpack.c.l.b16 %v923
        %v988 = vunpack.c.l.b16 %v924
        %v989 = vunpack.c.l.b16 %v925
        %v990 = vunpack.c.l.b16 %v926
        %v991 = vunpack.c.l.b16 %v927
        %v992 = vunpack.c.l.b16 %v928
        %v993 = vunpack.c.l.b16 %v929
        %v994 = vunpack.c.l.b16 %v930
        %v995 = vunpack.c.l.b16 %v931
        %v996 = vunpack.c.l.b16 %v932
        %v997 = vunpack.c.l.b16 %v933
        %v998 = vunpack.c.l.b16 %v934
        %v999 = vunpack.c.l.b16 %v935
        %v1000 = vunpack.c.l.b16 %v936
        %v1001 = vunpack.c.l.b16 %v937
        %v1002 = vunpack.c.l.b16 %v938
        %v1003 = vunpack.c.l.b16 %v939
        %v1004 = vunpack.c.l.b16 %v940
        %v1005 = vunpack.c.l.b16 %v941
        %v1006 = vunpack.c.l.b16 %v942
        %v1007 = vpack.c.b16 %v976, %v975
        %v1008 = vpack.c.b16 %v978, %v977
        %v1009 = vpack.c.b16 %v980, %v979
        %v1010 = vpack.c.b16 %v982, %v981
        %v1011 = vpack.c.b16 %v984, %v983
        %v1012 = vpack.c.b16 %v986, %v985
        %v1013 = vpack.c.b16 %v988, %v987
        %v1014 = vpack.c.b16 %v990, %v989
        %v1015 = vpack.c.b16 %v992, %v991
        %v1016 = vpack.c.b16 %v994, %v993
        %v1017 = vpack.c.b16 %v996, %v995
        %v1018 = vpack.c.b16 %v998, %v997
        %v1019 = vpack.c.b16 %v1000, %v999
        %v1020 = vpack.c.b16 %v1002, %v1001
        %v1021 = vpack.c.b16 %v1004, %v1003
        %v1022 = vpack.c.b16 %v1006, %v1005
        %vm1039 = vcmask 31744
        %1040 = vst.msk [vmem:[#allocation3] sm:$0xff] %vm1039, %v1007
        %1041 = vst.msk [vmem:[#allocation3 + $0x8] sm:$0xff] %vm1039, %v1008
        %1042 = vst.msk [vmem:[#allocation3 + $0x10] sm:$0xff] %vm1039, %v1009
        %1043 = vst.msk [vmem:[#allocation3 + $0x18] sm:$0xff] %vm1039, %v1010
        %1044 = vst.msk [vmem:[#allocation3 + $0x20] sm:$0xff] %vm1039, %v1011
        %1045 = vst.msk [vmem:[#allocation3 + $0x28] sm:$0xff] %vm1039, %v1012
        %1046 = vst.msk [vmem:[#allocation3 + $0x30] sm:$0xff] %vm1039, %v1013
        %1047 = vst.msk [vmem:[#allocation3 + $0x38] sm:$0xff] %vm1039, %v1014
        %1048 = vst.msk [vmem:[#allocation3 + $0x40] sm:$0xff] %vm1039, %v1015
        %1049 = vst.msk [vmem:[#allocation3 + $0x48] sm:$0xff] %vm1039, %v1016
        %1050 = vst.msk [vmem:[#allocation3 + $0x50] sm:$0xff] %vm1039, %v1017
        %1051 = vst.msk [vmem:[#allocation3 + $0x58] sm:$0xff] %vm1039, %v1018
        %1052 = vst.msk [vmem:[#allocation3 + $0x60] sm:$0xff] %vm1039, %v1019
        %1053 = vst.msk [vmem:[#allocation3 + $0x68] sm:$0xff] %vm1039, %v1020
        %1054 = vst.msk [vmem:[#allocation3 + $0x70] sm:$0xff] %vm1039, %v1021
        %1055 = vst.msk [vmem:[#allocation3 + $0x78] sm:$0xff] %vm1039, %v1022
        %v1056 = vld [vmem:[#allocation2] sm:$0xf]
        %v1057 = vld [vmem:[#allocation2 + $0x4] sm:$0xf]
        %v1058 = vld [vmem:[#allocation2 + $0x8] sm:$0x1]
        %v1059 = vld [vmem:[#allocation2 + $0xc] sm:$0xf]
        %v1060 = vld [vmem:[#allocation2 + $0x10] sm:$0xf]
        %v1061 = vld [vmem:[#allocation2 + $0x14] sm:$0x1]
        %v1062 = vld [vmem:[#allocation2 + $0x18] sm:$0xf]
        %v1063 = vld [vmem:[#allocation2 + $0x1c] sm:$0xf]
        %v1064 = vld [vmem:[#allocation2 + $0x20] sm:$0x1]
        %v1065 = vld [vmem:[#allocation2 + $0x24] sm:$0xf]
        %v1066 = vld [vmem:[#allocation2 + $0x28] sm:$0xf]
        %v1067 = vld [vmem:[#allocation2 + $0x2c] sm:$0x1]
        %v1068 = vld [vmem:[#allocation2 + $0x30] sm:$0xf]
        %v1069 = vld [vmem:[#allocation2 + $0x34] sm:$0xf]
        %v1070 = vld [vmem:[#allocation2 + $0x38] sm:$0x1]
        %v1071 = vld [vmem:[#allocation2 + $0x3c] sm:$0xf]
        %v1072 = vld [vmem:[#allocation2 + $0x40] sm:$0xf]
        %v1073 = vld [vmem:[#allocation2 + $0x44] sm:$0x1]
        %v1074 = vld [vmem:[#allocation2 + $0x48] sm:$0xf]
        %v1075 = vld [vmem:[#allocation2 + $0x4c] sm:$0xf]
        %v1076 = vld [vmem:[#allocation2 + $0x50] sm:$0x1]
        %v1077 = vld [vmem:[#allocation2 + $0x54] sm:$0xf]
        %v1078 = vld [vmem:[#allocation2 + $0x58] sm:$0xf]
        %v1079 = vld [vmem:[#allocation2 + $0x5c] sm:$0x1]
        %v1080 = vld [vmem:[#allocation2 + $0x60] sm:$0xf]
        %v1081 = vld [vmem:[#allocation2 + $0x64] sm:$0xf]
        %v1082 = vld [vmem:[#allocation2 + $0x68] sm:$0x1]
        %v1083 = vld [vmem:[#allocation2 + $0x6c] sm:$0xf]
        %v1084 = vld [vmem:[#allocation2 + $0x70] sm:$0xf]
        %v1085 = vld [vmem:[#allocation2 + $0x74] sm:$0x1]
        %v1086 = vld [vmem:[#allocation2 + $0x78] sm:$0xf]
        %v1087 = vld [vmem:[#allocation2 + $0x7c] sm:$0xf]
        %v1088 = vld [vmem:[#allocation2 + $0x80] sm:$0x1]
        %v1089 = vld [vmem:[#allocation2 + $0x84] sm:$0xf]
        %v1090 = vld [vmem:[#allocation2 + $0x88] sm:$0xf]
        %v1091 = vld [vmem:[#allocation2 + $0x8c] sm:$0x1]
        %v1092 = vld [vmem:[#allocation2 + $0x90] sm:$0xf]
        %v1093 = vld [vmem:[#allocation2 + $0x94] sm:$0xf]
        %v1094 = vld [vmem:[#allocation2 + $0x98] sm:$0x1]
        %v1095 = vld [vmem:[#allocation2 + $0x9c] sm:$0xf]
        %v1096 = vld [vmem:[#allocation2 + $0xa0] sm:$0xf]
        %v1097 = vld [vmem:[#allocation2 + $0xa4] sm:$0x1]
        %v1098 = vld [vmem:[#allocation2 + $0xa8] sm:$0xf]
        %v1099 = vld [vmem:[#allocation2 + $0xac] sm:$0xf]
        %v1100 = vld [vmem:[#allocation2 + $0xb0] sm:$0x1]
        %v1101 = vld [vmem:[#allocation2 + $0xb4] sm:$0xf]
        %v1102 = vld [vmem:[#allocation2 + $0xb8] sm:$0xf]
        %v1103 = vld [vmem:[#allocation2 + $0xbc] sm:$0x1]
        %v1152 = vunpack.c.l.b16 %v1056
        %v1153 = vunpack.c.l.b16 %v1057
        %v1154 = vunpack.c.l.b16 %v1058
        %v1155 = vunpack.c.l.b16 %v1059
        %v1156 = vunpack.c.l.b16 %v1060
        %v1157 = vunpack.c.l.b16 %v1061
        %v1158 = vunpack.c.l.b16 %v1062
        %v1159 = vunpack.c.l.b16 %v1063
        %v1160 = vunpack.c.l.b16 %v1064
        %v1161 = vunpack.c.l.b16 %v1065
        %v1162 = vunpack.c.l.b16 %v1066
        %v1163 = vunpack.c.l.b16 %v1067
        %v1164 = vunpack.c.l.b16 %v1068
        %v1165 = vunpack.c.l.b16 %v1069
        %v1166 = vunpack.c.l.b16 %v1070
        %v1167 = vunpack.c.l.b16 %v1071
        %v1168 = vunpack.c.l.b16 %v1072
        %v1169 = vunpack.c.l.b16 %v1073
        %v1170 = vunpack.c.l.b16 %v1074
        %v1171 = vunpack.c.l.b16 %v1075
        %v1172 = vunpack.c.l.b16 %v1076
        %v1173 = vunpack.c.l.b16 %v1077
        %v1174 = vunpack.c.l.b16 %v1078
        %v1175 = vunpack.c.l.b16 %v1079
        %v1176 = vunpack.c.l.b16 %v1080
        %v1177 = vunpack.c.l.b16 %v1081
        %v1178 = vunpack.c.l.b16 %v1082
        %v1179 = vunpack.c.l.b16 %v1083
        %v1180 = vunpack.c.l.b16 %v1084
        %v1181 = vunpack.c.l.b16 %v1085
        %v1182 = vunpack.c.l.b16 %v1086
        %v1183 = vunpack.c.l.b16 %v1087
        %v1184 = vunpack.c.l.b16 %v1088
        %v1185 = vunpack.c.l.b16 %v1089
        %v1186 = vunpack.c.l.b16 %v1090
        %v1187 = vunpack.c.l.b16 %v1091
        %v1188 = vunpack.c.l.b16 %v1092
        %v1189 = vunpack.c.l.b16 %v1093
        %v1190 = vunpack.c.l.b16 %v1094
        %v1191 = vunpack.c.l.b16 %v1095
        %v1192 = vunpack.c.l.b16 %v1096
        %v1193 = vunpack.c.l.b16 %v1097
        %v1194 = vunpack.c.l.b16 %v1098
        %v1195 = vunpack.c.l.b16 %v1099
        %v1196 = vunpack.c.l.b16 %v1100
        %v1197 = vunpack.c.l.b16 %v1101
        %v1198 = vunpack.c.l.b16 %v1102
        %v1199 = vunpack.c.l.b16 %v1103
        %v1200 = vpack.c.b16 %v1153, %v1152
        %v1201 = vpack.c.b16 %v1154, %v1154
        %v1202 = vpack.c.b16 %v1156, %v1155
        %v1203 = vpack.c.b16 %v1157, %v1157
        %v1204 = vpack.c.b16 %v1159, %v1158
        %v1205 = vpack.c.b16 %v1160, %v1160
        %v1206 = vpack.c.b16 %v1162, %v1161
        %v1207 = vpack.c.b16 %v1163, %v1163
        %v1208 = vpack.c.b16 %v1165, %v1164
        %v1209 = vpack.c.b16 %v1166, %v1166
        %v1210 = vpack.c.b16 %v1168, %v1167
        %v1211 = vpack.c.b16 %v1169, %v1169
        %v1212 = vpack.c.b16 %v1171, %v1170
        %v1213 = vpack.c.b16 %v1172, %v1172
        %v1214 = vpack.c.b16 %v1174, %v1173
        %v1215 = vpack.c.b16 %v1175, %v1175
        %v1216 = vpack.c.b16 %v1177, %v1176
        %v1217 = vpack.c.b16 %v1178, %v1178
        %v1218 = vpack.c.b16 %v1180, %v1179
        %v1219 = vpack.c.b16 %v1181, %v1181
        %v1220 = vpack.c.b16 %v1183, %v1182
        %v1221 = vpack.c.b16 %v1184, %v1184
        %v1222 = vpack.c.b16 %v1186, %v1185
        %v1223 = vpack.c.b16 %v1187, %v1187
        %v1224 = vpack.c.b16 %v1189, %v1188
        %v1225 = vpack.c.b16 %v1190, %v1190
        %v1226 = vpack.c.b16 %v1192, %v1191
        %v1227 = vpack.c.b16 %v1193, %v1193
        %v1228 = vpack.c.b16 %v1195, %v1194
        %v1229 = vpack.c.b16 %v1196, %v1196
        %v1230 = vpack.c.b16 %v1198, %v1197
        %v1231 = vpack.c.b16 %v1199, %v1199
        %vm1232 = vsmask.f32 7424
        %v1234 = vshrl.u32 %v1200, 16
        %v1236 = vshll.u32 %v1200, 16
        %v1238 = vrot.slane %v1236, 1
        %v1239 = vor.u32 %v1234, %v1238
        %v1241 = vshll.u32 %v1201, 16
        %v1243 = vrot.slane %v1241, 1
        %v1244 = vsel %vm1232, %v1239, %v1243
        %v1246 = vshrl.u32 %v1202, 16
        %v1248 = vshll.u32 %v1202, 16
        %v1250 = vrot.slane %v1248, 1
        %v1251 = vor.u32 %v1246, %v1250
        %v1253 = vshll.u32 %v1203, 16
        %v1255 = vrot.slane %v1253, 1
        %v1256 = vsel %vm1232, %v1251, %v1255
        %v1258 = vshrl.u32 %v1204, 16
        %v1260 = vshll.u32 %v1204, 16
        %v1262 = vrot.slane %v1260, 1
        %v1263 = vor.u32 %v1258, %v1262
        %v1265 = vshll.u32 %v1205, 16
        %v1267 = vrot.slane %v1265, 1
        %v1268 = vsel %vm1232, %v1263, %v1267
        %v1270 = vshrl.u32 %v1206, 16
        %v1272 = vshll.u32 %v1206, 16
        %v1274 = vrot.slane %v1272, 1
        %v1275 = vor.u32 %v1270, %v1274
        %v1277 = vshll.u32 %v1207, 16
        %v1279 = vrot.slane %v1277, 1
        %v1280 = vsel %vm1232, %v1275, %v1279
        %v1282 = vshrl.u32 %v1208, 16
        %v1284 = vshll.u32 %v1208, 16
        %v1286 = vrot.slane %v1284, 1
        %v1287 = vor.u32 %v1282, %v1286
        %v1289 = vshll.u32 %v1209, 16
        %v1291 = vrot.slane %v1289, 1
        %v1292 = vsel %vm1232, %v1287, %v1291
        %v1294 = vshrl.u32 %v1210, 16
        %v1296 = vshll.u32 %v1210, 16
        %v1298 = vrot.slane %v1296, 1
        %v1299 = vor.u32 %v1294, %v1298
        %v1301 = vshll.u32 %v1211, 16
        %v1303 = vrot.slane %v1301, 1
        %v1304 = vsel %vm1232, %v1299, %v1303
        %v1306 = vshrl.u32 %v1212, 16
        %v1308 = vshll.u32 %v1212, 16
        %v1310 = vrot.slane %v1308, 1
        %v1311 = vor.u32 %v1306, %v1310
        %v1313 = vshll.u32 %v1213, 16
        %v1315 = vrot.slane %v1313, 1
        %v1316 = vsel %vm1232, %v1311, %v1315
        %v1318 = vshrl.u32 %v1214, 16
        %v1320 = vshll.u32 %v1214, 16
        %v1322 = vrot.slane %v1320, 1
        %v1323 = vor.u32 %v1318, %v1322
        %v1325 = vshll.u32 %v1215, 16
        %v1327 = vrot.slane %v1325, 1
        %v1328 = vsel %vm1232, %v1323, %v1327
        %v1330 = vshrl.u32 %v1216, 16
        %v1332 = vshll.u32 %v1216, 16
        %v1334 = vrot.slane %v1332, 1
        %v1335 = vor.u32 %v1330, %v1334
        %v1337 = vshll.u32 %v1217, 16
        %v1339 = vrot.slane %v1337, 1
        %v1340 = vsel %vm1232, %v1335, %v1339
        %v1342 = vshrl.u32 %v1218, 16
        %v1344 = vshll.u32 %v1218, 16
        %v1346 = vrot.slane %v1344, 1
        %v1347 = vor.u32 %v1342, %v1346
        %v1349 = vshll.u32 %v1219, 16
        %v1351 = vrot.slane %v1349, 1
        %v1352 = vsel %vm1232, %v1347, %v1351
        %v1354 = vshrl.u32 %v1220, 16
        %v1356 = vshll.u32 %v1220, 16
        %v1358 = vrot.slane %v1356, 1
        %v1359 = vor.u32 %v1354, %v1358
        %v1361 = vshll.u32 %v1221, 16
        %v1363 = vrot.slane %v1361, 1
        %v1364 = vsel %vm1232, %v1359, %v1363
        %v1366 = vshrl.u32 %v1222, 16
        %v1368 = vshll.u32 %v1222, 16
        %v1370 = vrot.slane %v1368, 1
        %v1371 = vor.u32 %v1366, %v1370
        %v1373 = vshll.u32 %v1223, 16
        %v1375 = vrot.slane %v1373, 1
        %v1376 = vsel %vm1232, %v1371, %v1375
        %v1378 = vshrl.u32 %v1224, 16
        %v1380 = vshll.u32 %v1224, 16
        %v1382 = vrot.slane %v1380, 1
        %v1383 = vor.u32 %v1378, %v1382
        %v1385 = vshll.u32 %v1225, 16
        %v1387 = vrot.slane %v1385, 1
        %v1388 = vsel %vm1232, %v1383, %v1387
        %v1390 = vshrl.u32 %v1226, 16
        %v1392 = vshll.u32 %v1226, 16
        %v1394 = vrot.slane %v1392, 1
        %v1395 = vor.u32 %v1390, %v1394
        %v1397 = vshll.u32 %v1227, 16
        %v1399 = vrot.slane %v1397, 1
        %v1400 = vsel %vm1232, %v1395, %v1399
        %v1402 = vshrl.u32 %v1228, 16
        %v1404 = vshll.u32 %v1228, 16
        %v1406 = vrot.slane %v1404, 1
        %v1407 = vor.u32 %v1402, %v1406
        %v1409 = vshll.u32 %v1229, 16
        %v1411 = vrot.slane %v1409, 1
        %v1412 = vsel %vm1232, %v1407, %v1411
        %v1414 = vshrl.u32 %v1230, 16
        %v1416 = vshll.u32 %v1230, 16
        %v1418 = vrot.slane %v1416, 1
        %v1419 = vor.u32 %v1414, %v1418
        %v1421 = vshll.u32 %v1231, 16
        %v1423 = vrot.slane %v1421, 1
        %v1424 = vsel %vm1232, %v1419, %v1423
        %1425 = vrot.lane.b32.xlu0 %v1244, 4
        %v1426 = vpop.permute.xlu0 %1425
        %1427 = vrot.lane.b32.xlu0 %v1256, 4
        %v1428 = vpop.permute.xlu0 %1427
        %1429 = vrot.lane.b32.xlu0 %v1268, 4
        %v1430 = vpop.permute.xlu0 %1429
        %1431 = vrot.lane.b32.xlu0 %v1280, 4
        %v1432 = vpop.permute.xlu0 %1431
        %1433 = vrot.lane.b32.xlu0 %v1292, 4
        %v1434 = vpop.permute.xlu0 %1433
        %1435 = vrot.lane.b32.xlu0 %v1304, 4
        %v1436 = vpop.permute.xlu0 %1435
        %1437 = vrot.lane.b32.xlu0 %v1316, 4
        %v1438 = vpop.permute.xlu0 %1437
        %1439 = vrot.lane.b32.xlu0 %v1328, 4
        %v1440 = vpop.permute.xlu0 %1439
        %1441 = vrot.lane.b32.xlu0 %v1340, 4
        %v1442 = vpop.permute.xlu0 %1441
        %1443 = vrot.lane.b32.xlu0 %v1352, 4
        %v1444 = vpop.permute.xlu0 %1443
        %1445 = vrot.lane.b32.xlu0 %v1364, 4
        %v1446 = vpop.permute.xlu0 %1445
        %1447 = vrot.lane.b32.xlu0 %v1376, 4
        %v1448 = vpop.permute.xlu0 %1447
        %1449 = vrot.lane.b32.xlu0 %v1388, 4
        %v1450 = vpop.permute.xlu0 %1449
        %1451 = vrot.lane.b32.xlu0 %v1400, 4
        %v1452 = vpop.permute.xlu0 %1451
        %1453 = vrot.lane.b32.xlu0 %v1412, 4
        %v1454 = vpop.permute.xlu0 %1453
        %1455 = vrot.lane.b32.xlu0 %v1424, 4
        %v1456 = vpop.permute.xlu0 %1455
        %vm1473 = vcmask 64544
        %1474 = vst.msk [vmem:[#allocation3] sm:$0xff] %vm1473, %v1426
        %1475 = vst.msk [vmem:[#allocation3 + $0x8] sm:$0xff] %vm1473, %v1428
        %1476 = vst.msk [vmem:[#allocation3 + $0x10] sm:$0xff] %vm1473, %v1430
        %1477 = vst.msk [vmem:[#allocation3 + $0x18] sm:$0xff] %vm1473, %v1432
        %1478 = vst.msk [vmem:[#allocation3 + $0x20] sm:$0xff] %vm1473, %v1434
        %1479 = vst.msk [vmem:[#allocation3 + $0x28] sm:$0xff] %vm1473, %v1436
        %1480 = vst.msk [vmem:[#allocation3 + $0x30] sm:$0xff] %vm1473, %v1438
        %1481 = vst.msk [vmem:[#allocation3 + $0x38] sm:$0xff] %vm1473, %v1440
        %1482 = vst.msk [vmem:[#allocation3 + $0x40] sm:$0xff] %vm1473, %v1442
        %1483 = vst.msk [vmem:[#allocation3 + $0x48] sm:$0xff] %vm1473, %v1444
        %1484 = vst.msk [vmem:[#allocation3 + $0x50] sm:$0xff] %vm1473, %v1446
        %1485 = vst.msk [vmem:[#allocation3 + $0x58] sm:$0xff] %vm1473, %v1448
        %1486 = vst.msk [vmem:[#allocation3 + $0x60] sm:$0xff] %vm1473, %v1450
        %1487 = vst.msk [vmem:[#allocation3 + $0x68] sm:$0xff] %vm1473, %v1452
        %1488 = vst.msk [vmem:[#allocation3 + $0x70] sm:$0xff] %vm1473, %v1454
        %1489 = vst.msk [vmem:[#allocation3 + $0x78] sm:$0xff] %vm1473, %v1456
        %v1490 = vld [vmem:[#allocation2] sm:$0xe]
        %v1491 = vld [vmem:[#allocation2 + $0x4] sm:$0xf]
        %v1492 = vld [vmem:[#allocation2 + $0x8] sm:$0x1]
        %v1493 = vld [vmem:[#allocation2 + $0xc] sm:$0xe]
        %v1494 = vld [vmem:[#allocation2 + $0x10] sm:$0xf]
        %v1495 = vld [vmem:[#allocation2 + $0x14] sm:$0x1]
        %v1496 = vld [vmem:[#allocation2 + $0x18] sm:$0xe]
        %v1497 = vld [vmem:[#allocation2 + $0x1c] sm:$0xf]
        %v1498 = vld [vmem:[#allocation2 + $0x20] sm:$0x1]
        %v1499 = vld [vmem:[#allocation2 + $0x24] sm:$0xe]
        %v1500 = vld [vmem:[#allocation2 + $0x28] sm:$0xf]
        %v1501 = vld [vmem:[#allocation2 + $0x2c] sm:$0x1]
        %v1502 = vld [vmem:[#allocation2 + $0x30] sm:$0xe]
        %v1503 = vld [vmem:[#allocation2 + $0x34] sm:$0xf]
        %v1504 = vld [vmem:[#allocation2 + $0x38] sm:$0x1]
        %v1505 = vld [vmem:[#allocation2 + $0x3c] sm:$0xe]
        %v1506 = vld [vmem:[#allocation2 + $0x40] sm:$0xf]
        %v1507 = vld [vmem:[#allocation2 + $0x44] sm:$0x1]
        %v1508 = vld [vmem:[#allocation2 + $0x48] sm:$0xe]
        %v1509 = vld [vmem:[#allocation2 + $0x4c] sm:$0xf]
        %v1510 = vld [vmem:[#allocation2 + $0x50] sm:$0x1]
        %v1511 = vld [vmem:[#allocation2 + $0x54] sm:$0xe]
        %v1512 = vld [vmem:[#allocation2 + $0x58] sm:$0xf]
        %v1513 = vld [vmem:[#allocation2 + $0x5c] sm:$0x1]
        %v1514 = vld [vmem:[#allocation2 + $0x60] sm:$0xe]
        %v1515 = vld [vmem:[#allocation2 + $0x64] sm:$0xf]
        %v1516 = vld [vmem:[#allocation2 + $0x68] sm:$0x1]
        %v1517 = vld [vmem:[#allocation2 + $0x6c] sm:$0xe]
        %v1518 = vld [vmem:[#allocation2 + $0x70] sm:$0xf]
        %v1519 = vld [vmem:[#allocation2 + $0x74] sm:$0x1]
        %v1520 = vld [vmem:[#allocation2 + $0x78] sm:$0xe]
        %v1521 = vld [vmem:[#allocation2 + $0x7c] sm:$0xf]
        %v1522 = vld [vmem:[#allocation2 + $0x80] sm:$0x1]
        %v1523 = vld [vmem:[#allocation2 + $0x84] sm:$0xe]
        %v1524 = vld [vmem:[#allocation2 + $0x88] sm:$0xf]
        %v1525 = vld [vmem:[#allocation2 + $0x8c] sm:$0x1]
        %v1526 = vld [vmem:[#allocation2 + $0x90] sm:$0xe]
        %v1527 = vld [vmem:[#allocation2 + $0x94] sm:$0xf]
        %v1528 = vld [vmem:[#allocation2 + $0x98] sm:$0x1]
        %v1529 = vld [vmem:[#allocation2 + $0x9c] sm:$0xe]
        %v1530 = vld [vmem:[#allocation2 + $0xa0] sm:$0xf]
        %v1531 = vld [vmem:[#allocation2 + $0xa4] sm:$0x1]
        %v1532 = vld [vmem:[#allocation2 + $0xa8] sm:$0xe]
        %v1533 = vld [vmem:[#allocation2 + $0xac] sm:$0xf]
        %v1534 = vld [vmem:[#allocation2 + $0xb0] sm:$0x1]
        %v1535 = vld [vmem:[#allocation2 + $0xb4] sm:$0xe]
        %v1536 = vld [vmem:[#allocation2 + $0xb8] sm:$0xf]
        %v1537 = vld [vmem:[#allocation2 + $0xbc] sm:$0x1]
        %v1586 = vunpack.c.l.b16 %v1490
        %v1587 = vunpack.c.l.b16 %v1491
        %v1588 = vunpack.c.l.b16 %v1492
        %v1589 = vunpack.c.l.b16 %v1493
        %v1590 = vunpack.c.l.b16 %v1494
        %v1591 = vunpack.c.l.b16 %v1495
        %v1592 = vunpack.c.l.b16 %v1496
        %v1593 = vunpack.c.l.b16 %v1497
        %v1594 = vunpack.c.l.b16 %v1498
        %v1595 = vunpack.c.l.b16 %v1499
        %v1596 = vunpack.c.l.b16 %v1500
        %v1597 = vunpack.c.l.b16 %v1501
        %v1598 = vunpack.c.l.b16 %v1502
        %v1599 = vunpack.c.l.b16 %v1503
        %v1600 = vunpack.c.l.b16 %v1504
        %v1601 = vunpack.c.l.b16 %v1505
        %v1602 = vunpack.c.l.b16 %v1506
        %v1603 = vunpack.c.l.b16 %v1507
        %v1604 = vunpack.c.l.b16 %v1508
        %v1605 = vunpack.c.l.b16 %v1509
        %v1606 = vunpack.c.l.b16 %v1510
        %v1607 = vunpack.c.l.b16 %v1511
        %v1608 = vunpack.c.l.b16 %v1512
        %v1609 = vunpack.c.l.b16 %v1513
        %v1610 = vunpack.c.l.b16 %v1514
        %v1611 = vunpack.c.l.b16 %v1515
        %v1612 = vunpack.c.l.b16 %v1516
        %v1613 = vunpack.c.l.b16 %v1517
        %v1614 = vunpack.c.l.b16 %v1518
        %v1615 = vunpack.c.l.b16 %v1519
        %v1616 = vunpack.c.l.b16 %v1520
        %v1617 = vunpack.c.l.b16 %v1521
        %v1618 = vunpack.c.l.b16 %v1522
        %v1619 = vunpack.c.l.b16 %v1523
        %v1620 = vunpack.c.l.b16 %v1524
        %v1621 = vunpack.c.l.b16 %v1525
        %v1622 = vunpack.c.l.b16 %v1526
        %v1623 = vunpack.c.l.b16 %v1527
        %v1624 = vunpack.c.l.b16 %v1528
        %v1625 = vunpack.c.l.b16 %v1529
        %v1626 = vunpack.c.l.b16 %v1530
        %v1627 = vunpack.c.l.b16 %v1531
        %v1628 = vunpack.c.l.b16 %v1532
        %v1629 = vunpack.c.l.b16 %v1533
        %v1630 = vunpack.c.l.b16 %v1534
        %v1631 = vunpack.c.l.b16 %v1535
        %v1632 = vunpack.c.l.b16 %v1536
        %v1633 = vunpack.c.l.b16 %v1537
        %v1634 = vpack.c.b16 %v1587, %v1586
        %v1635 = vpack.c.b16 %v1588, %v1588
        %v1636 = vpack.c.b16 %v1590, %v1589
        %v1637 = vpack.c.b16 %v1591, %v1591
        %v1638 = vpack.c.b16 %v1593, %v1592
        %v1639 = vpack.c.b16 %v1594, %v1594
        %v1640 = vpack.c.b16 %v1596, %v1595
        %v1641 = vpack.c.b16 %v1597, %v1597
        %v1642 = vpack.c.b16 %v1599, %v1598
        %v1643 = vpack.c.b16 %v1600, %v1600
        %v1644 = vpack.c.b16 %v1602, %v1601
        %v1645 = vpack.c.b16 %v1603, %v1603
        %v1646 = vpack.c.b16 %v1605, %v1604
        %v1647 = vpack.c.b16 %v1606, %v1606
        %v1648 = vpack.c.b16 %v1608, %v1607
        %v1649 = vpack.c.b16 %v1609, %v1609
        %v1650 = vpack.c.b16 %v1611, %v1610
        %v1651 = vpack.c.b16 %v1612, %v1612
        %v1652 = vpack.c.b16 %v1614, %v1613
        %v1653 = vpack.c.b16 %v1615, %v1615
        %v1654 = vpack.c.b16 %v1617, %v1616
        %v1655 = vpack.c.b16 %v1618, %v1618
        %v1656 = vpack.c.b16 %v1620, %v1619
        %v1657 = vpack.c.b16 %v1621, %v1621
        %v1658 = vpack.c.b16 %v1623, %v1622
        %v1659 = vpack.c.b16 %v1624, %v1624
        %v1660 = vpack.c.b16 %v1626, %v1625
        %v1661 = vpack.c.b16 %v1627, %v1627
        %v1662 = vpack.c.b16 %v1629, %v1628
        %v1663 = vpack.c.b16 %v1630, %v1630
        %v1664 = vpack.c.b16 %v1632, %v1631
        %v1665 = vpack.c.b16 %v1633, %v1633
        %vm1666 = vcmask 1046528
        %v1667 = vrot.slane %v1634, 1
        %v1668 = vrot.slane %v1635, 1
        %v1669 = vsel %vm1666, %v1667, %v1668
        %v1670 = vrot.slane %v1636, 1
        %v1671 = vrot.slane %v1637, 1
        %v1672 = vsel %vm1666, %v1670, %v1671
        %v1673 = vrot.slane %v1638, 1
        %v1674 = vrot.slane %v1639, 1
        %v1675 = vsel %vm1666, %v1673, %v1674
        %v1676 = vrot.slane %v1640, 1
        %v1677 = vrot.slane %v1641, 1
        %v1678 = vsel %vm1666, %v1676, %v1677
        %v1679 = vrot.slane %v1642, 1
        %v1680 = vrot.slane %v1643, 1
        %v1681 = vsel %vm1666, %v1679, %v1680
        %v1682 = vrot.slane %v1644, 1
        %v1683 = vrot.slane %v1645, 1
        %v1684 = vsel %vm1666, %v1682, %v1683
        %v1685 = vrot.slane %v1646, 1
        %v1686 = vrot.slane %v1647, 1
        %v1687 = vsel %vm1666, %v1685, %v1686
        %v1688 = vrot.slane %v1648, 1
        %v1689 = vrot.slane %v1649, 1
        %v1690 = vsel %vm1666, %v1688, %v1689
        %v1691 = vrot.slane %v1650, 1
        %v1692 = vrot.slane %v1651, 1
        %v1693 = vsel %vm1666, %v1691, %v1692
        %v1694 = vrot.slane %v1652, 1
        %v1695 = vrot.slane %v1653, 1
        %v1696 = vsel %vm1666, %v1694, %v1695
        %v1697 = vrot.slane %v1654, 1
        %v1698 = vrot.slane %v1655, 1
        %v1699 = vsel %vm1666, %v1697, %v1698
        %v1700 = vrot.slane %v1656, 1
        %v1701 = vrot.slane %v1657, 1
        %v1702 = vsel %vm1666, %v1700, %v1701
        %v1703 = vrot.slane %v1658, 1
        %v1704 = vrot.slane %v1659, 1
        %v1705 = vsel %vm1666, %v1703, %v1704
        %v1706 = vrot.slane %v1660, 1
        %v1707 = vrot.slane %v1661, 1
        %v1708 = vsel %vm1666, %v1706, %v1707
        %v1709 = vrot.slane %v1662, 1
        %v1710 = vrot.slane %v1663, 1
        %v1711 = vsel %vm1666, %v1709, %v1710
        %v1712 = vrot.slane %v1664, 1
        %v1713 = vrot.slane %v1665, 1
        %v1714 = vsel %vm1666, %v1712, %v1713
        %1715 = vrot.lane.b32.xlu0 %v1669, 8
        %v1716 = vpop.permute.xlu0 %1715
        %1717 = vrot.lane.b32.xlu0 %v1672, 8
        %v1718 = vpop.permute.xlu0 %1717
        %1719 = vrot.lane.b32.xlu0 %v1675, 8
        %v1720 = vpop.permute.xlu0 %1719
        %1721 = vrot.lane.b32.xlu0 %v1678, 8
        %v1722 = vpop.permute.xlu0 %1721
        %1723 = vrot.lane.b32.xlu0 %v1681, 8
        %v1724 = vpop.permute.xlu0 %1723
        %1725 = vrot.lane.b32.xlu0 %v1684, 8
        %v1726 = vpop.permute.xlu0 %1725
        %1727 = vrot.lane.b32.xlu0 %v1687, 8
        %v1728 = vpop.permute.xlu0 %1727
        %1729 = vrot.lane.b32.xlu0 %v1690, 8
        %v1730 = vpop.permute.xlu0 %1729
        %1731 = vrot.lane.b32.xlu0 %v1693, 8
        %v1732 = vpop.permute.xlu0 %1731
        %1733 = vrot.lane.b32.xlu0 %v1696, 8
        %v1734 = vpop.permute.xlu0 %1733
        %1735 = vrot.lane.b32.xlu0 %v1699, 8
        %v1736 = vpop.permute.xlu0 %1735
        %1737 = vrot.lane.b32.xlu0 %v1702, 8
        %v1738 = vpop.permute.xlu0 %1737
        %1739 = vrot.lane.b32.xlu0 %v1705, 8
        %v1740 = vpop.permute.xlu0 %1739
        %1741 = vrot.lane.b32.xlu0 %v1708, 8
        %v1742 = vpop.permute.xlu0 %1741
        %1743 = vrot.lane.b32.xlu0 %v1711, 8
        %v1744 = vpop.permute.xlu0 %1743
        %1745 = vrot.lane.b32.xlu0 %v1714, 8
        %v1746 = vpop.permute.xlu0 %1745
        %vm1763 = vcmask 97344
        %1764 = vst.msk [vmem:[#allocation3] sm:$0xff] %vm1763, %v1716
        %1765 = vst.msk [vmem:[#allocation3 + $0x8] sm:$0xff] %vm1763, %v1718
        %1766 = vst.msk [vmem:[#allocation3 + $0x10] sm:$0xff] %vm1763, %v1720
        %1767 = vst.msk [vmem:[#allocation3 + $0x18] sm:$0xff] %vm1763, %v1722
        %1768 = vst.msk [vmem:[#allocation3 + $0x20] sm:$0xff] %vm1763, %v1724
        %1769 = vst.msk [vmem:[#allocation3 + $0x28] sm:$0xff] %vm1763, %v1726
        %1770 = vst.msk [vmem:[#allocation3 + $0x30] sm:$0xff] %vm1763, %v1728
        %1771 = vst.msk [vmem:[#allocation3 + $0x38] sm:$0xff] %vm1763, %v1730
        %1772 = vst.msk [vmem:[#allocation3 + $0x40] sm:$0xff] %vm1763, %v1732
        %1773 = vst.msk [vmem:[#allocation3 + $0x48] sm:$0xff] %vm1763, %v1734
        %1774 = vst.msk [vmem:[#allocation3 + $0x50] sm:$0xff] %vm1763, %v1736
        %1775 = vst.msk [vmem:[#allocation3 + $0x58] sm:$0xff] %vm1763, %v1738
        %1776 = vst.msk [vmem:[#allocation3 + $0x60] sm:$0xff] %vm1763, %v1740
        %1777 = vst.msk [vmem:[#allocation3 + $0x68] sm:$0xff] %vm1763, %v1742
        %1778 = vst.msk [vmem:[#allocation3 + $0x70] sm:$0xff] %vm1763, %v1744
        %1779 = vst.msk [vmem:[#allocation3 + $0x78] sm:$0xff] %vm1763, %v1746
        %v1780 = vld [vmem:[%s796] sm:$0xf]
        %v1781 = vld [vmem:[%s796 + $0x4] sm:$0xf]
        %v1782 = vld [vmem:[%s796 + $0xc] sm:$0xf]
        %v1783 = vld [vmem:[%s796 + $0x10] sm:$0xf]
        %v1784 = vld [vmem:[%s796 + $0x18] sm:$0xf]
        %v1785 = vld [vmem:[%s796 + $0x1c] sm:$0xf]
        %v1786 = vld [vmem:[%s796 + $0x24] sm:$0xf]
        %v1787 = vld [vmem:[%s796 + $0x28] sm:$0xf]
        %v1788 = vld [vmem:[%s796 + $0x30] sm:$0xf]
        %v1789 = vld [vmem:[%s796 + $0x34] sm:$0xf]
        %v1790 = vld [vmem:[%s796 + $0x3c] sm:$0xf]
        %v1791 = vld [vmem:[%s796 + $0x40] sm:$0xf]
        %v1792 = vld [vmem:[%s796 + $0x48] sm:$0xf]
        %v1793 = vld [vmem:[%s796 + $0x4c] sm:$0xf]
        %v1794 = vld [vmem:[%s796 + $0x54] sm:$0xf]
        %v1795 = vld [vmem:[%s796 + $0x58] sm:$0xf]
        %v1796 = vld [vmem:[%s796 + $0x60] sm:$0xf]
        %v1797 = vld [vmem:[%s796 + $0x64] sm:$0xf]
        %v1798 = vld [vmem:[%s796 + $0x6c] sm:$0xf]
        %v1799 = vld [vmem:[%s796 + $0x70] sm:$0xf]
        %v1800 = vld [vmem:[%s796 + $0x78] sm:$0xf]
        %v1801 = vld [vmem:[%s796 + $0x7c] sm:$0xf]
        %v1802 = vld [vmem:[%s796 + $0x84] sm:$0xf]
        %v1803 = vld [vmem:[%s796 + $0x88] sm:$0xf]
        %v1804 = vld [vmem:[%s796 + $0x90] sm:$0xf]
        %v1805 = vld [vmem:[%s796 + $0x94] sm:$0xf]
        %v1806 = vld [vmem:[%s796 + $0x9c] sm:$0xf]
        %v1807 = vld [vmem:[%s796 + $0xa0] sm:$0xf]
        %v1808 = vld [vmem:[%s796 + $0xa8] sm:$0xf]
        %v1809 = vld [vmem:[%s796 + $0xac] sm:$0xf]
        %v1810 = vld [vmem:[%s796 + $0xb4] sm:$0xf]
        %v1811 = vld [vmem:[%s796 + $0xb8] sm:$0xf]
        %v1844 = vunpack.c.l.b16 %v1780
        %v1845 = vunpack.c.l.b16 %v1781
        %v1846 = vunpack.c.l.b16 %v1782
        %v1847 = vunpack.c.l.b16 %v1783
        %v1848 = vunpack.c.l.b16 %v1784
        %v1849 = vunpack.c.l.b16 %v1785
        %v1850 = vunpack.c.l.b16 %v1786
        %v1851 = vunpack.c.l.b16 %v1787
        %v1852 = vunpack.c.l.b16 %v1788
        %v1853 = vunpack.c.l.b16 %v1789
        %v1854 = vunpack.c.l.b16 %v1790
        %v1855 = vunpack.c.l.b16 %v1791
        %v1856 = vunpack.c.l.b16 %v1792
        %v1857 = vunpack.c.l.b16 %v1793
        %v1858 = vunpack.c.l.b16 %v1794
        %v1859 = vunpack.c.l.b16 %v1795
        %v1860 = vunpack.c.l.b16 %v1796
        %v1861 = vunpack.c.l.b16 %v1797
        %v1862 = vunpack.c.l.b16 %v1798
        %v1863 = vunpack.c.l.b16 %v1799
        %v1864 = vunpack.c.l.b16 %v1800
        %v1865 = vunpack.c.l.b16 %v1801
        %v1866 = vunpack.c.l.b16 %v1802
        %v1867 = vunpack.c.l.b16 %v1803
        %v1868 = vunpack.c.l.b16 %v1804
        %v1869 = vunpack.c.l.b16 %v1805
        %v1870 = vunpack.c.l.b16 %v1806
        %v1871 = vunpack.c.l.b16 %v1807
        %v1872 = vunpack.c.l.b16 %v1808
        %v1873 = vunpack.c.l.b16 %v1809
        %v1874 = vunpack.c.l.b16 %v1810
        %v1875 = vunpack.c.l.b16 %v1811
        %v1876 = vpack.c.b16 %v1845, %v1844
        %v1877 = vpack.c.b16 %v1847, %v1846
        %v1878 = vpack.c.b16 %v1849, %v1848
        %v1879 = vpack.c.b16 %v1851, %v1850
        %v1880 = vpack.c.b16 %v1853, %v1852
        %v1881 = vpack.c.b16 %v1855, %v1854
        %v1882 = vpack.c.b16 %v1857, %v1856
        %v1883 = vpack.c.b16 %v1859, %v1858
        %v1884 = vpack.c.b16 %v1861, %v1860
        %v1885 = vpack.c.b16 %v1863, %v1862
        %v1886 = vpack.c.b16 %v1865, %v1864
        %v1887 = vpack.c.b16 %v1867, %v1866
        %v1888 = vpack.c.b16 %v1869, %v1868
        %v1889 = vpack.c.b16 %v1871, %v1870
        %v1890 = vpack.c.b16 %v1873, %v1872
        %v1891 = vpack.c.b16 %v1875, %v1874
        %1892 = vrot.lane.b32.xlu0 %v1876, 12
        %v1893 = vpop.permute.xlu0 %1892
        %1894 = vrot.lane.b32.xlu0 %v1877, 12
        %v1895 = vpop.permute.xlu0 %1894
        %1896 = vrot.lane.b32.xlu0 %v1878, 12
        %v1897 = vpop.permute.xlu0 %1896
        %1898 = vrot.lane.b32.xlu0 %v1879, 12
        %v1899 = vpop.permute.xlu0 %1898
        %1900 = vrot.lane.b32.xlu0 %v1880, 12
        %v1901 = vpop.permute.xlu0 %1900
        %1902 = vrot.lane.b32.xlu0 %v1881, 12
        %v1903 = vpop.permute.xlu0 %1902
        %1904 = vrot.lane.b32.xlu0 %v1882, 12
        %v1905 = vpop.permute.xlu0 %1904
        %1906 = vrot.lane.b32.xlu0 %v1883, 12
        %v1907 = vpop.permute.xlu0 %1906
        %1908 = vrot.lane.b32.xlu0 %v1884, 12
        %v1909 = vpop.permute.xlu0 %1908
        %1910 = vrot.lane.b32.xlu0 %v1885, 12
        %v1911 = vpop.permute.xlu0 %1910
        %1912 = vrot.lane.b32.xlu0 %v1886, 12
        %v1913 = vpop.permute.xlu0 %1912
        %1914 = vrot.lane.b32.xlu0 %v1887, 12
        %v1915 = vpop.permute.xlu0 %1914
        %1916 = vrot.lane.b32.xlu0 %v1888, 12
        %v1917 = vpop.permute.xlu0 %1916
        %1918 = vrot.lane.b32.xlu0 %v1889, 12
        %v1919 = vpop.permute.xlu0 %1918
        %1920 = vrot.lane.b32.xlu0 %v1890, 12
        %v1921 = vpop.permute.xlu0 %1920
        %1922 = vrot.lane.b32.xlu0 %v1891, 12
        %v1923 = vpop.permute.xlu0 %1922
        %vm1940 = vcmask 130144
        %1941 = vst.msk [vmem:[#allocation3] sm:$0xff] %vm1940, %v1893
        %1942 = vst.msk [vmem:[#allocation3 + $0x8] sm:$0xff] %vm1940, %v1895
        %1943 = vst.msk [vmem:[#allocation3 + $0x10] sm:$0xff] %vm1940, %v1897
        %1944 = vst.msk [vmem:[#allocation3 + $0x18] sm:$0xff] %vm1940, %v1899
        %1945 = vst.msk [vmem:[#allocation3 + $0x20] sm:$0xff] %vm1940, %v1901
        %1946 = vst.msk [vmem:[#allocation3 + $0x28] sm:$0xff] %vm1940, %v1903
        %1947 = vst.msk [vmem:[#allocation3 + $0x30] sm:$0xff] %vm1940, %v1905
        %1948 = vst.msk [vmem:[#allocation3 + $0x38] sm:$0xff] %vm1940, %v1907
        %1949 = vst.msk [vmem:[#allocation3 + $0x40] sm:$0xff] %vm1940, %v1909
        %1950 = vst.msk [vmem:[#allocation3 + $0x48] sm:$0xff] %vm1940, %v1911
        %1951 = vst.msk [vmem:[#allocation3 + $0x50] sm:$0xff] %vm1940, %v1913
        %1952 = vst.msk [vmem:[#allocation3 + $0x58] sm:$0xff] %vm1940, %v1915
        %1953 = vst.msk [vmem:[#allocation3 + $0x60] sm:$0xff] %vm1940, %v1917
        %1954 = vst.msk [vmem:[#allocation3 + $0x68] sm:$0xff] %vm1940, %v1919
        %1955 = vst.msk [vmem:[#allocation3 + $0x70] sm:$0xff] %vm1940, %v1921
        %1956 = vst.msk [vmem:[#allocation3 + $0x78] sm:$0xff] %vm1940, %v1923
        %v1957 = vld [vmem:[%s796] sm:$0xf]
        %v1958 = vld [vmem:[%s796 + $0x4] sm:$0xf]
        %v1959 = vld [vmem:[%s796 + $0x8] sm:$0x1]
        %v1960 = vld [vmem:[%s796 + $0xc] sm:$0xf]
        %v1961 = vld [vmem:[%s796 + $0x10] sm:$0xf]
        %v1962 = vld [vmem:[%s796 + $0x14] sm:$0x1]
        %v1963 = vld [vmem:[%s796 + $0x18] sm:$0xf]
        %v1964 = vld [vmem:[%s796 + $0x1c] sm:$0xf]
        %v1965 = vld [vmem:[%s796 + $0x20] sm:$0x1]
        %v1966 = vld [vmem:[%s796 + $0x24] sm:$0xf]
        %v1967 = vld [vmem:[%s796 + $0x28] sm:$0xf]
        %v1968 = vld [vmem:[%s796 + $0x2c] sm:$0x1]
        %v1969 = vld [vmem:[%s796 + $0x30] sm:$0xf]
        %v1970 = vld [vmem:[%s796 + $0x34] sm:$0xf]
        %v1971 = vld [vmem:[%s796 + $0x38] sm:$0x1]
        %v1972 = vld [vmem:[%s796 + $0x3c] sm:$0xf]
        %v1973 = vld [vmem:[%s796 + $0x40] sm:$0xf]
        %v1974 = vld [vmem:[%s796 + $0x44] sm:$0x1]
        %v1975 = vld [vmem:[%s796 + $0x48] sm:$0xf]
        %v1976 = vld [vmem:[%s796 + $0x4c] sm:$0xf]
        %v1977 = vld [vmem:[%s796 + $0x50] sm:$0x1]
        %v1978 = vld [vmem:[%s796 + $0x54] sm:$0xf]
        %v1979 = vld [vmem:[%s796 + $0x58] sm:$0xf]
        %v1980 = vld [vmem:[%s796 + $0x5c] sm:$0x1]
        %v1981 = vld [vmem:[%s796 + $0x60] sm:$0xf]
        %v1982 = vld [vmem:[%s796 + $0x64] sm:$0xf]
        %v1983 = vld [vmem:[%s796 + $0x68] sm:$0x1]
        %v1984 = vld [vmem:[%s796 + $0x6c] sm:$0xf]
        %v1985 = vld [vmem:[%s796 + $0x70] sm:$0xf]
        %v1986 = vld [vmem:[%s796 + $0x74] sm:$0x1]
        %v1987 = vld [vmem:[%s796 + $0x78] sm:$0xf]
        %v1988 = vld [vmem:[%s796 + $0x7c] sm:$0xf]
        %v1989 = vld [vmem:[%s796 + $0x80] sm:$0x1]
        %v1990 = vld [vmem:[%s796 + $0x84] sm:$0xf]
        %v1991 = vld [vmem:[%s796 + $0x88] sm:$0xf]
        %v1992 = vld [vmem:[%s796 + $0x8c] sm:$0x1]
        %v1993 = vld [vmem:[%s796 + $0x90] sm:$0xf]
        %v1994 = vld [vmem:[%s796 + $0x94] sm:$0xf]
        %v1995 = vld [vmem:[%s796 + $0x98] sm:$0x1]
        %v1996 = vld [vmem:[%s796 + $0x9c] sm:$0xf]
        %v1997 = vld [vmem:[%s796 + $0xa0] sm:$0xf]
        %v1998 = vld [vmem:[%s796 + $0xa4] sm:$0x1]
        %v1999 = vld [vmem:[%s796 + $0xa8] sm:$0xf]
        %v2000 = vld [vmem:[%s796 + $0xac] sm:$0xf]
        %v2001 = vld [vmem:[%s796 + $0xb0] sm:$0x1]
        %v2002 = vld [vmem:[%s796 + $0xb4] sm:$0xf]
        %v2003 = vld [vmem:[%s796 + $0xb8] sm:$0xf]
        %v2004 = vld [vmem:[%s796 + $0xbc] sm:$0x1]
        %v2053 = vunpack.c.l.b16 %v1957
        %v2054 = vunpack.c.l.b16 %v1958
        %v2055 = vunpack.c.l.b16 %v1959
        %v2056 = vunpack.c.l.b16 %v1960
        %v2057 = vunpack.c.l.b16 %v1961
        %v2058 = vunpack.c.l.b16 %v1962
        %v2059 = vunpack.c.l.b16 %v1963
        %v2060 = vunpack.c.l.b16 %v1964
        %v2061 = vunpack.c.l.b16 %v1965
        %v2062 = vunpack.c.l.b16 %v1966
        %v2063 = vunpack.c.l.b16 %v1967
        %v2064 = vunpack.c.l.b16 %v1968
        %v2065 = vunpack.c.l.b16 %v1969
        %v2066 = vunpack.c.l.b16 %v1970
        %v2067 = vunpack.c.l.b16 %v1971
        %v2068 = vunpack.c.l.b16 %v1972
        %v2069 = vunpack.c.l.b16 %v1973
        %v2070 = vunpack.c.l.b16 %v1974
        %v2071 = vunpack.c.l.b16 %v1975
        %v2072 = vunpack.c.l.b16 %v1976
        %v2073 = vunpack.c.l.b16 %v1977
        %v2074 = vunpack.c.l.b16 %v1978
        %v2075 = vunpack.c.l.b16 %v1979
        %v2076 = vunpack.c.l.b16 %v1980
        %v2077 = vunpack.c.l.b16 %v1981
        %v2078 = vunpack.c.l.b16 %v1982
        %v2079 = vunpack.c.l.b16 %v1983
        %v2080 = vunpack.c.l.b16 %v1984
        %v2081 = vunpack.c.l.b16 %v1985
        %v2082 = vunpack.c.l.b16 %v1986
        %v2083 = vunpack.c.l.b16 %v1987
        %v2084 = vunpack.c.l.b16 %v1988
        %v2085 = vunpack.c.l.b16 %v1989
        %v2086 = vunpack.c.l.b16 %v1990
        %v2087 = vunpack.c.l.b16 %v1991
        %v2088 = vunpack.c.l.b16 %v1992
        %v2089 = vunpack.c.l.b16 %v1993
        %v2090 = vunpack.c.l.b16 %v1994
        %v2091 = vunpack.c.l.b16 %v1995
        %v2092 = vunpack.c.l.b16 %v1996
        %v2093 = vunpack.c.l.b16 %v1997
        %v2094 = vunpack.c.l.b16 %v1998
        %v2095 = vunpack.c.l.b16 %v1999
        %v2096 = vunpack.c.l.b16 %v2000
        %v2097 = vunpack.c.l.b16 %v2001
        %v2098 = vunpack.c.l.b16 %v2002
        %v2099 = vunpack.c.l.b16 %v2003
        %v2100 = vunpack.c.l.b16 %v2004
        %v2101 = vpack.c.b16 %v2054, %v2053
        %v2102 = vpack.c.b16 %v2055, %v2055
        %v2103 = vpack.c.b16 %v2057, %v2056
        %v2104 = vpack.c.b16 %v2058, %v2058
        %v2105 = vpack.c.b16 %v2060, %v2059
        %v2106 = vpack.c.b16 %v2061, %v2061
        %v2107 = vpack.c.b16 %v2063, %v2062
        %v2108 = vpack.c.b16 %v2064, %v2064
        %v2109 = vpack.c.b16 %v2066, %v2065
        %v2110 = vpack.c.b16 %v2067, %v2067
        %v2111 = vpack.c.b16 %v2069, %v2068
        %v2112 = vpack.c.b16 %v2070, %v2070
        %v2113 = vpack.c.b16 %v2072, %v2071
        %v2114 = vpack.c.b16 %v2073, %v2073
        %v2115 = vpack.c.b16 %v2075, %v2074
        %v2116 = vpack.c.b16 %v2076, %v2076
        %v2117 = vpack.c.b16 %v2078, %v2077
        %v2118 = vpack.c.b16 %v2079, %v2079
        %v2119 = vpack.c.b16 %v2081, %v2080
        %v2120 = vpack.c.b16 %v2082, %v2082
        %v2121 = vpack.c.b16 %v2084, %v2083
        %v2122 = vpack.c.b16 %v2085, %v2085
        %v2123 = vpack.c.b16 %v2087, %v2086
        %v2124 = vpack.c.b16 %v2088, %v2088
        %v2125 = vpack.c.b16 %v2090, %v2089
        %v2126 = vpack.c.b16 %v2091, %v2091
        %v2127 = vpack.c.b16 %v2093, %v2092
        %v2128 = vpack.c.b16 %v2094, %v2094
        %v2129 = vpack.c.b16 %v2096, %v2095
        %v2130 = vpack.c.b16 %v2097, %v2097
        %v2131 = vpack.c.b16 %v2099, %v2098
        %v2132 = vpack.c.b16 %v2100, %v2100
        %v2134 = vshrl.u32 %v2101, 16
        %v2136 = vshll.u32 %v2101, 16
        %v2138 = vrot.slane %v2136, 1
        %v2139 = vor.u32 %v2134, %v2138
        %v2141 = vshll.u32 %v2102, 16
        %v2143 = vrot.slane %v2141, 1
        %v2144 = vsel %vm1232, %v2139, %v2143
        %v2146 = vshrl.u32 %v2103, 16
        %v2148 = vshll.u32 %v2103, 16
        %v2150 = vrot.slane %v2148, 1
        %v2151 = vor.u32 %v2146, %v2150
        %v2153 = vshll.u32 %v2104, 16
        %v2155 = vrot.slane %v2153, 1
        %v2156 = vsel %vm1232, %v2151, %v2155
        %v2158 = vshrl.u32 %v2105, 16
        %v2160 = vshll.u32 %v2105, 16
        %v2162 = vrot.slane %v2160, 1
        %v2163 = vor.u32 %v2158, %v2162
        %v2165 = vshll.u32 %v2106, 16
        %v2167 = vrot.slane %v2165, 1
        %v2168 = vsel %vm1232, %v2163, %v2167
        %v2170 = vshrl.u32 %v2107, 16
        %v2172 = vshll.u32 %v2107, 16
        %v2174 = vrot.slane %v2172, 1
        %v2175 = vor.u32 %v2170, %v2174
        %v2177 = vshll.u32 %v2108, 16
        %v2179 = vrot.slane %v2177, 1
        %v2180 = vsel %vm1232, %v2175, %v2179
        %v2182 = vshrl.u32 %v2109, 16
        %v2184 = vshll.u32 %v2109, 16
        %v2186 = vrot.slane %v2184, 1
        %v2187 = vor.u32 %v2182, %v2186
        %v2189 = vshll.u32 %v2110, 16
        %v2191 = vrot.slane %v2189, 1
        %v2192 = vsel %vm1232, %v2187, %v2191
        %v2194 = vshrl.u32 %v2111, 16
        %v2196 = vshll.u32 %v2111, 16
        %v2198 = vrot.slane %v2196, 1
        %v2199 = vor.u32 %v2194, %v2198
        %v2201 = vshll.u32 %v2112, 16
        %v2203 = vrot.slane %v2201, 1
        %v2204 = vsel %vm1232, %v2199, %v2203
        %v2206 = vshrl.u32 %v2113, 16
        %v2208 = vshll.u32 %v2113, 16
        %v2210 = vrot.slane %v2208, 1
        %v2211 = vor.u32 %v2206, %v2210
        %v2213 = vshll.u32 %v2114, 16
        %v2215 = vrot.slane %v2213, 1
        %v2216 = vsel %vm1232, %v2211, %v2215
        %v2218 = vshrl.u32 %v2115, 16
        %v2220 = vshll.u32 %v2115, 16
        %v2222 = vrot.slane %v2220, 1
        %v2223 = vor.u32 %v2218, %v2222
        %v2225 = vshll.u32 %v2116, 16
        %v2227 = vrot.slane %v2225, 1
        %v2228 = vsel %vm1232, %v2223, %v2227
        %v2230 = vshrl.u32 %v2117, 16
        %v2232 = vshll.u32 %v2117, 16
        %v2234 = vrot.slane %v2232, 1
        %v2235 = vor.u32 %v2230, %v2234
        %v2237 = vshll.u32 %v2118, 16
        %v2239 = vrot.slane %v2237, 1
        %v2240 = vsel %vm1232, %v2235, %v2239
        %v2242 = vshrl.u32 %v2119, 16
        %v2244 = vshll.u32 %v2119, 16
        %v2246 = vrot.slane %v2244, 1
        %v2247 = vor.u32 %v2242, %v2246
        %v2249 = vshll.u32 %v2120, 16
        %v2251 = vrot.slane %v2249, 1
        %v2252 = vsel %vm1232, %v2247, %v2251
        %v2254 = vshrl.u32 %v2121, 16
        %v2256 = vshll.u32 %v2121, 16
        %v2258 = vrot.slane %v2256, 1
        %v2259 = vor.u32 %v2254, %v2258
        %v2261 = vshll.u32 %v2122, 16
        %v2263 = vrot.slane %v2261, 1
        %v2264 = vsel %vm1232, %v2259, %v2263
        %v2266 = vshrl.u32 %v2123, 16
        %v2268 = vshll.u32 %v2123, 16
        %v2270 = vrot.slane %v2268, 1
        %v2271 = vor.u32 %v2266, %v2270
        %v2273 = vshll.u32 %v2124, 16
        %v2275 = vrot.slane %v2273, 1
        %v2276 = vsel %vm1232, %v2271, %v2275
        %v2278 = vshrl.u32 %v2125, 16
        %v2280 = vshll.u32 %v2125, 16
        %v2282 = vrot.slane %v2280, 1
        %v2283 = vor.u32 %v2278, %v2282
        %v2285 = vshll.u32 %v2126, 16
        %v2287 = vrot.slane %v2285, 1
        %v2288 = vsel %vm1232, %v2283, %v2287
        %v2290 = vshrl.u32 %v2127, 16
        %v2292 = vshll.u32 %v2127, 16
        %v2294 = vrot.slane %v2292, 1
        %v2295 = vor.u32 %v2290, %v2294
        %v2297 = vshll.u32 %v2128, 16
        %v2299 = vrot.slane %v2297, 1
        %v2300 = vsel %vm1232, %v2295, %v2299
        %v2302 = vshrl.u32 %v2129, 16
        %v2304 = vshll.u32 %v2129, 16
        %v2306 = vrot.slane %v2304, 1
        %v2307 = vor.u32 %v2302, %v2306
        %v2309 = vshll.u32 %v2130, 16
        %v2311 = vrot.slane %v2309, 1
        %v2312 = vsel %vm1232, %v2307, %v2311
        %v2314 = vshrl.u32 %v2131, 16
        %v2316 = vshll.u32 %v2131, 16
        %v2318 = vrot.slane %v2316, 1
        %v2319 = vor.u32 %v2314, %v2318
        %v2321 = vshll.u32 %v2132, 16
        %v2323 = vrot.slane %v2321, 1
        %v2324 = vsel %vm1232, %v2319, %v2323
        %2325 = vrot.lane.b32.xlu0 %v2144, 16
        %v2326 = vpop.permute.xlu0 %2325
        %2327 = vrot.lane.b32.xlu0 %v2156, 16
        %v2328 = vpop.permute.xlu0 %2327
        %2329 = vrot.lane.b32.xlu0 %v2168, 16
        %v2330 = vpop.permute.xlu0 %2329
        %2331 = vrot.lane.b32.xlu0 %v2180, 16
        %v2332 = vpop.permute.xlu0 %2331
        %2333 = vrot.lane.b32.xlu0 %v2192, 16
        %v2334 = vpop.permute.xlu0 %2333
        %2335 = vrot.lane.b32.xlu0 %v2204, 16
        %v2336 = vpop.permute.xlu0 %2335
        %2337 = vrot.lane.b32.xlu0 %v2216, 16
        %v2338 = vpop.permute.xlu0 %2337
        %2339 = vrot.lane.b32.xlu0 %v2228, 16
        %v2340 = vpop.permute.xlu0 %2339
        %2341 = vrot.lane.b32.xlu0 %v2240, 16
        %v2342 = vpop.permute.xlu0 %2341
        %2343 = vrot.lane.b32.xlu0 %v2252, 16
        %v2344 = vpop.permute.xlu0 %2343
        %2345 = vrot.lane.b32.xlu0 %v2264, 16
        %v2346 = vpop.permute.xlu0 %2345
        %2347 = vrot.lane.b32.xlu0 %v2276, 16
        %v2348 = vpop.permute.xlu0 %2347
        %2349 = vrot.lane.b32.xlu0 %v2288, 16
        %v2350 = vpop.permute.xlu0 %2349
        %2351 = vrot.lane.b32.xlu0 %v2300, 16
        %v2352 = vpop.permute.xlu0 %2351
        %2353 = vrot.lane.b32.xlu0 %v2312, 16
        %v2354 = vpop.permute.xlu0 %2353
        %2355 = vrot.lane.b32.xlu0 %v2324, 16
        %v2356 = vpop.permute.xlu0 %2355
        %vm2373 = vcmask 162944
        %2374 = vst.msk [vmem:[#allocation3] sm:$0xff] %vm2373, %v2326
        %2375 = vst.msk [vmem:[#allocation3 + $0x8] sm:$0xff] %vm2373, %v2328
        %2376 = vst.msk [vmem:[#allocation3 + $0x10] sm:$0xff] %vm2373, %v2330
        %2377 = vst.msk [vmem:[#allocation3 + $0x18] sm:$0xff] %vm2373, %v2332
        %2378 = vst.msk [vmem:[#allocation3 + $0x20] sm:$0xff] %vm2373, %v2334
        %2379 = vst.msk [vmem:[#allocation3 + $0x28] sm:$0xff] %vm2373, %v2336
        %2380 = vst.msk [vmem:[#allocation3 + $0x30] sm:$0xff] %vm2373, %v2338
        %2381 = vst.msk [vmem:[#allocation3 + $0x38] sm:$0xff] %vm2373, %v2340
        %2382 = vst.msk [vmem:[#allocation3 + $0x40] sm:$0xff] %vm2373, %v2342
        %2383 = vst.msk [vmem:[#allocation3 + $0x48] sm:$0xff] %vm2373, %v2344
        %2384 = vst.msk [vmem:[#allocation3 + $0x50] sm:$0xff] %vm2373, %v2346
        %2385 = vst.msk [vmem:[#allocation3 + $0x58] sm:$0xff] %vm2373, %v2348
        %2386 = vst.msk [vmem:[#allocation3 + $0x60] sm:$0xff] %vm2373, %v2350
        %2387 = vst.msk [vmem:[#allocation3 + $0x68] sm:$0xff] %vm2373, %v2352
        %2388 = vst.msk [vmem:[#allocation3 + $0x70] sm:$0xff] %vm2373, %v2354
        %2389 = vst.msk [vmem:[#allocation3 + $0x78] sm:$0xff] %vm2373, %v2356
        %v2390 = vld [vmem:[%s796] sm:$0xe]
        %v2391 = vld [vmem:[%s796 + $0x4] sm:$0xf]
        %v2392 = vld [vmem:[%s796 + $0x8] sm:$0x1]
        %v2393 = vld [vmem:[%s796 + $0xc] sm:$0xe]
        %v2394 = vld [vmem:[%s796 + $0x10] sm:$0xf]
        %v2395 = vld [vmem:[%s796 + $0x14] sm:$0x1]
        %v2396 = vld [vmem:[%s796 + $0x18] sm:$0xe]
        %v2397 = vld [vmem:[%s796 + $0x1c] sm:$0xf]
        %v2398 = vld [vmem:[%s796 + $0x20] sm:$0x1]
        %v2399 = vld [vmem:[%s796 + $0x24] sm:$0xe]
        %v2400 = vld [vmem:[%s796 + $0x28] sm:$0xf]
        %v2401 = vld [vmem:[%s796 + $0x2c] sm:$0x1]
        %v2402 = vld [vmem:[%s796 + $0x30] sm:$0xe]
        %v2403 = vld [vmem:[%s796 + $0x34] sm:$0xf]
        %v2404 = vld [vmem:[%s796 + $0x38] sm:$0x1]
        %v2405 = vld [vmem:[%s796 + $0x3c] sm:$0xe]
        %v2406 = vld [vmem:[%s796 + $0x40] sm:$0xf]
        %v2407 = vld [vmem:[%s796 + $0x44] sm:$0x1]
        %v2408 = vld [vmem:[%s796 + $0x48] sm:$0xe]
        %v2409 = vld [vmem:[%s796 + $0x4c] sm:$0xf]
        %v2410 = vld [vmem:[%s796 + $0x50] sm:$0x1]
        %v2411 = vld [vmem:[%s796 + $0x54] sm:$0xe]
        %v2412 = vld [vmem:[%s796 + $0x58] sm:$0xf]
        %v2413 = vld [vmem:[%s796 + $0x5c] sm:$0x1]
        %v2414 = vld [vmem:[%s796 + $0x60] sm:$0xe]
        %v2415 = vld [vmem:[%s796 + $0x64] sm:$0xf]
        %v2416 = vld [vmem:[%s796 + $0x68] sm:$0x1]
        %v2417 = vld [vmem:[%s796 + $0x6c] sm:$0xe]
        %v2418 = vld [vmem:[%s796 + $0x70] sm:$0xf]
        %v2419 = vld [vmem:[%s796 + $0x74] sm:$0x1]
        %v2420 = vld [vmem:[%s796 + $0x78] sm:$0xe]
        %v2421 = vld [vmem:[%s796 + $0x7c] sm:$0xf]
        %v2422 = vld [vmem:[%s796 + $0x80] sm:$0x1]
        %v2423 = vld [vmem:[%s796 + $0x84] sm:$0xe]
        %v2424 = vld [vmem:[%s796 + $0x88] sm:$0xf]
        %v2425 = vld [vmem:[%s796 + $0x8c] sm:$0x1]
        %v2426 = vld [vmem:[%s796 + $0x90] sm:$0xe]
        %v2427 = vld [vmem:[%s796 + $0x94] sm:$0xf]
        %v2428 = vld [vmem:[%s796 + $0x98] sm:$0x1]
        %v2429 = vld [vmem:[%s796 + $0x9c] sm:$0xe]
        %v2430 = vld [vmem:[%s796 + $0xa0] sm:$0xf]
        %v2431 = vld [vmem:[%s796 + $0xa4] sm:$0x1]
        %v2432 = vld [vmem:[%s796 + $0xa8] sm:$0xe]
        %v2433 = vld [vmem:[%s796 + $0xac] sm:$0xf]
        %v2434 = vld [vmem:[%s796 + $0xb0] sm:$0x1]
        %v2435 = vld [vmem:[%s796 + $0xb4] sm:$0xe]
        %v2436 = vld [vmem:[%s796 + $0xb8] sm:$0xf]
        %v2437 = vld [vmem:[%s796 + $0xbc] sm:$0x1]
        %v2486 = vunpack.c.l.b16 %v2390
        %v2487 = vunpack.c.l.b16 %v2391
        %v2488 = vunpack.c.l.b16 %v2392
        %v2489 = vunpack.c.l.b16 %v2393
        %v2490 = vunpack.c.l.b16 %v2394
        %v2491 = vunpack.c.l.b16 %v2395
        %v2492 = vunpack.c.l.b16 %v2396
        %v2493 = vunpack.c.l.b16 %v2397
        %v2494 = vunpack.c.l.b16 %v2398
        %v2495 = vunpack.c.l.b16 %v2399
        %v2496 = vunpack.c.l.b16 %v2400
        %v2497 = vunpack.c.l.b16 %v2401
        %v2498 = vunpack.c.l.b16 %v2402
        %v2499 = vunpack.c.l.b16 %v2403
        %v2500 = vunpack.c.l.b16 %v2404
        %v2501 = vunpack.c.l.b16 %v2405
        %v2502 = vunpack.c.l.b16 %v2406
        %v2503 = vunpack.c.l.b16 %v2407
        %v2504 = vunpack.c.l.b16 %v2408
        %v2505 = vunpack.c.l.b16 %v2409
        %v2506 = vunpack.c.l.b16 %v2410
        %v2507 = vunpack.c.l.b16 %v2411
        %v2508 = vunpack.c.l.b16 %v2412
        %v2509 = vunpack.c.l.b16 %v2413
        %v2510 = vunpack.c.l.b16 %v2414
        %v2511 = vunpack.c.l.b16 %v2415
        %v2512 = vunpack.c.l.b16 %v2416
        %v2513 = vunpack.c.l.b16 %v2417
        %v2514 = vunpack.c.l.b16 %v2418
        %v2515 = vunpack.c.l.b16 %v2419
        %v2516 = vunpack.c.l.b16 %v2420
        %v2517 = vunpack.c.l.b16 %v2421
        %v2518 = vunpack.c.l.b16 %v2422
        %v2519 = vunpack.c.l.b16 %v2423
        %v2520 = vunpack.c.l.b16 %v2424
        %v2521 = vunpack.c.l.b16 %v2425
        %v2522 = vunpack.c.l.b16 %v2426
        %v2523 = vunpack.c.l.b16 %v2427
        %v2524 = vunpack.c.l.b16 %v2428
        %v2525 = vunpack.c.l.b16 %v2429
        %v2526 = vunpack.c.l.b16 %v2430
        %v2527 = vunpack.c.l.b16 %v2431
        %v2528 = vunpack.c.l.b16 %v2432
        %v2529 = vunpack.c.l.b16 %v2433
        %v2530 = vunpack.c.l.b16 %v2434
        %v2531 = vunpack.c.l.b16 %v2435
        %v2532 = vunpack.c.l.b16 %v2436
        %v2533 = vunpack.c.l.b16 %v2437
        %v2534 = vpack.c.b16 %v2487, %v2486
        %v2535 = vpack.c.b16 %v2488, %v2488
        %v2536 = vpack.c.b16 %v2490, %v2489
        %v2537 = vpack.c.b16 %v2491, %v2491
        %v2538 = vpack.c.b16 %v2493, %v2492
        %v2539 = vpack.c.b16 %v2494, %v2494
        %v2540 = vpack.c.b16 %v2496, %v2495
        %v2541 = vpack.c.b16 %v2497, %v2497
        %v2542 = vpack.c.b16 %v2499, %v2498
        %v2543 = vpack.c.b16 %v2500, %v2500
        %v2544 = vpack.c.b16 %v2502, %v2501
        %v2545 = vpack.c.b16 %v2503, %v2503
        %v2546 = vpack.c.b16 %v2505, %v2504
        %v2547 = vpack.c.b16 %v2506, %v2506
        %v2548 = vpack.c.b16 %v2508, %v2507
        %v2549 = vpack.c.b16 %v2509, %v2509
        %v2550 = vpack.c.b16 %v2511, %v2510
        %v2551 = vpack.c.b16 %v2512, %v2512
        %v2552 = vpack.c.b16 %v2514, %v2513
        %v2553 = vpack.c.b16 %v2515, %v2515
        %v2554 = vpack.c.b16 %v2517, %v2516
        %v2555 = vpack.c.b16 %v2518, %v2518
        %v2556 = vpack.c.b16 %v2520, %v2519
        %v2557 = vpack.c.b16 %v2521, %v2521
        %v2558 = vpack.c.b16 %v2523, %v2522
        %v2559 = vpack.c.b16 %v2524, %v2524
        %v2560 = vpack.c.b16 %v2526, %v2525
        %v2561 = vpack.c.b16 %v2527, %v2527
        %v2562 = vpack.c.b16 %v2529, %v2528
        %v2563 = vpack.c.b16 %v2530, %v2530
        %v2564 = vpack.c.b16 %v2532, %v2531
        %v2565 = vpack.c.b16 %v2533, %v2533
        %v2566 = vrot.slane %v2534, 1
        %v2567 = vrot.slane %v2535, 1
        %v2568 = vsel %vm1666, %v2566, %v2567
        %v2569 = vrot.slane %v2536, 1
        %v2570 = vrot.slane %v2537, 1
        %v2571 = vsel %vm1666, %v2569, %v2570
        %v2572 = vrot.slane %v2538, 1
        %v2573 = vrot.slane %v2539, 1
        %v2574 = vsel %vm1666, %v2572, %v2573
        %v2575 = vrot.slane %v2540, 1
        %v2576 = vrot.slane %v2541, 1
        %v2577 = vsel %vm1666, %v2575, %v2576
        %v2578 = vrot.slane %v2542, 1
        %v2579 = vrot.slane %v2543, 1
        %v2580 = vsel %vm1666, %v2578, %v2579
        %v2581 = vrot.slane %v2544, 1
        %v2582 = vrot.slane %v2545, 1
        %v2583 = vsel %vm1666, %v2581, %v2582
        %v2584 = vrot.slane %v2546, 1
        %v2585 = vrot.slane %v2547, 1
        %v2586 = vsel %vm1666, %v2584, %v2585
        %v2587 = vrot.slane %v2548, 1
        %v2588 = vrot.slane %v2549, 1
        %v2589 = vsel %vm1666, %v2587, %v2588
        %v2590 = vrot.slane %v2550, 1
        %v2591 = vrot.slane %v2551, 1
        %v2592 = vsel %vm1666, %v2590, %v2591
        %v2593 = vrot.slane %v2552, 1
        %v2594 = vrot.slane %v2553, 1
        %v2595 = vsel %vm1666, %v2593, %v2594
        %v2596 = vrot.slane %v2554, 1
        %v2597 = vrot.slane %v2555, 1
        %v2598 = vsel %vm1666, %v2596, %v2597
        %v2599 = vrot.slane %v2556, 1
        %v2600 = vrot.slane %v2557, 1
        %v2601 = vsel %vm1666, %v2599, %v2600
        %v2602 = vrot.slane %v2558, 1
        %v2603 = vrot.slane %v2559, 1
        %v2604 = vsel %vm1666, %v2602, %v2603
        %v2605 = vrot.slane %v2560, 1
        %v2606 = vrot.slane %v2561, 1
        %v2607 = vsel %vm1666, %v2605, %v2606
        %v2608 = vrot.slane %v2562, 1
        %v2609 = vrot.slane %v2563, 1
        %v2610 = vsel %vm1666, %v2608, %v2609
        %v2611 = vrot.slane %v2564, 1
        %v2612 = vrot.slane %v2565, 1
        %v2613 = vsel %vm1666, %v2611, %v2612
        %2614 = vrot.lane.b32.xlu0 %v2568, 20
        %v2615 = vpop.permute.xlu0 %2614
        %2616 = vrot.lane.b32.xlu0 %v2571, 20
        %v2617 = vpop.permute.xlu0 %2616
        %2618 = vrot.lane.b32.xlu0 %v2574, 20
        %v2619 = vpop.permute.xlu0 %2618
        %2620 = vrot.lane.b32.xlu0 %v2577, 20
        %v2621 = vpop.permute.xlu0 %2620
        %2622 = vrot.lane.b32.xlu0 %v2580, 20
        %v2623 = vpop.permute.xlu0 %2622
        %2624 = vrot.lane.b32.xlu0 %v2583, 20
        %v2625 = vpop.permute.xlu0 %2624
        %2626 = vrot.lane.b32.xlu0 %v2586, 20
        %v2627 = vpop.permute.xlu0 %2626
        %2628 = vrot.lane.b32.xlu0 %v2589, 20
        %v2629 = vpop.permute.xlu0 %2628
        %2630 = vrot.lane.b32.xlu0 %v2592, 20
        %v2631 = vpop.permute.xlu0 %2630
        %2632 = vrot.lane.b32.xlu0 %v2595, 20
        %v2633 = vpop.permute.xlu0 %2632
        %2634 = vrot.lane.b32.xlu0 %v2598, 20
        %v2635 = vpop.permute.xlu0 %2634
        %2636 = vrot.lane.b32.xlu0 %v2601, 20
        %v2637 = vpop.permute.xlu0 %2636
        %2638 = vrot.lane.b32.xlu0 %v2604, 20
        %v2639 = vpop.permute.xlu0 %2638
        %2640 = vrot.lane.b32.xlu0 %v2607, 20
        %v2641 = vpop.permute.xlu0 %2640
        %2642 = vrot.lane.b32.xlu0 %v2610, 20
        %v2643 = vpop.permute.xlu0 %2642
        %2644 = vrot.lane.b32.xlu0 %v2613, 20
        %v2645 = vpop.permute.xlu0 %2644
        %vm2662 = vcmask 195744
        %2663 = vst.msk [vmem:[#allocation3] sm:$0xff] %vm2662, %v2615
        %2664 = vst.msk [vmem:[#allocation3 + $0x8] sm:$0xff] %vm2662, %v2617
        %2665 = vst.msk [vmem:[#allocation3 + $0x10] sm:$0xff] %vm2662, %v2619
        %2666 = vst.msk [vmem:[#allocation3 + $0x18] sm:$0xff] %vm2662, %v2621
        %2667 = vst.msk [vmem:[#allocation3 + $0x20] sm:$0xff] %vm2662, %v2623
        %2668 = vst.msk [vmem:[#allocation3 + $0x28] sm:$0xff] %vm2662, %v2625
        %2669 = vst.msk [vmem:[#allocation3 + $0x30] sm:$0xff] %vm2662, %v2627
        %2670 = vst.msk [vmem:[#allocation3 + $0x38] sm:$0xff] %vm2662, %v2629
        %2671 = vst.msk [vmem:[#allocation3 + $0x40] sm:$0xff] %vm2662, %v2631
        %2672 = vst.msk [vmem:[#allocation3 + $0x48] sm:$0xff] %vm2662, %v2633
        %2673 = vst.msk [vmem:[#allocation3 + $0x50] sm:$0xff] %vm2662, %v2635
        %2674 = vst.msk [vmem:[#allocation3 + $0x58] sm:$0xff] %vm2662, %v2637
        %2675 = vst.msk [vmem:[#allocation3 + $0x60] sm:$0xff] %vm2662, %v2639
        %2676 = vst.msk [vmem:[#allocation3 + $0x68] sm:$0xff] %vm2662, %v2641
        %2677 = vst.msk [vmem:[#allocation3 + $0x70] sm:$0xff] %vm2662, %v2643
        %2678 = vst.msk [vmem:[#allocation3 + $0x78] sm:$0xff] %vm2662, %v2645
        %s2679 = scalar_lea.vmem [#allocation2], 24
        %v2680 = vld [vmem:[%s2679] sm:$0xf]
        %v2681 = vld [vmem:[%s2679 + $0x4] sm:$0xf]
        %v2682 = vld [vmem:[%s2679 + $0xc] sm:$0xf]
        %v2683 = vld [vmem:[%s2679 + $0x10] sm:$0xf]
        %v2684 = vld [vmem:[%s2679 + $0x18] sm:$0xf]
        %v2685 = vld [vmem:[%s2679 + $0x1c] sm:$0xf]
        %v2686 = vld [vmem:[%s2679 + $0x24] sm:$0xf]
        %v2687 = vld [vmem:[%s2679 + $0x28] sm:$0xf]
        %v2688 = vld [vmem:[%s2679 + $0x30] sm:$0xf]
        %v2689 = vld [vmem:[%s2679 + $0x34] sm:$0xf]
        %v2690 = vld [vmem:[%s2679 + $0x3c] sm:$0xf]
        %v2691 = vld [vmem:[%s2679 + $0x40] sm:$0xf]
        %v2692 = vld [vmem:[%s2679 + $0x48] sm:$0xf]
        %v2693 = vld [vmem:[%s2679 + $0x4c] sm:$0xf]
        %v2694 = vld [vmem:[%s2679 + $0x54] sm:$0xf]
        %v2695 = vld [vmem:[%s2679 + $0x58] sm:$0xf]
        %v2696 = vld [vmem:[%s2679 + $0x60] sm:$0xf]
        %v2697 = vld [vmem:[%s2679 + $0x64] sm:$0xf]
        %v2698 = vld [vmem:[%s2679 + $0x6c] sm:$0xf]
        %v2699 = vld [vmem:[%s2679 + $0x70] sm:$0xf]
        %v2700 = vld [vmem:[%s2679 + $0x78] sm:$0xf]
        %v2701 = vld [vmem:[%s2679 + $0x7c] sm:$0xf]
        %v2702 = vld [vmem:[%s2679 + $0x84] sm:$0xf]
        %v2703 = vld [vmem:[%s2679 + $0x88] sm:$0xf]
        %v2704 = vld [vmem:[%s2679 + $0x90] sm:$0xf]
        %v2705 = vld [vmem:[%s2679 + $0x94] sm:$0xf]
        %v2706 = vld [vmem:[%s2679 + $0x9c] sm:$0xf]
        %v2707 = vld [vmem:[%s2679 + $0xa0] sm:$0xf]
        %v2708 = vld [vmem:[%s2679 + $0xa8] sm:$0xf]
        %v2709 = vld [vmem:[%s2679 + $0xac] sm:$0xf]
        %v2710 = vld [vmem:[%s2679 + $0xb4] sm:$0xf]
        %v2711 = vld [vmem:[%s2679 + $0xb8] sm:$0xf]
        %v2744 = vunpack.c.l.b16 %v2680
        %v2745 = vunpack.c.l.b16 %v2681
        %v2746 = vunpack.c.l.b16 %v2682
        %v2747 = vunpack.c.l.b16 %v2683
        %v2748 = vunpack.c.l.b16 %v2684
        %v2749 = vunpack.c.l.b16 %v2685
        %v2750 = vunpack.c.l.b16 %v2686
        %v2751 = vunpack.c.l.b16 %v2687
        %v2752 = vunpack.c.l.b16 %v2688
        %v2753 = vunpack.c.l.b16 %v2689
        %v2754 = vunpack.c.l.b16 %v2690
        %v2755 = vunpack.c.l.b16 %v2691
        %v2756 = vunpack.c.l.b16 %v2692
        %v2757 = vunpack.c.l.b16 %v2693
        %v2758 = vunpack.c.l.b16 %v2694
        %v2759 = vunpack.c.l.b16 %v2695
        %v2760 = vunpack.c.l.b16 %v2696
        %v2761 = vunpack.c.l.b16 %v2697
        %v2762 = vunpack.c.l.b16 %v2698
        %v2763 = vunpack.c.l.b16 %v2699
        %v2764 = vunpack.c.l.b16 %v2700
        %v2765 = vunpack.c.l.b16 %v2701
        %v2766 = vunpack.c.l.b16 %v2702
        %v2767 = vunpack.c.l.b16 %v2703
        %v2768 = vunpack.c.l.b16 %v2704
        %v2769 = vunpack.c.l.b16 %v2705
        %v2770 = vunpack.c.l.b16 %v2706
        %v2771 = vunpack.c.l.b16 %v2707
        %v2772 = vunpack.c.l.b16 %v2708
        %v2773 = vunpack.c.l.b16 %v2709
        %v2774 = vunpack.c.l.b16 %v2710
        %v2775 = vunpack.c.l.b16 %v2711
        %v2776 = vpack.c.b16 %v2745, %v2744
        %v2777 = vpack.c.b16 %v2747, %v2746
        %v2778 = vpack.c.b16 %v2749, %v2748
        %v2779 = vpack.c.b16 %v2751, %v2750
        %v2780 = vpack.c.b16 %v2753, %v2752
        %v2781 = vpack.c.b16 %v2755, %v2754
        %v2782 = vpack.c.b16 %v2757, %v2756
        %v2783 = vpack.c.b16 %v2759, %v2758
        %v2784 = vpack.c.b16 %v2761, %v2760
        %v2785 = vpack.c.b16 %v2763, %v2762
        %v2786 = vpack.c.b16 %v2765, %v2764
        %v2787 = vpack.c.b16 %v2767, %v2766
        %v2788 = vpack.c.b16 %v2769, %v2768
        %v2789 = vpack.c.b16 %v2771, %v2770
        %v2790 = vpack.c.b16 %v2773, %v2772
        %v2791 = vpack.c.b16 %v2775, %v2774
        %2792 = vrot.lane.b32.xlu0 %v2776, 24
        %v2793 = vpop.permute.xlu0 %2792
        %2794 = vrot.lane.b32.xlu0 %v2777, 24
        %v2795 = vpop.permute.xlu0 %2794
        %2796 = vrot.lane.b32.xlu0 %v2778, 24
        %v2797 = vpop.permute.xlu0 %2796
        %2798 = vrot.lane.b32.xlu0 %v2779, 24
        %v2799 = vpop.permute.xlu0 %2798
        %2800 = vrot.lane.b32.xlu0 %v2780, 24
        %v2801 = vpop.permute.xlu0 %2800
        %2802 = vrot.lane.b32.xlu0 %v2781, 24
        %v2803 = vpop.permute.xlu0 %2802
        %2804 = vrot.lane.b32.xlu0 %v2782, 24
        %v2805 = vpop.permute.xlu0 %2804
        %2806 = vrot.lane.b32.xlu0 %v2783, 24
        %v2807 = vpop.permute.xlu0 %2806
        %2808 = vrot.lane.b32.xlu0 %v2784, 24
        %v2809 = vpop.permute.xlu0 %2808
        %2810 = vrot.lane.b32.xlu0 %v2785, 24
        %v2811 = vpop.permute.xlu0 %2810
        %2812 = vrot.lane.b32.xlu0 %v2786, 24
        %v2813 = vpop.permute.xlu0 %2812
        %2814 = vrot.lane.b32.xlu0 %v2787, 24
        %v2815 = vpop.permute.xlu0 %2814
        %2816 = vrot.lane.b32.xlu0 %v2788, 24
        %v2817 = vpop.permute.xlu0 %2816
        %2818 = vrot.lane.b32.xlu0 %v2789, 24
        %v2819 = vpop.permute.xlu0 %2818
        %2820 = vrot.lane.b32.xlu0 %v2790, 24
        %v2821 = vpop.permute.xlu0 %2820
        %2822 = vrot.lane.b32.xlu0 %v2791, 24
        %v2823 = vpop.permute.xlu0 %2822
        %vm2840 = vcmask 228544
        %2841 = vst.msk [vmem:[#allocation3] sm:$0xff] %vm2840, %v2793
        %2842 = vst.msk [vmem:[#allocation3 + $0x8] sm:$0xff] %vm2840, %v2795
        %2843 = vst.msk [vmem:[#allocation3 + $0x10] sm:$0xff] %vm2840, %v2797
        %2844 = vst.msk [vmem:[#allocation3 + $0x18] sm:$0xff] %vm2840, %v2799
        %2845 = vst.msk [vmem:[#allocation3 + $0x20] sm:$0xff] %vm2840, %v2801
        %2846 = vst.msk [vmem:[#allocation3 + $0x28] sm:$0xff] %vm2840, %v2803
        %2847 = vst.msk [vmem:[#allocation3 + $0x30] sm:$0xff] %vm2840, %v2805
        %2848 = vst.msk [vmem:[#allocation3 + $0x38] sm:$0xff] %vm2840, %v2807
        %2849 = vst.msk [vmem:[#allocation3 + $0x40] sm:$0xff] %vm2840, %v2809
        %2850 = vst.msk [vmem:[#allocation3 + $0x48] sm:$0xff] %vm2840, %v2811
        %2851 = vst.msk [vmem:[#allocation3 + $0x50] sm:$0xff] %vm2840, %v2813
        %2852 = vst.msk [vmem:[#allocation3 + $0x58] sm:$0xff] %vm2840, %v2815
        %2853 = vst.msk [vmem:[#allocation3 + $0x60] sm:$0xff] %vm2840, %v2817
        %2854 = vst.msk [vmem:[#allocation3 + $0x68] sm:$0xff] %vm2840, %v2819
        %2855 = vst.msk [vmem:[#allocation3 + $0x70] sm:$0xff] %vm2840, %v2821
        %2856 = vst.msk [vmem:[#allocation3 + $0x78] sm:$0xff] %vm2840, %v2823
        %v2857 = vld [vmem:[%s2679] sm:$0xf]
        %v2858 = vld [vmem:[%s2679 + $0x4] sm:$0xf]
        %v2859 = vld [vmem:[%s2679 + $0x8] sm:$0x1]
        %v2860 = vld [vmem:[%s2679 + $0xc] sm:$0xf]
        %v2861 = vld [vmem:[%s2679 + $0x10] sm:$0xf]
        %v2862 = vld [vmem:[%s2679 + $0x14] sm:$0x1]
        %v2863 = vld [vmem:[%s2679 + $0x18] sm:$0xf]
        %v2864 = vld [vmem:[%s2679 + $0x1c] sm:$0xf]
        %v2865 = vld [vmem:[%s2679 + $0x20] sm:$0x1]
        %v2866 = vld [vmem:[%s2679 + $0x24] sm:$0xf]
        %v2867 = vld [vmem:[%s2679 + $0x28] sm:$0xf]
        %v2868 = vld [vmem:[%s2679 + $0x2c] sm:$0x1]
        %v2869 = vld [vmem:[%s2679 + $0x30] sm:$0xf]
        %v2870 = vld [vmem:[%s2679 + $0x34] sm:$0xf]
        %v2871 = vld [vmem:[%s2679 + $0x38] sm:$0x1]
        %v2872 = vld [vmem:[%s2679 + $0x3c] sm:$0xf]
        %v2873 = vld [vmem:[%s2679 + $0x40] sm:$0xf]
        %v2874 = vld [vmem:[%s2679 + $0x44] sm:$0x1]
        %v2875 = vld [vmem:[%s2679 + $0x48] sm:$0xf]
        %v2876 = vld [vmem:[%s2679 + $0x4c] sm:$0xf]
        %v2877 = vld [vmem:[%s2679 + $0x50] sm:$0x1]
        %v2878 = vld [vmem:[%s2679 + $0x54] sm:$0xf]
        %v2879 = vld [vmem:[%s2679 + $0x58] sm:$0xf]
        %v2880 = vld [vmem:[%s2679 + $0x5c] sm:$0x1]
        %v2881 = vld [vmem:[%s2679 + $0x60] sm:$0xf]
        %v2882 = vld [vmem:[%s2679 + $0x64] sm:$0xf]
        %v2883 = vld [vmem:[%s2679 + $0x68] sm:$0x1]
        %v2884 = vld [vmem:[%s2679 + $0x6c] sm:$0xf]
        %v2885 = vld [vmem:[%s2679 + $0x70] sm:$0xf]
        %v2886 = vld [vmem:[%s2679 + $0x74] sm:$0x1]
        %v2887 = vld [vmem:[%s2679 + $0x78] sm:$0xf]
        %v2888 = vld [vmem:[%s2679 + $0x7c] sm:$0xf]
        %v2889 = vld [vmem:[%s2679 + $0x80] sm:$0x1]
        %v2890 = vld [vmem:[%s2679 + $0x84] sm:$0xf]
        %v2891 = vld [vmem:[%s2679 + $0x88] sm:$0xf]
        %v2892 = vld [vmem:[%s2679 + $0x8c] sm:$0x1]
        %v2893 = vld [vmem:[%s2679 + $0x90] sm:$0xf]
        %v2894 = vld [vmem:[%s2679 + $0x94] sm:$0xf]
        %v2895 = vld [vmem:[%s2679 + $0x98] sm:$0x1]
        %v2896 = vld [vmem:[%s2679 + $0x9c] sm:$0xf]
        %v2897 = vld [vmem:[%s2679 + $0xa0] sm:$0xf]
        %v2898 = vld [vmem:[%s2679 + $0xa4] sm:$0x1]
        %v2899 = vld [vmem:[%s2679 + $0xa8] sm:$0xf]
        %v2900 = vld [vmem:[%s2679 + $0xac] sm:$0xf]
        %v2901 = vld [vmem:[%s2679 + $0xb0] sm:$0x1]
        %v2902 = vld [vmem:[%s2679 + $0xb4] sm:$0xf]
        %v2903 = vld [vmem:[%s2679 + $0xb8] sm:$0xf]
        %v2904 = vld [vmem:[%s2679 + $0xbc] sm:$0x1]
        %v2953 = vunpack.c.l.b16 %v2857
        %v2954 = vunpack.c.l.b16 %v2858
        %v2955 = vunpack.c.l.b16 %v2859
        %v2956 = vunpack.c.l.b16 %v2860
        %v2957 = vunpack.c.l.b16 %v2861
        %v2958 = vunpack.c.l.b16 %v2862
        %v2959 = vunpack.c.l.b16 %v2863
        %v2960 = vunpack.c.l.b16 %v2864
        %v2961 = vunpack.c.l.b16 %v2865
        %v2962 = vunpack.c.l.b16 %v2866
        %v2963 = vunpack.c.l.b16 %v2867
        %v2964 = vunpack.c.l.b16 %v2868
        %v2965 = vunpack.c.l.b16 %v2869
        %v2966 = vunpack.c.l.b16 %v2870
        %v2967 = vunpack.c.l.b16 %v2871
        %v2968 = vunpack.c.l.b16 %v2872
        %v2969 = vunpack.c.l.b16 %v2873
        %v2970 = vunpack.c.l.b16 %v2874
        %v2971 = vunpack.c.l.b16 %v2875
        %v2972 = vunpack.c.l.b16 %v2876
        %v2973 = vunpack.c.l.b16 %v2877
        %v2974 = vunpack.c.l.b16 %v2878
        %v2975 = vunpack.c.l.b16 %v2879
        %v2976 = vunpack.c.l.b16 %v2880
        %v2977 = vunpack.c.l.b16 %v2881
        %v2978 = vunpack.c.l.b16 %v2882
        %v2979 = vunpack.c.l.b16 %v2883
        %v2980 = vunpack.c.l.b16 %v2884
        %v2981 = vunpack.c.l.b16 %v2885
        %v2982 = vunpack.c.l.b16 %v2886
        %v2983 = vunpack.c.l.b16 %v2887
        %v2984 = vunpack.c.l.b16 %v2888
        %v2985 = vunpack.c.l.b16 %v2889
        %v2986 = vunpack.c.l.b16 %v2890
        %v2987 = vunpack.c.l.b16 %v2891
        %v2988 = vunpack.c.l.b16 %v2892
        %v2989 = vunpack.c.l.b16 %v2893
        %v2990 = vunpack.c.l.b16 %v2894
        %v2991 = vunpack.c.l.b16 %v2895
        %v2992 = vunpack.c.l.b16 %v2896
        %v2993 = vunpack.c.l.b16 %v2897
        %v2994 = vunpack.c.l.b16 %v2898
        %v2995 = vunpack.c.l.b16 %v2899
        %v2996 = vunpack.c.l.b16 %v2900
        %v2997 = vunpack.c.l.b16 %v2901
        %v2998 = vunpack.c.l.b16 %v2902
        %v2999 = vunpack.c.l.b16 %v2903
        %v3000 = vunpack.c.l.b16 %v2904
        %v3001 = vpack.c.b16 %v2954, %v2953
        %v3002 = vpack.c.b16 %v2955, %v2955
        %v3003 = vpack.c.b16 %v2957, %v2956
        %v3004 = vpack.c.b16 %v2958, %v2958
        %v3005 = vpack.c.b16 %v2960, %v2959
        %v3006 = vpack.c.b16 %v2961, %v2961
        %v3007 = vpack.c.b16 %v2963, %v2962
        %v3008 = vpack.c.b16 %v2964, %v2964
        %v3009 = vpack.c.b16 %v2966, %v2965
        %v3010 = vpack.c.b16 %v2967, %v2967
        %v3011 = vpack.c.b16 %v2969, %v2968
        %v3012 = vpack.c.b16 %v2970, %v2970
        %v3013 = vpack.c.b16 %v2972, %v2971
        %v3014 = vpack.c.b16 %v2973, %v2973
        %v3015 = vpack.c.b16 %v2975, %v2974
        %v3016 = vpack.c.b16 %v2976, %v2976
        %v3017 = vpack.c.b16 %v2978, %v2977
        %v3018 = vpack.c.b16 %v2979, %v2979
        %v3019 = vpack.c.b16 %v2981, %v2980
        %v3020 = vpack.c.b16 %v2982, %v2982
        %v3021 = vpack.c.b16 %v2984, %v2983
        %v3022 = vpack.c.b16 %v2985, %v2985
        %v3023 = vpack.c.b16 %v2987, %v2986
        %v3024 = vpack.c.b16 %v2988, %v2988
        %v3025 = vpack.c.b16 %v2990, %v2989
        %v3026 = vpack.c.b16 %v2991, %v2991
        %v3027 = vpack.c.b16 %v2993, %v2992
        %v3028 = vpack.c.b16 %v2994, %v2994
        %v3029 = vpack.c.b16 %v2996, %v2995
        %v3030 = vpack.c.b16 %v2997, %v2997
        %v3031 = vpack.c.b16 %v2999, %v2998
        %v3032 = vpack.c.b16 %v3000, %v3000
        %v3034 = vshrl.u32 %v3001, 16
        %v3036 = vshll.u32 %v3001, 16
        %v3038 = vrot.slane %v3036, 1
        %v3039 = vor.u32 %v3034, %v3038
        %v3041 = vshll.u32 %v3002, 16
        %v3043 = vrot.slane %v3041, 1
        %v3044 = vsel %vm1232, %v3039, %v3043
        %v3046 = vshrl.u32 %v3003, 16
        %v3048 = vshll.u32 %v3003, 16
        %v3050 = vrot.slane %v3048, 1
        %v3051 = vor.u32 %v3046, %v3050
        %v3053 = vshll.u32 %v3004, 16
        %v3055 = vrot.slane %v3053, 1
        %v3056 = vsel %vm1232, %v3051, %v3055
        %v3058 = vshrl.u32 %v3005, 16
        %v3060 = vshll.u32 %v3005, 16
        %v3062 = vrot.slane %v3060, 1
        %v3063 = vor.u32 %v3058, %v3062
        %v3065 = vshll.u32 %v3006, 16
        %v3067 = vrot.slane %v3065, 1
        %v3068 = vsel %vm1232, %v3063, %v3067
        %v3070 = vshrl.u32 %v3007, 16
        %v3072 = vshll.u32 %v3007, 16
        %v3074 = vrot.slane %v3072, 1
        %v3075 = vor.u32 %v3070, %v3074
        %v3077 = vshll.u32 %v3008, 16
        %v3079 = vrot.slane %v3077, 1
        %v3080 = vsel %vm1232, %v3075, %v3079
        %v3082 = vshrl.u32 %v3009, 16
        %v3084 = vshll.u32 %v3009, 16
        %v3086 = vrot.slane %v3084, 1
        %v3087 = vor.u32 %v3082, %v3086
        %v3089 = vshll.u32 %v3010, 16
        %v3091 = vrot.slane %v3089, 1
        %v3092 = vsel %vm1232, %v3087, %v3091
        %v3094 = vshrl.u32 %v3011, 16
        %v3096 = vshll.u32 %v3011, 16
        %v3098 = vrot.slane %v3096, 1
        %v3099 = vor.u32 %v3094, %v3098
        %v3101 = vshll.u32 %v3012, 16
        %v3103 = vrot.slane %v3101, 1
        %v3104 = vsel %vm1232, %v3099, %v3103
        %v3106 = vshrl.u32 %v3013, 16
        %v3108 = vshll.u32 %v3013, 16
        %v3110 = vrot.slane %v3108, 1
        %v3111 = vor.u32 %v3106, %v3110
        %v3113 = vshll.u32 %v3014, 16
        %v3115 = vrot.slane %v3113, 1
        %v3116 = vsel %vm1232, %v3111, %v3115
        %v3118 = vshrl.u32 %v3015, 16
        %v3120 = vshll.u32 %v3015, 16
        %v3122 = vrot.slane %v3120, 1
        %v3123 = vor.u32 %v3118, %v3122
        %v3125 = vshll.u32 %v3016, 16
        %v3127 = vrot.slane %v3125, 1
        %v3128 = vsel %vm1232, %v3123, %v3127
        %v3130 = vshrl.u32 %v3017, 16
        %v3132 = vshll.u32 %v3017, 16
        %v3134 = vrot.slane %v3132, 1
        %v3135 = vor.u32 %v3130, %v3134
        %v3137 = vshll.u32 %v3018, 16
        %v3139 = vrot.slane %v3137, 1
        %v3140 = vsel %vm1232, %v3135, %v3139
        %v3142 = vshrl.u32 %v3019, 16
        %v3144 = vshll.u32 %v3019, 16
        %v3146 = vrot.slane %v3144, 1
        %v3147 = vor.u32 %v3142, %v3146
        %v3149 = vshll.u32 %v3020, 16
        %v3151 = vrot.slane %v3149, 1
        %v3152 = vsel %vm1232, %v3147, %v3151
        %v3154 = vshrl.u32 %v3021, 16
        %v3156 = vshll.u32 %v3021, 16
        %v3158 = vrot.slane %v3156, 1
        %v3159 = vor.u32 %v3154, %v3158
        %v3161 = vshll.u32 %v3022, 16
        %v3163 = vrot.slane %v3161, 1
        %v3164 = vsel %vm1232, %v3159, %v3163
        %v3166 = vshrl.u32 %v3023, 16
        %v3168 = vshll.u32 %v3023, 16
        %v3170 = vrot.slane %v3168, 1
        %v3171 = vor.u32 %v3166, %v3170
        %v3173 = vshll.u32 %v3024, 16
        %v3175 = vrot.slane %v3173, 1
        %v3176 = vsel %vm1232, %v3171, %v3175
        %v3178 = vshrl.u32 %v3025, 16
        %v3180 = vshll.u32 %v3025, 16
        %v3182 = vrot.slane %v3180, 1
        %v3183 = vor.u32 %v3178, %v3182
        %v3185 = vshll.u32 %v3026, 16
        %v3187 = vrot.slane %v3185, 1
        %v3188 = vsel %vm1232, %v3183, %v3187
        %v3190 = vshrl.u32 %v3027, 16
        %v3192 = vshll.u32 %v3027, 16
        %v3194 = vrot.slane %v3192, 1
        %v3195 = vor.u32 %v3190, %v3194
        %v3197 = vshll.u32 %v3028, 16
        %v3199 = vrot.slane %v3197, 1
        %v3200 = vsel %vm1232, %v3195, %v3199
        %v3202 = vshrl.u32 %v3029, 16
        %v3204 = vshll.u32 %v3029, 16
        %v3206 = vrot.slane %v3204, 1
        %v3207 = vor.u32 %v3202, %v3206
        %v3209 = vshll.u32 %v3030, 16
        %v3211 = vrot.slane %v3209, 1
        %v3212 = vsel %vm1232, %v3207, %v3211
        %v3214 = vshrl.u32 %v3031, 16
        %v3216 = vshll.u32 %v3031, 16
        %v3218 = vrot.slane %v3216, 1
        %v3219 = vor.u32 %v3214, %v3218
        %v3221 = vshll.u32 %v3032, 16
        %v3223 = vrot.slane %v3221, 1
        %v3224 = vsel %vm1232, %v3219, %v3223
        %3225 = vrot.lane.b32.xlu0 %v3044, 28
        %v3226 = vpop.permute.xlu0 %3225
        %3227 = vrot.lane.b32.xlu0 %v3056, 28
        %v3228 = vpop.permute.xlu0 %3227
        %3229 = vrot.lane.b32.xlu0 %v3068, 28
        %v3230 = vpop.permute.xlu0 %3229
        %3231 = vrot.lane.b32.xlu0 %v3080, 28
        %v3232 = vpop.permute.xlu0 %3231
        %3233 = vrot.lane.b32.xlu0 %v3092, 28
        %v3234 = vpop.permute.xlu0 %3233
        %3235 = vrot.lane.b32.xlu0 %v3104, 28
        %v3236 = vpop.permute.xlu0 %3235
        %3237 = vrot.lane.b32.xlu0 %v3116, 28
        %v3238 = vpop.permute.xlu0 %3237
        %3239 = vrot.lane.b32.xlu0 %v3128, 28
        %v3240 = vpop.permute.xlu0 %3239
        %3241 = vrot.lane.b32.xlu0 %v3140, 28
        %v3242 = vpop.permute.xlu0 %3241
        %3243 = vrot.lane.b32.xlu0 %v3152, 28
        %v3244 = vpop.permute.xlu0 %3243
        %3245 = vrot.lane.b32.xlu0 %v3164, 28
        %v3246 = vpop.permute.xlu0 %3245
        %3247 = vrot.lane.b32.xlu0 %v3176, 28
        %v3248 = vpop.permute.xlu0 %3247
        %3249 = vrot.lane.b32.xlu0 %v3188, 28
        %v3250 = vpop.permute.xlu0 %3249
        %3251 = vrot.lane.b32.xlu0 %v3200, 28
        %v3252 = vpop.permute.xlu0 %3251
        %3253 = vrot.lane.b32.xlu0 %v3212, 28
        %v3254 = vpop.permute.xlu0 %3253
        %3255 = vrot.lane.b32.xlu0 %v3224, 28
        %v3256 = vpop.permute.xlu0 %3255
        %vm3273 = vcmask 261344
        %3274 = vst.msk [vmem:[#allocation3] sm:$0xff] %vm3273, %v3226
        %3275 = vst.msk [vmem:[#allocation3 + $0x8] sm:$0xff] %vm3273, %v3228
        %3276 = vst.msk [vmem:[#allocation3 + $0x10] sm:$0xff] %vm3273, %v3230
        %3277 = vst.msk [vmem:[#allocation3 + $0x18] sm:$0xff] %vm3273, %v3232
        %3278 = vst.msk [vmem:[#allocation3 + $0x20] sm:$0xff] %vm3273, %v3234
        %3279 = vst.msk [vmem:[#allocation3 + $0x28] sm:$0xff] %vm3273, %v3236
        %3280 = vst.msk [vmem:[#allocation3 + $0x30] sm:$0xff] %vm3273, %v3238
        %3281 = vst.msk [vmem:[#allocation3 + $0x38] sm:$0xff] %vm3273, %v3240
        %3282 = vst.msk [vmem:[#allocation3 + $0x40] sm:$0xff] %vm3273, %v3242
        %3283 = vst.msk [vmem:[#allocation3 + $0x48] sm:$0xff] %vm3273, %v3244
        %3284 = vst.msk [vmem:[#allocation3 + $0x50] sm:$0xff] %vm3273, %v3246
        %3285 = vst.msk [vmem:[#allocation3 + $0x58] sm:$0xff] %vm3273, %v3248
        %3286 = vst.msk [vmem:[#allocation3 + $0x60] sm:$0xff] %vm3273, %v3250
        %3287 = vst.msk [vmem:[#allocation3 + $0x68] sm:$0xff] %vm3273, %v3252
        %3288 = vst.msk [vmem:[#allocation3 + $0x70] sm:$0xff] %vm3273, %v3254
        %3289 = vst.msk [vmem:[#allocation3 + $0x78] sm:$0xff] %vm3273, %v3256
        %v3290 = vld [vmem:[%s2679] sm:$0xe]
        %v3291 = vld [vmem:[%s2679 + $0x4] sm:$0xf]
        %v3292 = vld [vmem:[%s2679 + $0x8] sm:$0x1]
        %v3293 = vld [vmem:[%s2679 + $0xc] sm:$0xe]
        %v3294 = vld [vmem:[%s2679 + $0x10] sm:$0xf]
        %v3295 = vld [vmem:[%s2679 + $0x14] sm:$0x1]
        %v3296 = vld [vmem:[%s2679 + $0x18] sm:$0xe]
        %v3297 = vld [vmem:[%s2679 + $0x1c] sm:$0xf]
        %v3298 = vld [vmem:[%s2679 + $0x20] sm:$0x1]
        %v3299 = vld [vmem:[%s2679 + $0x24] sm:$0xe]
        %v3300 = vld [vmem:[%s2679 + $0x28] sm:$0xf]
        %v3301 = vld [vmem:[%s2679 + $0x2c] sm:$0x1]
        %v3302 = vld [vmem:[%s2679 + $0x30] sm:$0xe]
        %v3303 = vld [vmem:[%s2679 + $0x34] sm:$0xf]
        %v3304 = vld [vmem:[%s2679 + $0x38] sm:$0x1]
        %v3305 = vld [vmem:[%s2679 + $0x3c] sm:$0xe]
        %v3306 = vld [vmem:[%s2679 + $0x40] sm:$0xf]
        %v3307 = vld [vmem:[%s2679 + $0x44] sm:$0x1]
        %v3308 = vld [vmem:[%s2679 + $0x48] sm:$0xe]
        %v3309 = vld [vmem:[%s2679 + $0x4c] sm:$0xf]
        %v3310 = vld [vmem:[%s2679 + $0x50] sm:$0x1]
        %v3311 = vld [vmem:[%s2679 + $0x54] sm:$0xe]
        %v3312 = vld [vmem:[%s2679 + $0x58] sm:$0xf]
        %v3313 = vld [vmem:[%s2679 + $0x5c] sm:$0x1]
        %v3314 = vld [vmem:[%s2679 + $0x60] sm:$0xe]
        %v3315 = vld [vmem:[%s2679 + $0x64] sm:$0xf]
        %v3316 = vld [vmem:[%s2679 + $0x68] sm:$0x1]
        %v3317 = vld [vmem:[%s2679 + $0x6c] sm:$0xe]
        %v3318 = vld [vmem:[%s2679 + $0x70] sm:$0xf]
        %v3319 = vld [vmem:[%s2679 + $0x74] sm:$0x1]
        %v3320 = vld [vmem:[%s2679 + $0x78] sm:$0xe]
        %v3321 = vld [vmem:[%s2679 + $0x7c] sm:$0xf]
        %v3322 = vld [vmem:[%s2679 + $0x80] sm:$0x1]
        %v3323 = vld [vmem:[%s2679 + $0x84] sm:$0xe]
        %v3324 = vld [vmem:[%s2679 + $0x88] sm:$0xf]
        %v3325 = vld [vmem:[%s2679 + $0x8c] sm:$0x1]
        %v3326 = vld [vmem:[%s2679 + $0x90] sm:$0xe]
        %v3327 = vld [vmem:[%s2679 + $0x94] sm:$0xf]
        %v3328 = vld [vmem:[%s2679 + $0x98] sm:$0x1]
        %v3329 = vld [vmem:[%s2679 + $0x9c] sm:$0xe]
        %v3330 = vld [vmem:[%s2679 + $0xa0] sm:$0xf]
        %v3331 = vld [vmem:[%s2679 + $0xa4] sm:$0x1]
        %v3332 = vld [vmem:[%s2679 + $0xa8] sm:$0xe]
        %v3333 = vld [vmem:[%s2679 + $0xac] sm:$0xf]
        %v3334 = vld [vmem:[%s2679 + $0xb0] sm:$0x1]
        %v3335 = vld [vmem:[%s2679 + $0xb4] sm:$0xe]
        %v3336 = vld [vmem:[%s2679 + $0xb8] sm:$0xf]
        %v3337 = vld [vmem:[%s2679 + $0xbc] sm:$0x1]
        %v3386 = vunpack.c.l.b16 %v3290
        %v3387 = vunpack.c.l.b16 %v3291
        %v3388 = vunpack.c.l.b16 %v3292
        %v3389 = vunpack.c.l.b16 %v3293
        %v3390 = vunpack.c.l.b16 %v3294
        %v3391 = vunpack.c.l.b16 %v3295
        %v3392 = vunpack.c.l.b16 %v3296
        %v3393 = vunpack.c.l.b16 %v3297
        %v3394 = vunpack.c.l.b16 %v3298
        %v3395 = vunpack.c.l.b16 %v3299
        %v3396 = vunpack.c.l.b16 %v3300
        %v3397 = vunpack.c.l.b16 %v3301
        %v3398 = vunpack.c.l.b16 %v3302
        %v3399 = vunpack.c.l.b16 %v3303
        %v3400 = vunpack.c.l.b16 %v3304
        %v3401 = vunpack.c.l.b16 %v3305
        %v3402 = vunpack.c.l.b16 %v3306
        %v3403 = vunpack.c.l.b16 %v3307
        %v3404 = vunpack.c.l.b16 %v3308
        %v3405 = vunpack.c.l.b16 %v3309
        %v3406 = vunpack.c.l.b16 %v3310
        %v3407 = vunpack.c.l.b16 %v3311
        %v3408 = vunpack.c.l.b16 %v3312
        %v3409 = vunpack.c.l.b16 %v3313
        %v3410 = vunpack.c.l.b16 %v3314
        %v3411 = vunpack.c.l.b16 %v3315
        %v3412 = vunpack.c.l.b16 %v3316
        %v3413 = vunpack.c.l.b16 %v3317
        %v3414 = vunpack.c.l.b16 %v3318
        %v3415 = vunpack.c.l.b16 %v3319
        %v3416 = vunpack.c.l.b16 %v3320
        %v3417 = vunpack.c.l.b16 %v3321
        %v3418 = vunpack.c.l.b16 %v3322
        %v3419 = vunpack.c.l.b16 %v3323
        %v3420 = vunpack.c.l.b16 %v3324
        %v3421 = vunpack.c.l.b16 %v3325
        %v3422 = vunpack.c.l.b16 %v3326
        %v3423 = vunpack.c.l.b16 %v3327
        %v3424 = vunpack.c.l.b16 %v3328
        %v3425 = vunpack.c.l.b16 %v3329
        %v3426 = vunpack.c.l.b16 %v3330
        %v3427 = vunpack.c.l.b16 %v3331
        %v3428 = vunpack.c.l.b16 %v3332
        %v3429 = vunpack.c.l.b16 %v3333
        %v3430 = vunpack.c.l.b16 %v3334
        %v3431 = vunpack.c.l.b16 %v3335
        %v3432 = vunpack.c.l.b16 %v3336
        %v3433 = vunpack.c.l.b16 %v3337
        %v3434 = vpack.c.b16 %v3387, %v3386
        %v3435 = vpack.c.b16 %v3388, %v3388
        %v3436 = vpack.c.b16 %v3390, %v3389
        %v3437 = vpack.c.b16 %v3391, %v3391
        %v3438 = vpack.c.b16 %v3393, %v3392
        %v3439 = vpack.c.b16 %v3394, %v3394
        %v3440 = vpack.c.b16 %v3396, %v3395
        %v3441 = vpack.c.b16 %v3397, %v3397
        %v3442 = vpack.c.b16 %v3399, %v3398
        %v3443 = vpack.c.b16 %v3400, %v3400
        %v3444 = vpack.c.b16 %v3402, %v3401
        %v3445 = vpack.c.b16 %v3403, %v3403
        %v3446 = vpack.c.b16 %v3405, %v3404
        %v3447 = vpack.c.b16 %v3406, %v3406
        %v3448 = vpack.c.b16 %v3408, %v3407
        %v3449 = vpack.c.b16 %v3409, %v3409
        %v3450 = vpack.c.b16 %v3411, %v3410
        %v3451 = vpack.c.b16 %v3412, %v3412
        %v3452 = vpack.c.b16 %v3414, %v3413
        %v3453 = vpack.c.b16 %v3415, %v3415
        %v3454 = vpack.c.b16 %v3417, %v3416
        %v3455 = vpack.c.b16 %v3418, %v3418
        %v3456 = vpack.c.b16 %v3420, %v3419
        %v3457 = vpack.c.b16 %v3421, %v3421
        %v3458 = vpack.c.b16 %v3423, %v3422
        %v3459 = vpack.c.b16 %v3424, %v3424
        %v3460 = vpack.c.b16 %v3426, %v3425
        %v3461 = vpack.c.b16 %v3427, %v3427
        %v3462 = vpack.c.b16 %v3429, %v3428
        %v3463 = vpack.c.b16 %v3430, %v3430
        %v3464 = vpack.c.b16 %v3432, %v3431
        %v3465 = vpack.c.b16 %v3433, %v3433
        %v3466 = vrot.slane %v3434, 1
        %v3467 = vrot.slane %v3435, 1
        %v3468 = vsel %vm1666, %v3466, %v3467
        %v3469 = vrot.slane %v3436, 1
        %v3470 = vrot.slane %v3437, 1
        %v3471 = vsel %vm1666, %v3469, %v3470
        %v3472 = vrot.slane %v3438, 1
        %v3473 = vrot.slane %v3439, 1
        %v3474 = vsel %vm1666, %v3472, %v3473
        %v3475 = vrot.slane %v3440, 1
        %v3476 = vrot.slane %v3441, 1
        %v3477 = vsel %vm1666, %v3475, %v3476
        %v3478 = vrot.slane %v3442, 1
        %v3479 = vrot.slane %v3443, 1
        %v3480 = vsel %vm1666, %v3478, %v3479
        %v3481 = vrot.slane %v3444, 1
        %v3482 = vrot.slane %v3445, 1
        %v3483 = vsel %vm1666, %v3481, %v3482
        %v3484 = vrot.slane %v3446, 1
        %v3485 = vrot.slane %v3447, 1
        %v3486 = vsel %vm1666, %v3484, %v3485
        %v3487 = vrot.slane %v3448, 1
        %v3488 = vrot.slane %v3449, 1
        %v3489 = vsel %vm1666, %v3487, %v3488
        %v3490 = vrot.slane %v3450, 1
        %v3491 = vrot.slane %v3451, 1
        %v3492 = vsel %vm1666, %v3490, %v3491
        %v3493 = vrot.slane %v3452, 1
        %v3494 = vrot.slane %v3453, 1
        %v3495 = vsel %vm1666, %v3493, %v3494
        %v3496 = vrot.slane %v3454, 1
        %v3497 = vrot.slane %v3455, 1
        %v3498 = vsel %vm1666, %v3496, %v3497
        %v3499 = vrot.slane %v3456, 1
        %v3500 = vrot.slane %v3457, 1
        %v3501 = vsel %vm1666, %v3499, %v3500
        %v3502 = vrot.slane %v3458, 1
        %v3503 = vrot.slane %v3459, 1
        %v3504 = vsel %vm1666, %v3502, %v3503
        %v3505 = vrot.slane %v3460, 1
        %v3506 = vrot.slane %v3461, 1
        %v3507 = vsel %vm1666, %v3505, %v3506
        %v3508 = vrot.slane %v3462, 1
        %v3509 = vrot.slane %v3463, 1
        %v3510 = vsel %vm1666, %v3508, %v3509
        %v3511 = vrot.slane %v3464, 1
        %v3512 = vrot.slane %v3465, 1
        %v3513 = vsel %vm1666, %v3511, %v3512
        %3514 = vrot.lane.b32.xlu0 %v3468, 32
        %v3515 = vpop.permute.xlu0 %3514
        %3516 = vrot.lane.b32.xlu0 %v3471, 32
        %v3517 = vpop.permute.xlu0 %3516
        %3518 = vrot.lane.b32.xlu0 %v3474, 32
        %v3519 = vpop.permute.xlu0 %3518
        %3520 = vrot.lane.b32.xlu0 %v3477, 32
        %v3521 = vpop.permute.xlu0 %3520
        %3522 = vrot.lane.b32.xlu0 %v3480, 32
        %v3523 = vpop.permute.xlu0 %3522
        %3524 = vrot.lane.b32.xlu0 %v3483, 32
        %v3525 = vpop.permute.xlu0 %3524
        %3526 = vrot.lane.b32.xlu0 %v3486, 32
        %v3527 = vpop.permute.xlu0 %3526
        %3528 = vrot.lane.b32.xlu0 %v3489, 32
        %v3529 = vpop.permute.xlu0 %3528
        %3530 = vrot.lane.b32.xlu0 %v3492, 32
        %v3531 = vpop.permute.xlu0 %3530
        %3532 = vrot.lane.b32.xlu0 %v3495, 32
        %v3533 = vpop.permute.xlu0 %3532
        %3534 = vrot.lane.b32.xlu0 %v3498, 32
        %v3535 = vpop.permute.xlu0 %3534
        %3536 = vrot.lane.b32.xlu0 %v3501, 32
        %v3537 = vpop.permute.xlu0 %3536
        %3538 = vrot.lane.b32.xlu0 %v3504, 32
        %v3539 = vpop.permute.xlu0 %3538
        %3540 = vrot.lane.b32.xlu0 %v3507, 32
        %v3541 = vpop.permute.xlu0 %3540
        %3542 = vrot.lane.b32.xlu0 %v3510, 32
        %v3543 = vpop.permute.xlu0 %3542
        %3544 = vrot.lane.b32.xlu0 %v3513, 32
        %v3545 = vpop.permute.xlu0 %3544
        %vm3562 = vcmask 294144
        %3563 = vst.msk [vmem:[#allocation3] sm:$0xff] %vm3562, %v3515
        %3564 = vst.msk [vmem:[#allocation3 + $0x8] sm:$0xff] %vm3562, %v3517
        %3565 = vst.msk [vmem:[#allocation3 + $0x10] sm:$0xff] %vm3562, %v3519
        %3566 = vst.msk [vmem:[#allocation3 + $0x18] sm:$0xff] %vm3562, %v3521
        %3567 = vst.msk [vmem:[#allocation3 + $0x20] sm:$0xff] %vm3562, %v3523
        %3568 = vst.msk [vmem:[#allocation3 + $0x28] sm:$0xff] %vm3562, %v3525
        %3569 = vst.msk [vmem:[#allocation3 + $0x30] sm:$0xff] %vm3562, %v3527
        %3570 = vst.msk [vmem:[#allocation3 + $0x38] sm:$0xff] %vm3562, %v3529
        %3571 = vst.msk [vmem:[#allocation3 + $0x40] sm:$0xff] %vm3562, %v3531
        %3572 = vst.msk [vmem:[#allocation3 + $0x48] sm:$0xff] %vm3562, %v3533
        %3573 = vst.msk [vmem:[#allocation3 + $0x50] sm:$0xff] %vm3562, %v3535
        %3574 = vst.msk [vmem:[#allocation3 + $0x58] sm:$0xff] %vm3562, %v3537
        %3575 = vst.msk [vmem:[#allocation3 + $0x60] sm:$0xff] %vm3562, %v3539
        %3576 = vst.msk [vmem:[#allocation3 + $0x68] sm:$0xff] %vm3562, %v3541
        %3577 = vst.msk [vmem:[#allocation3 + $0x70] sm:$0xff] %vm3562, %v3543
        %3578 = vst.msk [vmem:[#allocation3 + $0x78] sm:$0xff] %vm3562, %v3545
        %v3579 = vld [vmem:[#allocation3] sm:$0xff]
        %v3580 = vld [vmem:[#allocation3 + $0x8] sm:$0xff]
        %v3581 = vld [vmem:[#allocation3 + $0x10] sm:$0xff]
        %v3582 = vld [vmem:[#allocation3 + $0x18] sm:$0xff]
        %v3583 = vld [vmem:[#allocation3 + $0x20] sm:$0xff]
        %v3584 = vld [vmem:[#allocation3 + $0x28] sm:$0xff]
        %v3585 = vld [vmem:[#allocation3 + $0x30] sm:$0xff]
        %v3586 = vld [vmem:[#allocation3 + $0x38] sm:$0xff]
        %v3587 = vld [vmem:[#allocation3 + $0x40] sm:$0xff]
        %v3588 = vld [vmem:[#allocation3 + $0x48] sm:$0xff]
        %v3589 = vld [vmem:[#allocation3 + $0x50] sm:$0xff]
        %v3590 = vld [vmem:[#allocation3 + $0x58] sm:$0xff]
        %v3591 = vld [vmem:[#allocation3 + $0x60] sm:$0xff]
        %v3592 = vld [vmem:[#allocation3 + $0x68] sm:$0xff]
        %v3593 = vld [vmem:[#allocation3 + $0x70] sm:$0xff]
        %v3594 = vld [vmem:[#allocation3 + $0x78] sm:$0xff]
        %v3595 = vld [vmem:[%s1] sm:$0xf]
        %v3596 = vld [vmem:[%s1 + $0x4] sm:$0xf]
        %v3597 = vld [vmem:[%s1 + $0x8] sm:$0xf]
        %v3598 = vld [vmem:[%s1 + $0xc] sm:$0xf]
        %v3599 = vld [vmem:[%s1 + $0x10] sm:$0x3]
        %v3600 = vld [vmem:[%s2] sm:$0x1]
        %v3602 = vlaneseq
        %v3603 = vshrl.u32 %v3602, 7
        %v3604 = vsub.s32 0, %v3603
        %v3605 = vrot.slane %v3600, %v3604
        %v3612 = vunpack.c.l.b16 %v3595
        %v3613 = vunpack.c.l.b16 %v3596
        %v3614 = vunpack.c.l.b16 %v3597
        %v3615 = vunpack.c.l.b16 %v3598
        %v3616 = vunpack.c.l.b16 %v3599
        %v3617 = vpack.c.b16 %v3613, %v3612
        %v3618 = vpack.c.b16 %v3615, %v3614
        %v3619 = vpack.c.b16 %v3616, %v3616
        %vm3622 = vcmask 293888
        %v3624 = vsel %vm3622, %v3579, 0
        %v3627 = vsel %vm3622, %v3580, 0
        %v3630 = vsel %vm3622, %v3581, 0
        %v3633 = vsel %vm3622, %v3582, 0
        %v3636 = vsel %vm3622, %v3583, 0
        %v3639 = vsel %vm3622, %v3584, 0
        %v3642 = vsel %vm3622, %v3585, 0
        %v3645 = vsel %vm3622, %v3586, 0
        %v3648 = vsel %vm3622, %v3587, 0
        %v3651 = vsel %vm3622, %v3588, 0
        %v3654 = vsel %vm3622, %v3589, 0
        %v3657 = vsel %vm3622, %v3590, 0
        %v3660 = vsel %vm3622, %v3591, 0
        %v3663 = vsel %vm3622, %v3592, 0
        %v3666 = vsel %vm3622, %v3593, 0
        %v3669 = vsel %vm3622, %v3594, 0
        %vm3671 = vcmask 1041408
        %v3673 = vsel %vm3671, %v3619, 0
        %3675 = vmatprep.subr.bf16.mxu0 0
        %3676 = vmatpush1.bf16.msra.mxu0 %v3617
        %3677 = vmatprep.subr.bf16.mxu0 0
        %3678 = vmatpush1.bf16.msra.mxu0 %v3618
        %3679 = vmatprep.subr.bf16.mxu0 0
        %3680 = vmatpush1.bf16.msra.mxu0 %v3673
        %3681 = vmatprep.subr.bf16.mxu0 0
        %3682 = vmatpush1.bf16.msra.mxu0 0
        %3683 = vmatprep.subr.bf16.mxu0 0
        %3684 = vmatpush1.bf16.msra.mxu0 0
        %3685 = vmatprep.subr.bf16.mxu0 0
        %3686 = vmatpush1.bf16.msra.mxu0 0
        %3687 = vmatprep.subr.bf16.mxu0 0
        %3688 = vmatpush1.bf16.msra.mxu0 0
        %3689 = vmatprep.subr.bf16.mxu0 0
        %3690 = vmatpush1.bf16.msra.mxu0 0
        %3691 = vmatprep.subr.bf16.mxu0 0
        %3692 = vmatpush1.bf16.msra.mxu0 0
        %3693 = vmatprep.subr.bf16.mxu0 0
        %3694 = vmatpush1.bf16.msra.mxu0 0
        %3695 = vmatprep.subr.bf16.mxu0 0
        %3696 = vmatpush1.bf16.msra.mxu0 0
        %3697 = vmatprep.subr.bf16.mxu0 0
        %3698 = vmatpush1.bf16.msra.mxu0 0
        %3699 = vmatprep.subr.bf16.mxu0 0
        %3700 = vmatpush1.bf16.msra.mxu0 0
        %3701 = vmatprep.subr.bf16.mxu0 0
        %3702 = vmatpush1.bf16.msra.mxu0 0
        %3703 = vmatprep.subr.bf16.mxu0 0
        %3704 = vmatpush1.bf16.msra.mxu0 0
        %3705 = vmatprep.subr.bf16.mxu0 0
        %3706 = vmatpush1.bf16.msra.mxu0 0
        %3707 = vmatprep.mubr.bf16.mxu0 0
        %3708 = vmatmul.mubr.bf16.gmra.mrb[0].mxu0 %v3624
        %v3709 = vpop.f32.mrb[0].mxu0
        %v3710 = vadd.f32 %v3605, %v3709
        %v3711 = vpop.f32.mrb[0].mxu0
        %v3712 = vpop.f32.mrb[0].mxu0
        %v3713 = vadd.f32 %v3605, %v3712
        %v3714 = vpop.f32.mrb[0].mxu0
        %3715 = vmatprep.mubr.bf16.mxu0 0
        %3716 = vmatmul.mubr.bf16.gmra.mrb[0].mxu0 %v3627
        %v3717 = vpop.f32.mrb[0].mxu0
        %v3718 = vadd.f32 %v3605, %v3717
        %v3719 = vpop.f32.mrb[0].mxu0
        %v3720 = vpop.f32.mrb[0].mxu0
        %v3721 = vadd.f32 %v3605, %v3720
        %v3722 = vpop.f32.mrb[0].mxu0
        %3723 = vmatprep.mubr.bf16.mxu0 0
        %3724 = vmatmul.mubr.bf16.gmra.mrb[0].mxu0 %v3630
        %v3725 = vpop.f32.mrb[0].mxu0
        %v3726 = vadd.f32 %v3605, %v3725
        %v3727 = vpop.f32.mrb[0].mxu0
        %v3728 = vpop.f32.mrb[0].mxu0
        %v3729 = vadd.f32 %v3605, %v3728
        %v3730 = vpop.f32.mrb[0].mxu0
        %3731 = vmatprep.mubr.bf16.mxu0 0
        %3732 = vmatmul.mubr.bf16.gmra.mrb[0].mxu0 %v3633
        %v3733 = vpop.f32.mrb[0].mxu0
        %v3734 = vadd.f32 %v3605, %v3733
        %v3735 = vpop.f32.mrb[0].mxu0
        %v3736 = vpop.f32.mrb[0].mxu0
        %v3737 = vadd.f32 %v3605, %v3736
        %v3738 = vpop.f32.mrb[0].mxu0
        %3739 = vmatprep.mubr.bf16.mxu0 0
        %3740 = vmatmul.mubr.bf16.gmra.mrb[0].mxu0 %v3636
        %v3741 = vpop.f32.mrb[0].mxu0
        %v3742 = vadd.f32 %v3605, %v3741
        %v3743 = vpop.f32.mrb[0].mxu0
        %v3744 = vpop.f32.mrb[0].mxu0
        %v3745 = vadd.f32 %v3605, %v3744
        %v3746 = vpop.f32.mrb[0].mxu0
        %3747 = vmatprep.mubr.bf16.mxu0 0
        %3748 = vmatmul.mubr.bf16.gmra.mrb[0].mxu0 %v3639
        %v3749 = vpop.f32.mrb[0].mxu0
        %v3750 = vadd.f32 %v3605, %v3749
        %v3751 = vpop.f32.mrb[0].mxu0
        %v3752 = vpop.f32.mrb[0].mxu0
        %v3753 = vadd.f32 %v3605, %v3752
        %v3754 = vpop.f32.mrb[0].mxu0
        %3755 = vmatprep.mubr.bf16.mxu0 0
        %3756 = vmatmul.mubr.bf16.gmra.mrb[0].mxu0 %v3642
        %v3757 = vpop.f32.mrb[0].mxu0
        %v3758 = vadd.f32 %v3605, %v3757
        %v3759 = vpop.f32.mrb[0].mxu0
        %v3760 = vpop.f32.mrb[0].mxu0
        %v3761 = vadd.f32 %v3605, %v3760
        %v3762 = vpop.f32.mrb[0].mxu0
        %3763 = vmatprep.mubr.bf16.mxu0 0
        %3764 = vmatmul.mubr.bf16.gmra.mrb[0].mxu0 %v3645
        %v3765 = vpop.f32.mrb[0].mxu0
        %v3766 = vadd.f32 %v3605, %v3765
        %v3767 = vpop.f32.mrb[0].mxu0
        %v3768 = vpop.f32.mrb[0].mxu0
        %v3769 = vadd.f32 %v3605, %v3768
        %v3770 = vpop.f32.mrb[0].mxu0
        %3771 = vmatprep.mubr.bf16.mxu0 0
        %3772 = vmatmul.mubr.bf16.gmra.mrb[0].mxu0 %v3648
        %v3773 = vpop.f32.mrb[0].mxu0
        %v3774 = vadd.f32 %v3605, %v3773
        %v3775 = vpop.f32.mrb[0].mxu0
        %v3776 = vpop.f32.mrb[0].mxu0
        %v3777 = vadd.f32 %v3605, %v3776
        %v3778 = vpop.f32.mrb[0].mxu0
        %3779 = vmatprep.mubr.bf16.mxu0 0
        %3780 = vmatmul.mubr.bf16.gmra.mrb[0].mxu0 %v3651
        %v3781 = vpop.f32.mrb[0].mxu0
        %v3782 = vadd.f32 %v3605, %v3781
        %v3783 = vpop.f32.mrb[0].mxu0
        %v3784 = vpop.f32.mrb[0].mxu0
        %v3785 = vadd.f32 %v3605, %v3784
        %v3786 = vpop.f32.mrb[0].mxu0
        %3787 = vmatprep.mubr.bf16.mxu0 0
        %3788 = vmatmul.mubr.bf16.gmra.mrb[0].mxu0 %v3654
        %v3789 = vpop.f32.mrb[0].mxu0
        %v3790 = vadd.f32 %v3605, %v3789
        %v3791 = vpop.f32.mrb[0].mxu0
        %v3792 = vpop.f32.mrb[0].mxu0
        %v3793 = vadd.f32 %v3605, %v3792
        %v3794 = vpop.f32.mrb[0].mxu0
        %3795 = vmatprep.mubr.bf16.mxu0 0
        %3796 = vmatmul.mubr.bf16.gmra.mrb[0].mxu0 %v3657
        %v3797 = vpop.f32.mrb[0].mxu0
        %v3798 = vadd.f32 %v3605, %v3797
        %v3799 = vpop.f32.mrb[0].mxu0
        %v3800 = vpop.f32.mrb[0].mxu0
        %v3801 = vadd.f32 %v3605, %v3800
        %v3802 = vpop.f32.mrb[0].mxu0
        %3803 = vmatprep.mubr.bf16.mxu0 0
        %3804 = vmatmul.mubr.bf16.gmra.mrb[0].mxu0 %v3660
        %v3805 = vpop.f32.mrb[0].mxu0
        %v3806 = vadd.f32 %v3605, %v3805
        %v3807 = vpop.f32.mrb[0].mxu0
        %v3808 = vpop.f32.mrb[0].mxu0
        %v3809 = vadd.f32 %v3605, %v3808
        %v3810 = vpop.f32.mrb[0].mxu0
        %3811 = vmatprep.mubr.bf16.mxu0 0
        %3812 = vmatmul.mubr.bf16.gmra.mrb[0].mxu0 %v3663
        %v3813 = vpop.f32.mrb[0].mxu0
        %v3814 = vadd.f32 %v3605, %v3813
        %v3815 = vpop.f32.mrb[0].mxu0
        %v3816 = vpop.f32.mrb[0].mxu0
        %v3817 = vadd.f32 %v3605, %v3816
        %v3818 = vpop.f32.mrb[0].mxu0
        %3819 = vmatprep.mubr.bf16.mxu0 0
        %3820 = vmatmul.mubr.bf16.gmra.mrb[0].mxu0 %v3666
        %v3821 = vpop.f32.mrb[0].mxu0
        %v3822 = vadd.f32 %v3605, %v3821
        %v3823 = vpop.f32.mrb[0].mxu0
        %v3824 = vpop.f32.mrb[0].mxu0
        %v3825 = vadd.f32 %v3605, %v3824
        %v3826 = vpop.f32.mrb[0].mxu0
        %3827 = vmatprep.mubr.bf16.mxu0 0
        %3828 = vmatmul.mubr.bf16.gmra.mrb[0].mxu0 %v3669
        %v3829 = vpop.f32.mrb[0].mxu0
        %v3830 = vadd.f32 %v3605, %v3829
        %v3831 = vpop.f32.mrb[0].mxu0
        %v3832 = vpop.f32.mrb[0].mxu0
        %v3833 = vadd.f32 %v3605, %v3832
        %v3834 = vpop.f32.mrb[0].mxu0
        %3835 = vdwg.mxu0
        %v3836 = vld [vmem:[%s3] sm:$0x1]
        %v3837 = vld [vmem:[%s4] sm:$0x1]
        %v3838 = vadd.f32 %v3710, %v3713
        %v3839 = vadd.f32 %v3838, %v3718
        %v3840 = vadd.f32 %v3839, %v3721
        %v3841 = vadd.f32 %v3840, %v3726
        %v3842 = vadd.f32 %v3841, %v3729
        %v3843 = vadd.f32 %v3842, %v3734
        %v3844 = vadd.f32 %v3843, %v3737
        %v3845 = vadd.f32 %v3844, %v3742
        %v3846 = vadd.f32 %v3845, %v3745
        %v3847 = vadd.f32 %v3846, %v3750
        %v3848 = vadd.f32 %v3847, %v3753
        %v3849 = vadd.f32 %v3848, %v3758
        %v3850 = vadd.f32 %v3849, %v3761
        %v3851 = vadd.f32 %v3850, %v3766
        %v3852 = vadd.f32 %v3851, %v3769
        %v3853 = vadd.f32 %v3852, %v3774
        %v3854 = vadd.f32 %v3853, %v3777
        %v3855 = vadd.f32 %v3854, %v3782
        %v3856 = vadd.f32 %v3855, %v3785
        %v3857 = vadd.f32 %v3856, %v3790
        %v3858 = vadd.f32 %v3857, %v3793
        %v3859 = vadd.f32 %v3858, %v3798
        %v3860 = vadd.f32 %v3859, %v3801
        %v3861 = vadd.f32 %v3860, %v3806
        %v3862 = vadd.f32 %v3861, %v3809
        %v3863 = vadd.f32 %v3862, %v3814
        %v3864 = vadd.f32 %v3863, %v3817
        %v3865 = vadd.f32 %v3864, %v3822
        %v3866 = vadd.f32 %v3865, %v3825
        %v3867 = vadd.f32 %v3866, %v3830
        %v3868 = vadd.f32 %v3867, %v3833
        %v3869 = vrot.slane %v3868, 4
        %v3870 = vadd.f32 %v3868, %v3869
        %v3871 = vrot.slane %v3870, 2
        %v3872 = vadd.f32 %v3870, %v3871
        %v3873 = vrot.slane %v3872, 1
        %v3874 = vadd.f32 %v3872, %v3873
        %v3875 = vmul.f32 %v3710, %v3710
        %v3876 = vmul.f32 %v3713, %v3713
        %v3877 = vmul.f32 %v3718, %v3718
        %v3878 = vmul.f32 %v3721, %v3721
        %v3879 = vmul.f32 %v3726, %v3726
        %v3880 = vmul.f32 %v3729, %v3729
        %v3881 = vmul.f32 %v3734, %v3734
        %v3882 = vmul.f32 %v3737, %v3737
        %v3883 = vmul.f32 %v3742, %v3742
        %v3884 = vmul.f32 %v3745, %v3745
        %v3885 = vmul.f32 %v3750, %v3750
        %v3886 = vmul.f32 %v3753, %v3753
        %v3887 = vmul.f32 %v3758, %v3758
        %v3888 = vmul.f32 %v3761, %v3761
        %v3889 = vmul.f32 %v3766, %v3766
        %v3890 = vmul.f32 %v3769, %v3769
        %v3891 = vmul.f32 %v3774, %v3774
        %v3892 = vmul.f32 %v3777, %v3777
        %v3893 = vmul.f32 %v3782, %v3782
        %v3894 = vmul.f32 %v3785, %v3785
        %v3895 = vmul.f32 %v3790, %v3790
        %v3896 = vmul.f32 %v3793, %v3793
        %v3897 = vmul.f32 %v3798, %v3798
        %v3898 = vmul.f32 %v3801, %v3801
        %v3899 = vmul.f32 %v3806, %v3806
        %v3900 = vmul.f32 %v3809, %v3809
        %v3901 = vmul.f32 %v3814, %v3814
        %v3902 = vmul.f32 %v3817, %v3817
        %v3903 = vmul.f32 %v3822, %v3822
        %v3904 = vmul.f32 %v3825, %v3825
        %v3905 = vmul.f32 %v3830, %v3830
        %v3906 = vmul.f32 %v3833, %v3833
        %v3907 = vadd.f32 %v3875, %v3876
        %v3908 = vadd.f32 %v3907, %v3877
        %v3909 = vadd.f32 %v3908, %v3878
        %v3910 = vadd.f32 %v3909, %v3879
        %v3911 = vadd.f32 %v3910, %v3880
        %v3912 = vadd.f32 %v3911, %v3881
        %v3913 = vadd.f32 %v3912, %v3882
        %v3914 = vadd.f32 %v3913, %v3883
        %v3915 = vadd.f32 %v3914, %v3884
        %v3916 = vadd.f32 %v3915, %v3885
        %v3917 = vadd.f32 %v3916, %v3886
        %v3918 = vadd.f32 %v3917, %v3887
        %v3919 = vadd.f32 %v3918, %v3888
        %v3920 = vadd.f32 %v3919, %v3889
        %v3921 = vadd.f32 %v3920, %v3890
        %v3922 = vadd.f32 %v3921, %v3891
        %v3923 = vadd.f32 %v3922, %v3892
        %v3924 = vadd.f32 %v3923, %v3893
        %v3925 = vadd.f32 %v3924, %v3894
        %v3926 = vadd.f32 %v3925, %v3895
        %v3927 = vadd.f32 %v3926, %v3896
        %v3928 = vadd.f32 %v3927, %v3897
        %v3929 = vadd.f32 %v3928, %v3898
        %v3930 = vadd.f32 %v3929, %v3899
        %v3931 = vadd.f32 %v3930, %v3900
        %v3932 = vadd.f32 %v3931, %v3901
        %v3933 = vadd.f32 %v3932, %v3902
        %v3934 = vadd.f32 %v3933, %v3903
        %v3935 = vadd.f32 %v3934, %v3904
        %v3936 = vadd.f32 %v3935, %v3905
        %v3937 = vadd.f32 %v3936, %v3906
        %v3938 = vrot.slane %v3937, 4
        %v3939 = vadd.f32 %v3937, %v3938
        %v3940 = vrot.slane %v3939, 2
        %v3941 = vadd.f32 %v3939, %v3940
        %v3942 = vrot.slane %v3941, 1
        %v3943 = vadd.f32 %v3941, %v3942
        %v3944 = vlaneseq
        %v3945 = vand.u32 %v3944, 127
        %v3946 = vsel %vm227, %v3874, 0.0
        %3947 = vadd.xlane.f32.xlu0 %v3946
        %v3948 = vpop.xlane.xlu0 %3947
        %v3949 = vrot.slane %v3948, 4
        %v3950 = vadd.f32 %v3948, %v3949
        %v3951 = vrot.slane %v3950, 2
        %v3952 = vadd.f32 %v3950, %v3951
        %v3953 = vrot.slane %v3952, 1
        %v3954 = vadd.f32 %v3952, %v3953
        %s3955 = vtos %v3954
        %v3956 = vrcp.pop 1024.0
        %s3957 = vtos %v3956
        %s3958 = smul.f32 %s3955, %s3957
        %v3959 = vsel %vm227, %v3943, 0.0
        %3960 = vadd.xlane.f32.xlu0 %v3959
        %v3961 = vpop.xlane.xlu0 %3960
        %v3962 = vrot.slane %v3961, 4
        %v3963 = vadd.f32 %v3961, %v3962
        %v3964 = vrot.slane %v3963, 2
        %v3965 = vadd.f32 %v3963, %v3964
        %v3966 = vrot.slane %v3965, 1
        %v3967 = vadd.f32 %v3965, %v3966
        %s3968 = vtos %v3967
        %v3969 = vrcp.pop 1024.0
        %s3970 = vtos %v3969
        %s3971 = smul.f32 %s3968, %s3970
        %s3972 = smul.f32 %s3958, %s3958
        %s3973 = ssub.f32 %s3971, %s3972
        %vm3974 = vcmp.ge.s32.totalorder %v3945, 0
        %vm3975 = vcmp.lt.s32.totalorder %v3945, 4
        %vm3976 = vmand %vm3974, %vm3975
        %v3977 = vstv %s3958
        %v3978 = vsel %vm3976, %v3977, 0.0
        %s3979 = sadd.f32 %s3973, 1e-05
        %v3980 = vstv %s3979
        %v3981 = vrsqrt.pop %v3980
        %s3982 = vtos %v3981
        %v3983 = vstv %s3982
        %v3984 = vsel %vm3976, %v3983, 0.0
        %3986 = vrot.lane.b32.xlu0 %v3874, 124
        %v3987 = vpop.permute.xlu0 %3986
        %v3989 = vsel %vm227, %v3987, 0.0
        %3990 = vadd.xlane.f32.xlu0 %v3989
        %v3991 = vpop.xlane.xlu0 %3990
        %v3992 = vrot.slane %v3991, 4
        %v3993 = vadd.f32 %v3991, %v3992
        %v3994 = vrot.slane %v3993, 2
        %v3995 = vadd.f32 %v3993, %v3994
        %v3996 = vrot.slane %v3995, 1
        %v3997 = vadd.f32 %v3995, %v3996
        %s3998 = vtos %v3997
        %v3999 = vrcp.pop 1024.0
        %s4000 = vtos %v3999
        %s4001 = smul.f32 %s3998, %s4000
        %4003 = vrot.lane.b32.xlu0 %v3943, 124
        %v4004 = vpop.permute.xlu0 %4003
        %v4006 = vsel %vm227, %v4004, 0.0
        %4007 = vadd.xlane.f32.xlu0 %v4006
        %v4008 = vpop.xlane.xlu0 %4007
        %v4009 = vrot.slane %v4008, 4
        %v4010 = vadd.f32 %v4008, %v4009
        %v4011 = vrot.slane %v4010, 2
        %v4012 = vadd.f32 %v4010, %v4011
        %v4013 = vrot.slane %v4012, 1
        %v4014 = vadd.f32 %v4012, %v4013
        %s4015 = vtos %v4014
        %v4016 = vrcp.pop 1024.0
        %s4017 = vtos %v4016
        %s4018 = smul.f32 %s4015, %s4017
        %s4019 = smul.f32 %s4001, %s4001
        %s4020 = ssub.f32 %s4018, %s4019
        %vm4021 = vcmp.ge.s32.totalorder %v3945, 4
        %vm4022 = vcmp.lt.s32.totalorder %v3945, 8
        %vm4023 = vmand %vm4021, %vm4022
        %v4024 = vstv %s4001
        %v4025 = vsel %vm4023, %v4024, %v3978
        %s4026 = sadd.f32 %s4020, 1e-05
        %v4027 = vstv %s4026
        %v4028 = vrsqrt.pop %v4027
        %s4029 = vtos %v4028
        %v4030 = vstv %s4029
        %v4031 = vsel %vm4023, %v4030, %v3984
        %v4032 = vsub.f32 %v3710, %v4025
        %v4033 = vsub.f32 %v3713, %v4025
        %v4034 = vsub.f32 %v3718, %v4025
        %v4035 = vsub.f32 %v3721, %v4025
        %v4036 = vsub.f32 %v3726, %v4025
        %v4037 = vsub.f32 %v3729, %v4025
        %v4038 = vsub.f32 %v3734, %v4025
        %v4039 = vsub.f32 %v3737, %v4025
        %v4040 = vsub.f32 %v3742, %v4025
        %v4041 = vsub.f32 %v3745, %v4025
        %v4042 = vsub.f32 %v3750, %v4025
        %v4043 = vsub.f32 %v3753, %v4025
        %v4044 = vsub.f32 %v3758, %v4025
        %v4045 = vsub.f32 %v3761, %v4025
        %v4046 = vsub.f32 %v3766, %v4025
        %v4047 = vsub.f32 %v3769, %v4025
        %v4048 = vsub.f32 %v3774, %v4025
        %v4049 = vsub.f32 %v3777, %v4025
        %v4050 = vsub.f32 %v3782, %v4025
        %v4051 = vsub.f32 %v3785, %v4025
        %v4052 = vsub.f32 %v3790, %v4025
        %v4053 = vsub.f32 %v3793, %v4025
        %v4054 = vsub.f32 %v3798, %v4025
        %v4055 = vsub.f32 %v3801, %v4025
        %v4056 = vsub.f32 %v3806, %v4025
        %v4057 = vsub.f32 %v3809, %v4025
        %v4058 = vsub.f32 %v3814, %v4025
        %v4059 = vsub.f32 %v3817, %v4025
        %v4060 = vsub.f32 %v3822, %v4025
        %v4061 = vsub.f32 %v3825, %v4025
        %v4062 = vsub.f32 %v3830, %v4025
        %v4063 = vsub.f32 %v3833, %v4025
        %v4064 = vmul.f32 %v4032, %v4031
        %v4065 = vmul.f32 %v4033, %v4031
        %v4066 = vmul.f32 %v4034, %v4031
        %v4067 = vmul.f32 %v4035, %v4031
        %v4068 = vmul.f32 %v4036, %v4031
        %v4069 = vmul.f32 %v4037, %v4031
        %v4070 = vmul.f32 %v4038, %v4031
        %v4071 = vmul.f32 %v4039, %v4031
        %v4072 = vmul.f32 %v4040, %v4031
        %v4073 = vmul.f32 %v4041, %v4031
        %v4074 = vmul.f32 %v4042, %v4031
        %v4075 = vmul.f32 %v4043, %v4031
        %v4076 = vmul.f32 %v4044, %v4031
        %v4077 = vmul.f32 %v4045, %v4031
        %v4078 = vmul.f32 %v4046, %v4031
        %v4079 = vmul.f32 %v4047, %v4031
        %v4080 = vmul.f32 %v4048, %v4031
        %v4081 = vmul.f32 %v4049, %v4031
        %v4082 = vmul.f32 %v4050, %v4031
        %v4083 = vmul.f32 %v4051, %v4031
        %v4084 = vmul.f32 %v4052, %v4031
        %v4085 = vmul.f32 %v4053, %v4031
        %v4086 = vmul.f32 %v4054, %v4031
        %v4087 = vmul.f32 %v4055, %v4031
        %v4088 = vmul.f32 %v4056, %v4031
        %v4089 = vmul.f32 %v4057, %v4031
        %v4090 = vmul.f32 %v4058, %v4031
        %v4091 = vmul.f32 %v4059, %v4031
        %v4092 = vmul.f32 %v4060, %v4031
        %v4093 = vmul.f32 %v4061, %v4031
        %v4094 = vmul.f32 %v4062, %v4031
        %v4095 = vmul.f32 %v4063, %v4031
        %v4097 = vlaneseq
        %v4098 = vshrl.u32 %v4097, 7
        %v4099 = vsub.s32 0, %v4098
        %v4100 = vrot.slane %v3836, %v4099
        %v4102 = vmul.f32 %v4064, %v4100
        %v4103 = vmul.f32 %v4065, %v4100
        %v4104 = vmul.f32 %v4066, %v4100
        %v4105 = vmul.f32 %v4067, %v4100
        %v4106 = vmul.f32 %v4068, %v4100
        %v4107 = vmul.f32 %v4069, %v4100
        %v4108 = vmul.f32 %v4070, %v4100
        %v4109 = vmul.f32 %v4071, %v4100
        %v4110 = vmul.f32 %v4072, %v4100
        %v4111 = vmul.f32 %v4073, %v4100
        %v4112 = vmul.f32 %v4074, %v4100
        %v4113 = vmul.f32 %v4075, %v4100
        %v4114 = vmul.f32 %v4076, %v4100
        %v4115 = vmul.f32 %v4077, %v4100
        %v4116 = vmul.f32 %v4078, %v4100
        %v4117 = vmul.f32 %v4079, %v4100
        %v4118 = vmul.f32 %v4080, %v4100
        %v4119 = vmul.f32 %v4081, %v4100
        %v4120 = vmul.f32 %v4082, %v4100
        %v4121 = vmul.f32 %v4083, %v4100
        %v4122 = vmul.f32 %v4084, %v4100
        %v4123 = vmul.f32 %v4085, %v4100
        %v4124 = vmul.f32 %v4086, %v4100
        %v4125 = vmul.f32 %v4087, %v4100
        %v4126 = vmul.f32 %v4088, %v4100
        %v4127 = vmul.f32 %v4089, %v4100
        %v4128 = vmul.f32 %v4090, %v4100
        %v4129 = vmul.f32 %v4091, %v4100
        %v4130 = vmul.f32 %v4092, %v4100
        %v4131 = vmul.f32 %v4093, %v4100
        %v4132 = vmul.f32 %v4094, %v4100
        %v4133 = vmul.f32 %v4095, %v4100
        %v4135 = vlaneseq
        %v4136 = vshrl.u32 %v4135, 7
        %v4137 = vsub.s32 0, %v4136
        %v4138 = vrot.slane %v3837, %v4137
        %v4140 = vadd.f32 %v4102, %v4138
        %v4141 = vadd.f32 %v4103, %v4138
        %v4142 = vadd.f32 %v4104, %v4138
        %v4143 = vadd.f32 %v4105, %v4138
        %v4144 = vadd.f32 %v4106, %v4138
        %v4145 = vadd.f32 %v4107, %v4138
        %v4146 = vadd.f32 %v4108, %v4138
        %v4147 = vadd.f32 %v4109, %v4138
        %v4148 = vadd.f32 %v4110, %v4138
        %v4149 = vadd.f32 %v4111, %v4138
        %v4150 = vadd.f32 %v4112, %v4138
        %v4151 = vadd.f32 %v4113, %v4138
        %v4152 = vadd.f32 %v4114, %v4138
        %v4153 = vadd.f32 %v4115, %v4138
        %v4154 = vadd.f32 %v4116, %v4138
        %v4155 = vadd.f32 %v4117, %v4138
        %v4156 = vadd.f32 %v4118, %v4138
        %v4157 = vadd.f32 %v4119, %v4138
        %v4158 = vadd.f32 %v4120, %v4138
        %v4159 = vadd.f32 %v4121, %v4138
        %v4160 = vadd.f32 %v4122, %v4138
        %v4161 = vadd.f32 %v4123, %v4138
        %v4162 = vadd.f32 %v4124, %v4138
        %v4163 = vadd.f32 %v4125, %v4138
        %v4164 = vadd.f32 %v4126, %v4138
        %v4165 = vadd.f32 %v4127, %v4138
        %v4166 = vadd.f32 %v4128, %v4138
        %v4167 = vadd.f32 %v4129, %v4138
        %v4168 = vadd.f32 %v4130, %v4138
        %v4169 = vadd.f32 %v4131, %v4138
        %v4170 = vadd.f32 %v4132, %v4138
        %v4171 = vadd.f32 %v4133, %v4138
        %v4172 = vxor.u32 %v4140, 2147483648
        %v4173 = vxor.u32 %v4141, 2147483648
        %v4174 = vxor.u32 %v4142, 2147483648
        %v4175 = vxor.u32 %v4143, 2147483648
        %v4176 = vxor.u32 %v4144, 2147483648
        %v4177 = vxor.u32 %v4145, 2147483648
        %v4178 = vxor.u32 %v4146, 2147483648
        %v4179 = vxor.u32 %v4147, 2147483648
        %v4180 = vxor.u32 %v4148, 2147483648
        %v4181 = vxor.u32 %v4149, 2147483648
        %v4182 = vxor.u32 %v4150, 2147483648
        %v4183 = vxor.u32 %v4151, 2147483648
        %v4184 = vxor.u32 %v4152, 2147483648
        %v4185 = vxor.u32 %v4153, 2147483648
        %v4186 = vxor.u32 %v4154, 2147483648
        %v4187 = vxor.u32 %v4155, 2147483648
        %v4188 = vxor.u32 %v4156, 2147483648
        %v4189 = vxor.u32 %v4157, 2147483648
        %v4190 = vxor.u32 %v4158, 2147483648
        %v4191 = vxor.u32 %v4159, 2147483648
        %v4192 = vxor.u32 %v4160, 2147483648
        %v4193 = vxor.u32 %v4161, 2147483648
        %v4194 = vxor.u32 %v4162, 2147483648
        %v4195 = vxor.u32 %v4163, 2147483648
        %v4196 = vxor.u32 %v4164, 2147483648
        %v4197 = vxor.u32 %v4165, 2147483648
        %v4198 = vxor.u32 %v4166, 2147483648
        %v4199 = vxor.u32 %v4167, 2147483648
        %v4200 = vxor.u32 %v4168, 2147483648
        %v4201 = vxor.u32 %v4169, 2147483648
        %v4202 = vxor.u32 %v4170, 2147483648
        %v4203 = vxor.u32 %v4171, 2147483648
        %v4204 = vmul.f32 %v4172, 1.442695
        %v4205 = vpow.pop %v4204
        %v4206 = vmul.f32 %v4173, 1.442695
        %v4207 = vpow.pop %v4206
        %v4208 = vmul.f32 %v4174, 1.442695
        %v4209 = vpow.pop %v4208
        %v4210 = vmul.f32 %v4175, 1.442695
        %v4211 = vpow.pop %v4210
        %v4212 = vmul.f32 %v4176, 1.442695
        %v4213 = vpow.pop %v4212
        %v4214 = vmul.f32 %v4177, 1.442695
        %v4215 = vpow.pop %v4214
        %v4216 = vmul.f32 %v4178, 1.442695
        %v4217 = vpow.pop %v4216
        %v4218 = vmul.f32 %v4179, 1.442695
        %v4219 = vpow.pop %v4218
        %v4220 = vmul.f32 %v4180, 1.442695
        %v4221 = vpow.pop %v4220
        %v4222 = vmul.f32 %v4181, 1.442695
        %v4223 = vpow.pop %v4222
        %v4224 = vmul.f32 %v4182, 1.442695
        %v4225 = vpow.pop %v4224
        %v4226 = vmul.f32 %v4183, 1.442695
        %v4227 = vpow.pop %v4226
        %v4228 = vmul.f32 %v4184, 1.442695
        %v4229 = vpow.pop %v4228
        %v4230 = vmul.f32 %v4185, 1.442695
        %v4231 = vpow.pop %v4230
        %v4232 = vmul.f32 %v4186, 1.442695
        %v4233 = vpow.pop %v4232
        %v4234 = vmul.f32 %v4187, 1.442695
        %v4235 = vpow.pop %v4234
        %v4236 = vmul.f32 %v4188, 1.442695
        %v4237 = vpow.pop %v4236
        %v4238 = vmul.f32 %v4189, 1.442695
        %v4239 = vpow.pop %v4238
        %v4240 = vmul.f32 %v4190, 1.442695
        %v4241 = vpow.pop %v4240
        %v4242 = vmul.f32 %v4191, 1.442695
        %v4243 = vpow.pop %v4242
        %v4244 = vmul.f32 %v4192, 1.442695
        %v4245 = vpow.pop %v4244
        %v4246 = vmul.f32 %v4193, 1.442695
        %v4247 = vpow.pop %v4246
        %v4248 = vmul.f32 %v4194, 1.442695
        %v4249 = vpow.pop %v4248
        %v4250 = vmul.f32 %v4195, 1.442695
        %v4251 = vpow.pop %v4250
        %v4252 = vmul.f32 %v4196, 1.442695
        %v4253 = vpow.pop %v4252
        %v4254 = vmul.f32 %v4197, 1.442695
        %v4255 = vpow.pop %v4254
        %v4256 = vmul.f32 %v4198, 1.442695
        %v4257 = vpow.pop %v4256
        %v4258 = vmul.f32 %v4199, 1.442695
        %v4259 = vpow.pop %v4258
        %v4260 = vmul.f32 %v4200, 1.442695
        %v4261 = vpow.pop %v4260
        %v4262 = vmul.f32 %v4201, 1.442695
        %v4263 = vpow.pop %v4262
        %v4264 = vmul.f32 %v4202, 1.442695
        %v4265 = vpow.pop %v4264
        %v4266 = vmul.f32 %v4203, 1.442695
        %v4267 = vpow.pop %v4266
        %v4268 = vadd.f32 %v4205, 1.0
        %v4269 = vadd.f32 %v4207, 1.0
        %v4270 = vadd.f32 %v4209, 1.0
        %v4271 = vadd.f32 %v4211, 1.0
        %v4272 = vadd.f32 %v4213, 1.0
        %v4273 = vadd.f32 %v4215, 1.0
        %v4274 = vadd.f32 %v4217, 1.0
        %v4275 = vadd.f32 %v4219, 1.0
        %v4276 = vadd.f32 %v4221, 1.0
        %v4277 = vadd.f32 %v4223, 1.0
        %v4278 = vadd.f32 %v4225, 1.0
        %v4279 = vadd.f32 %v4227, 1.0
        %v4280 = vadd.f32 %v4229, 1.0
        %v4281 = vadd.f32 %v4231, 1.0
        %v4282 = vadd.f32 %v4233, 1.0
        %v4283 = vadd.f32 %v4235, 1.0
        %v4284 = vadd.f32 %v4237, 1.0
        %v4285 = vadd.f32 %v4239, 1.0
        %v4286 = vadd.f32 %v4241, 1.0
        %v4287 = vadd.f32 %v4243, 1.0
        %v4288 = vadd.f32 %v4245, 1.0
        %v4289 = vadd.f32 %v4247, 1.0
        %v4290 = vadd.f32 %v4249, 1.0
        %v4291 = vadd.f32 %v4251, 1.0
        %v4292 = vadd.f32 %v4253, 1.0
        %v4293 = vadd.f32 %v4255, 1.0
        %v4294 = vadd.f32 %v4257, 1.0
        %v4295 = vadd.f32 %v4259, 1.0
        %v4296 = vadd.f32 %v4261, 1.0
        %v4297 = vadd.f32 %v4263, 1.0
        %v4298 = vadd.f32 %v4265, 1.0
        %v4299 = vadd.f32 %v4267, 1.0
        %v4300 = vrcp.pop %v4268
        %v4301 = vmul.f32 1.0, %v4300
        %v4302 = vrcp.pop %v4269
        %v4303 = vmul.f32 1.0, %v4302
        %v4304 = vrcp.pop %v4270
        %v4305 = vmul.f32 1.0, %v4304
        %v4306 = vrcp.pop %v4271
        %v4307 = vmul.f32 1.0, %v4306
        %v4308 = vrcp.pop %v4272
        %v4309 = vmul.f32 1.0, %v4308
        %v4310 = vrcp.pop %v4273
        %v4311 = vmul.f32 1.0, %v4310
        %v4312 = vrcp.pop %v4274
        %v4313 = vmul.f32 1.0, %v4312
        %v4314 = vrcp.pop %v4275
        %v4315 = vmul.f32 1.0, %v4314
        %v4316 = vrcp.pop %v4276
        %v4317 = vmul.f32 1.0, %v4316
        %v4318 = vrcp.pop %v4277
        %v4319 = vmul.f32 1.0, %v4318
        %v4320 = vrcp.pop %v4278
        %v4321 = vmul.f32 1.0, %v4320
        %v4322 = vrcp.pop %v4279
        %v4323 = vmul.f32 1.0, %v4322
        %v4324 = vrcp.pop %v4280
        %v4325 = vmul.f32 1.0, %v4324
        %v4326 = vrcp.pop %v4281
        %v4327 = vmul.f32 1.0, %v4326
        %v4328 = vrcp.pop %v4282
        %v4329 = vmul.f32 1.0, %v4328
        %v4330 = vrcp.pop %v4283
        %v4331 = vmul.f32 1.0, %v4330
        %v4332 = vrcp.pop %v4284
        %v4333 = vmul.f32 1.0, %v4332
        %v4334 = vrcp.pop %v4285
        %v4335 = vmul.f32 1.0, %v4334
        %v4336 = vrcp.pop %v4286
        %v4337 = vmul.f32 1.0, %v4336
        %v4338 = vrcp.pop %v4287
        %v4339 = vmul.f32 1.0, %v4338
        %v4340 = vrcp.pop %v4288
        %v4341 = vmul.f32 1.0, %v4340
        %v4342 = vrcp.pop %v4289
        %v4343 = vmul.f32 1.0, %v4342
        %v4344 = vrcp.pop %v4290
        %v4345 = vmul.f32 1.0, %v4344
        %v4346 = vrcp.pop %v4291
        %v4347 = vmul.f32 1.0, %v4346
        %v4348 = vrcp.pop %v4292
        %v4349 = vmul.f32 1.0, %v4348
        %v4350 = vrcp.pop %v4293
        %v4351 = vmul.f32 1.0, %v4350
        %v4352 = vrcp.pop %v4294
        %v4353 = vmul.f32 1.0, %v4352
        %v4354 = vrcp.pop %v4295
        %v4355 = vmul.f32 1.0, %v4354
        %v4356 = vrcp.pop %v4296
        %v4357 = vmul.f32 1.0, %v4356
        %v4358 = vrcp.pop %v4297
        %v4359 = vmul.f32 1.0, %v4358
        %v4360 = vrcp.pop %v4298
        %v4361 = vmul.f32 1.0, %v4360
        %v4362 = vrcp.pop %v4299
        %v4363 = vmul.f32 1.0, %v4362
        %v4364 = vmul.f32 %v4140, %v4301
        %v4365 = vmul.f32 %v4141, %v4303
        %v4366 = vmul.f32 %v4142, %v4305
        %v4367 = vmul.f32 %v4143, %v4307
        %v4368 = vmul.f32 %v4144, %v4309
        %v4369 = vmul.f32 %v4145, %v4311
        %v4370 = vmul.f32 %v4146, %v4313
        %v4371 = vmul.f32 %v4147, %v4315
        %v4372 = vmul.f32 %v4148, %v4317
        %v4373 = vmul.f32 %v4149, %v4319
        %v4374 = vmul.f32 %v4150, %v4321
        %v4375 = vmul.f32 %v4151, %v4323
        %v4376 = vmul.f32 %v4152, %v4325
        %v4377 = vmul.f32 %v4153, %v4327
        %v4378 = vmul.f32 %v4154, %v4329
        %v4379 = vmul.f32 %v4155, %v4331
        %v4380 = vmul.f32 %v4156, %v4333
        %v4381 = vmul.f32 %v4157, %v4335
        %v4382 = vmul.f32 %v4158, %v4337
        %v4383 = vmul.f32 %v4159, %v4339
        %v4384 = vmul.f32 %v4160, %v4341
        %v4385 = vmul.f32 %v4161, %v4343
        %v4386 = vmul.f32 %v4162, %v4345
        %v4387 = vmul.f32 %v4163, %v4347
        %v4388 = vmul.f32 %v4164, %v4349
        %v4389 = vmul.f32 %v4165, %v4351
        %v4390 = vmul.f32 %v4166, %v4353
        %v4391 = vmul.f32 %v4167, %v4355
        %v4392 = vmul.f32 %v4168, %v4357
        %v4393 = vmul.f32 %v4169, %v4359
        %v4394 = vmul.f32 %v4170, %v4361
        %v4395 = vmul.f32 %v4171, %v4363
        %4396 = vst [vmem:[%s217] sm:$0xff] %v4364
        %4397 = vst [vmem:[%s217 + $0x8] sm:$0xff] %v4365
        %4398 = vst [vmem:[%s217 + $0x10] sm:$0xff] %v4366
        %4399 = vst [vmem:[%s217 + $0x18] sm:$0xff] %v4367
        %4400 = vst [vmem:[%s217 + $0x20] sm:$0xff] %v4368
        %4401 = vst [vmem:[%s217 + $0x28] sm:$0xff] %v4369
        %4402 = vst [vmem:[%s217 + $0x30] sm:$0xff] %v4370
        %4403 = vst [vmem:[%s217 + $0x38] sm:$0xff] %v4371
        %4404 = vst [vmem:[%s217 + $0x40] sm:$0xff] %v4372
        %4405 = vst [vmem:[%s217 + $0x48] sm:$0xff] %v4373
        %4406 = vst [vmem:[%s217 + $0x50] sm:$0xff] %v4374
        %4407 = vst [vmem:[%s217 + $0x58] sm:$0xff] %v4375
        %4408 = vst [vmem:[%s217 + $0x60] sm:$0xff] %v4376
        %4409 = vst [vmem:[%s217 + $0x68] sm:$0xff] %v4377
        %4410 = vst [vmem:[%s217 + $0x70] sm:$0xff] %v4378
        %4411 = vst [vmem:[%s217 + $0x78] sm:$0xff] %v4379
        %4412 = vst [vmem:[%s217 + $0x80] sm:$0xff] %v4380
        %4413 = vst [vmem:[%s217 + $0x88] sm:$0xff] %v4381
        %4414 = vst [vmem:[%s217 + $0x90] sm:$0xff] %v4382
        %4415 = vst [vmem:[%s217 + $0x98] sm:$0xff] %v4383
        %4416 = vst [vmem:[%s217 + $0xa0] sm:$0xff] %v4384
        %4417 = vst [vmem:[%s217 + $0xa8] sm:$0xff] %v4385
        %4418 = vst [vmem:[%s217 + $0xb0] sm:$0xff] %v4386
        %4419 = vst [vmem:[%s217 + $0xb8] sm:$0xff] %v4387
        %4420 = vst [vmem:[%s217 + $0xc0] sm:$0xff] %v4388
        %4421 = vst [vmem:[%s217 + $0xc8] sm:$0xff] %v4389
        %4422 = vst [vmem:[%s217 + $0xd0] sm:$0xff] %v4390
        %4423 = vst [vmem:[%s217 + $0xd8] sm:$0xff] %v4391
        %4424 = vst [vmem:[%s217 + $0xe0] sm:$0xff] %v4392
        %4425 = vst [vmem:[%s217 + $0xe8] sm:$0xff] %v4393
        %4426 = vst [vmem:[%s217 + $0xf0] sm:$0xff] %v4394
        %4427 = vst [vmem:[%s217 + $0xf8] sm:$0xff] %v4395
        %s4428 = sand.u32 %s137, 1
        %s4429 = scalar_lea.sflag [#allocation5], %s4428
        %s4430 = sand.u32 %s137, 1
        %s4431 = smul.addr %s4430, 256
        %s4432 = scalar_lea.vmem [#allocation4], %s4431
        // Predicated region
        $region41: #{tpu_custom_call.1} parent=39 // pred_check
          %p4433 = pneg %p147
        $region42: #{tpu_custom_call.1} parent=39 // pred_check_branch
          %4435 = sbr.rel (%p4433) target = $region44
        $region43: #{tpu_custom_call.1} parent=39 // pred_region
          %s4437 = ssub.s32 4096, 4096
          %4438 = vsyncadd %s4429, %s4437
          %s4439 = smul.addr %s19, 32
          %s4440 = smul.addr %s4439, 128
          %s4441 = scalar_lea.hbm %s5, %s4440
          %s4442 = sshll.u32 %s4432, 4
          %s4443 = int_to_ptr.vmem [resolvable:$true] %s4442
          %4448 = dma.vmem_to_hbm [thread:$0]  %s4443, 4096, %s4441, %s4429, 128, 128, 8
        $region44: #{tpu_custom_call.1} parent=39 // pred_fallthru
          _
      $region40: #{tpu_custom_call.1} parent=5 // pred_fallthru
        _
      %p4449 = scmp.le.s32.totalorder 2, %s14
      // Predicated region
      $region45: #{tpu_custom_call.1} parent=5 // pred_check
        %p4450 = pneg %p4449
      $region46: #{tpu_custom_call.1} parent=5 // pred_check_branch
        %4452 = sbr.rel (%p4450) target = $region48
      $region47: #{tpu_custom_call.1} parent=5 // pred_region
        %s4453 = ssub.s32 %s14, 2
        // Predicated region
        $region49: #{tpu_custom_call.1} parent=47 // pred_check
          %p4454 = pneg %p153
        $region50: #{tpu_custom_call.1} parent=47 // pred_check_branch
          %4456 = sbr.rel (%p4454) target = $region52
        $region51: #{tpu_custom_call.1} parent=47 // pred_region
          %s4457 = sand.u32 %s138, 1
          %s4458 = scalar_lea.sflag [#allocation5], %s4457
          %s4459 = sand.u32 %s138, 1
          %s4460 = smul.addr %s4459, 256
          %s4461 = scalar_lea.vmem [#allocation4], %s4460
          %4462 = dma.done %s4458, 4096
        $region52: #{tpu_custom_call.1} parent=47 // pred_fallthru
          _
      $region48: #{tpu_custom_call.1} parent=5 // pred_fallthru
        _
    $region6: #{tpu_custom_call.1} parent=1 // loop_footer
      %s18 = sadd.s32 1, %s14
    $region7: #{tpu_custom_call.1} parent=1 // loop_footer_branch
      %13 = sbr.rel target = $region3
    $region8: #{tpu_custom_call.1} parent=1 // loop_exit
      _
    %4463 = vsyncpa [#allocation5], 1
    %s4464 = scalar_lea.sflag [#allocation5], 1
    %4465 = vsyncpa %s4464, 1

</llo_original>
